<compile_context>
chip_gen: v7x
topology: tpu7x:2x2x1
jax: 0.10.0
libtpu: 0.0.40
codegen_flags: <defaults>
</compile_context>

<pallas_src>
import math
import numpy as np
import jax
import jax.numpy as jnp
from jax.experimental import pallas as pl
from jax.experimental.pallas import tpu as pltpu

# ----------------------------- configuration --------------------------------
B = 2
C = 16                            # inp_chans == out_chans
NLAT = 16
NLON = 32
MLP_RATIO = 2.0
HID = int(C * MLP_RATIO)          # mlp hidden dim = 32
LMAX = NLAT                       # 16
MMAX = min(NLAT, NLON // 2 + 1)   # 16
HW = NLAT * NLON                  # 512 pixels per batch
BHW = B * HW                      # 1024 (lane dim of the pointwise kernel)
CJ = C * NLAT                     # 256 (lane dim of the spectral kernel)
RB = 2 * B                        # 4 rows (real/imag x batch) per m
NFREQ = NLON // 2 + 1             # 17 rfft bins
SCALE_FWD = 2.0 * math.pi / NLON
INV_SQRT2 = 0.7071067811865476

_HI = jax.lax.Precision.HIGHEST


# --------------------- spherical-harmonic transform data --------------------
def _precompute_sht(nlat, lmax, mmax):
    """Gauss-Legendre quadrature + fully-normalized associated Legendre P̄_l^m."""
    x, w = np.polynomial.legendre.leggauss(nlat)
    sint = np.sqrt(np.clip(1.0 - x * x, 0.0, None))
    pbar = np.zeros((lmax, mmax, nlat), dtype=np.float64)
    pmm = np.full(nlat, math.sqrt(1.0 / (4.0 * math.pi)))
    for m in range(mmax):
        if m < lmax:
            pbar[m, m] = pmm
        if m + 1 < lmax:
            pbar[m + 1, m] = math.sqrt(2.0 * m + 3.0) * x * pmm
        for l in range(m + 2, lmax):
            a = math.sqrt((4.0 * l * l - 1.0) / (l * l - m * m))
            b = math.sqrt(((l - 1.0) ** 2 - m * m) / (4.0 * (l - 1.0) ** 2 - 1.0))
            pbar[l, m] = a * (x * pbar[l - 1, m] - b * pbar[l - 2, m])
        pmm = -math.sqrt((2.0 * m + 3.0) / (2.0 * m + 2.0)) * sint * pmm
    return jnp.asarray(w, jnp.float32), jnp.asarray(pbar, jnp.float32)


QUAD_W, PBAR = _precompute_sht(NLAT, LMAX, MMAX)


def build_spectral_operator(w_spec):
    """Fuse fwd-Legendre . dhconv . inv-Legendre into one per-m operator.

    A[m, (i, j'), (o, j)] = (2*pi/NLON) * sum_l PBAR[l,m,j'] qw[j'] w_spec[l,o,i] PBAR[l,m,j]
    Rows index input (channel i, latitude j'); cols index output (channel o, latitude j).
    """
    pbarw = PBAR * QUAD_W[None, None, :]                         # (L, M, J)
    a = jnp.einsum("lmk,loi,lmj->mikoj", pbarw, w_spec, PBAR, precision=_HI)
    return (a * SCALE_FWD).reshape(MMAX, CJ, CJ)                 # (M, C*J, C*J)


# --------------------------- XLA-side FFT glue -------------------------------
def _spectral_input(x):
    """(B, C, nlat, nlon) f32 -> (M, 2*B, C*nlat) f32.

    rfft in longitude, then lay out rows=(real/imag, batch) and lanes=(chan, lat)
    — exactly the batched-matmul layout the spectral Pallas kernel consumes.
    """
    f = jnp.fft.rfft(x, axis=-1)[..., :MMAX]                     # (B,C,J,M) c64
    fri = jnp.stack([f.real, f.imag], axis=0)                    # (2,B,C,J,M) f32
    return jnp.transpose(fri, (4, 0, 1, 2, 3)).reshape(MMAX, RB, CJ)


def _dx_from_spectral(g):
    """(M, 2*B, C*nlat) f32 -> (C, B*H*W) f32 via irfft (channels-first, lane-dense)."""
    g = g.reshape(MMAX, 2, B, C, NLAT)
    g = jnp.transpose(g, (1, 3, 2, 4, 0))                        # (2, C, B, J, M)
    gc = jax.lax.complex(g[0], g[1])
    if MMAX < NFREQ:
        gc = jnp.pad(gc, ((0, 0), (0, 0), (0, 0), (0, NFREQ - MMAX)))
    dx = jnp.fft.irfft(gc, n=NLON, axis=-1) * NLON               # (C, B, J, NLON)
    return dx.reshape(C, BHW)


# ------------------------------ Pallas kernels -------------------------------
def _spectral_kernel(f_ref, a_ref, g_ref):
    # f_ref: (M, RB, C*J) f32   rows=(real/imag, batch), lanes=(chan, lat)
    # a_ref: (M, C*J, C*J) bf16 per-m fused operator (fwd-Legendre . dhconv . inv-Legendre)
    # g_ref: (M, RB, C*J) f32   lanes=(chan, lat)
    f = f_ref[...].astype(jnp.bfloat16)                          # bf16 operands,
    g_ref[...] = jax.lax.dot_general(                            # f32 accumulation
        f, a_ref[...],
        dimension_numbers=(((2,), (1,)), ((0,), (0,))),
        preferred_element_type=jnp.float32)


def spectral_pallas(f, a):
    m, rb, k = f.shape
    return pl.pallas_call(
        _spectral_kernel,
        out_shape=jax.ShapeDtypeStruct((m, rb, k), jnp.float32),
        grid=(1,),                                               # single step: overhead-bound size
        in_specs=[pl.BlockSpec((m, rb, k), lambda i: (0, 0, 0)),
                  pl.BlockSpec((m, k, k), lambda i: (0, 0, 0))],
        out_specs=pl.BlockSpec((m, rb, k), lambda i: (0, 0, 0)),
        compiler_params=pltpu.CompilerParams(dimension_semantics=("arbitrary",)),
    )(f, a)


def _pointwise_kernel(dx_ref, x_ref, w1_ref, b1_ref, wc_ref, bc_ref, o_ref):
    # dx_ref/x_ref: (C, B*HW) f32, channels on sublanes, pixels on lanes (lane-dense 1024).
    # w1_ref: (HID, C) bf16 ; b1_ref: (HID, 1) f32
    # wc_ref: (C, HID+C) bf16 = [layer_scale*w2 | w_skip] ; bc_ref: (C, 1) f32 = layer_scale*b2
    dx = dx_ref[...].astype(jnp.bfloat16)
    x = x_ref[...].astype(jnp.bfloat16)
    h = jnp.dot(w1_ref[...], dx, preferred_element_type=jnp.float32) + b1_ref[...]
    h = 0.5 * h * (1.0 + jax.lax.erf(h * INV_SQRT2))             # nn.GELU (exact erf), f32 VPU
    hx = jnp.concatenate([h.astype(jnp.bfloat16), x], axis=0)    # (HID+C, B*HW)
    o_ref[...] = jnp.dot(wc_ref[...], hx, preferred_element_type=jnp.float32) + bc_ref[...]


def pointwise_pallas(dx, x, w1, b1, wc, bc):
    c, n = dx.shape
    return pl.pallas_call(
        _pointwise_kernel,
        out_shape=jax.ShapeDtypeStruct((c, n), jnp.float32),
        grid=(1,),                                               # single step, whole (C, B*HW) block
        in_specs=[pl.BlockSpec((c, n), lambda i: (0, 0)),
                  pl.BlockSpec((c, n), lambda i: (0, 0)),
                  pl.BlockSpec(w1.shape, lambda i: (0, 0)),
                  pl.BlockSpec(b1.shape, lambda i: (0, 0)),
                  pl.BlockSpec(wc.shape, lambda i: (0, 0)),
                  pl.BlockSpec(bc.shape, lambda i: (0, 0))],
        out_specs=pl.BlockSpec((c, n), lambda i: (0, 0)),
        compiler_params=pltpu.CompilerParams(dimension_semantics=("arbitrary",)),
    )(dx, x, w1, b1, wc, bc)


# ------------------------------ block forward --------------------------------
def neural_operator_block(x, params):
    # --- SpectralConv (global_conv, dhconv): rfft -> fused spectral Pallas -> irfft ---
    f = _spectral_input(x)                                       # (M, 2B, C*J)
    g = spectral_pallas(f, params["A_bf16"])                     # (M, 2B, C*J)
    dxf = _dx_from_spectral(g)                                   # (C, B*HW)

    # --- norm = Identity, drop_path = Identity ---
    # --- fused MLP + skip(x[:, :out_chans]) + layer_scale + residual (Pallas) ---
    xf = jnp.transpose(x[:, :C], (1, 0, 2, 3)).reshape(C, BHW)   # 64 KiB transpose
    outf = pointwise_pallas(dxf, xf, params["w1_bf16"], params["b1"],
                            params["wcomb_bf16"], params["bcomb"])
    return jnp.transpose(outf.reshape(C, B, NLAT, NLON), (1, 0, 2, 3))


# -------------------------------- references ---------------------------------
def reference_block(x, p):
    """Full-f32 (HIGHEST precision) module math, independent of the fused-A trick."""
    f = jnp.fft.rfft(x, axis=-1)[..., :MMAX]
    fri = jnp.stack([f.real, f.imag], axis=0)                    # (2,B,C,J,M)
    xs = jnp.einsum("lmj,j,rbcjm->rbmlc", PBAR, QUAD_W, fri, precision=_HI) * SCALE_FWD
    ys = jnp.einsum("loi,rbmli->rbmlo", p["w_spec"], xs, precision=_HI)
    g = jnp.einsum("lmj,rbmlo->rbojm", PBAR, ys, precision=_HI)  # (2,B,C,J,M)
    gc = jax.lax.complex(g[0], g[1])
    if MMAX < NFREQ:
        gc = jnp.pad(gc, ((0, 0), (0, 0), (0, 0), (0, NFREQ - MMAX)))
    dx = jnp.fft.irfft(gc, n=NLON, axis=-1) * NLON               # (B,C,J,NLON)

    dx_t = jnp.transpose(dx, (0, 2, 3, 1)).reshape(-1, C)
    x_t = jnp.transpose(x[:, :C], (0, 2, 3, 1)).reshape(-1, C)
    h = jnp.dot(dx_t, p["w1t"].T, precision=_HI) + p["b1"][:, 0]
    h = jax.nn.gelu(h, approximate=False)
    mlp = jnp.dot(h, p["w2t"].T, precision=_HI) + p["b2"][:, 0]
    skip = jnp.dot(x_t, p["wskipt"].T, precision=_HI)
    out_t = skip + p["ls"][:, 0] * mlp
    return out_t.reshape(B, NLAT, NLON, C).transpose((0, 3, 1, 2))


def reference_block_matched(x, p):
    """Same math with the SAME bf16 operand rounding points as the kernels, but
    HIGHEST-precision f32 dots — isolates kernel-implementation correctness from
    the bf16 MXU operand policy."""
    def b2f(v):
        return v.astype(jnp.bfloat16).astype(jnp.float32)

    f = _spectral_input(x)
    g = jnp.einsum("mrk,mkn->mrn", b2f(f), p["A_bf16"].astype(jnp.float32),
                   precision=_HI)
    dxf = _dx_from_spectral(g)
    xf = jnp.transpose(x[:, :C], (1, 0, 2, 3)).reshape(C, BHW)

    h = jnp.dot(p["w1_bf16"].astype(jnp.float32), b2f(dxf), precision=_HI) + p["b1"]
    h = 0.5 * h * (1.0 + jax.lax.erf(h * INV_SQRT2))
    hx = jnp.concatenate([b2f(h), b2f(xf)], axis=0)
    outf = jnp.dot(p["wcomb_bf16"].astype(jnp.float32), hx, precision=_HI) + p["bcomb"]
    return jnp.transpose(outf.reshape(C, B, NLAT, NLON), (1, 0, 2, 3))


# ----------------------------- parameter init --------------------------------
def init_params(key):
    ks = jax.random.split(key, 6)
    std_c = math.sqrt(1.0 / C)
    # SpectralConv dhconv weight: per-degree real (Cout, Cin) mixing matrix.
    w_spec = jax.random.normal(ks[0], (LMAX, C, C), jnp.float32) * std_c
    # MLP: fc1 (1x1 conv C->HID) + bias, fc2 (1x1 conv HID->C) + bias; (out, in) layout.
    w1t = jax.random.normal(ks[1], (HID, C), jnp.float32) * std_c
    b1 = jax.random.normal(ks[2], (HID, 1), jnp.float32) * 0.01
    w2t = jax.random.normal(ks[3], (C, HID), jnp.float32) * math.sqrt(1.0 / HID)
    b2 = jax.random.normal(ks[4], (C, 1), jnp.float32) * 0.01
    # skip: nn.Conv2d(inp_chans, out_chans, 1, bias=False), std=sqrt(1/inp_chans)
    wskipt = jax.random.normal(ks[5], (C, C), jnp.float32) * std_c
    # LayerScale(out_chans): ones init, per-channel scale.
    ls = jnp.ones((C, 1), jnp.float32)

    # ---- derived, kernel-layout parameters (folded at init, zero runtime cost) ----
    a_fused = build_spectral_operator(w_spec)                    # (M, C*J, C*J)
    w_comb = jnp.concatenate([ls * w2t, wskipt], axis=1)         # (C, HID+C)
    b_comb = ls * b2                                             # (C, 1)

    return dict(
        w_spec=w_spec, w1t=w1t, b1=b1, w2t=w2t, b2=b2, wskipt=wskipt, ls=ls,
        A_bf16=a_fused.astype(jnp.bfloat16),
        w1_bf16=w1t.astype(jnp.bfloat16),
        wcomb_bf16=w_comb.astype(jnp.bfloat16),
        bcomb=b_comb,
    )


# ---------------------------------- main --------------------------------------
if __name__ == "__main__":
    key = jax.random.PRNGKey(0)
    kx, kp = jax.random.split(key)
    params = init_params(kp)
    x = jax.random.normal(kx, (B, C, NLAT, NLON), jnp.float32)

    out = jax.jit(neural_operator_block)(x, params)
    out = jax.block_until_ready(out)
    assert out.shape == (B, C, NLAT, NLON)
    out_np = np.asarray(out)

    # (1) implementation check: precision-matched reference (same bf16 operand
    #     rounding, f32 HIGHEST dots) — tight element-wise tolerance.
    ref_m = np.asarray(reference_block_matched(x, params))
    np.testing.assert_allclose(out_np, ref_m, rtol=1e-2, atol=1e-2)

    # (2) semantics check: full-f32 HIGHEST module math.  bf16 MXU operands
    #     (per perf review) make an element-wise tail check brittle, so assert
    #     the aggregate relative L2 error instead (~1.5e-2 expected).
    ref = np.asarray(reference_block(x, params))
    rel_l2 = float(np.linalg.norm(out_np - ref) / np.linalg.norm(ref))
    assert rel_l2 < 4e-2, f"relative L2 error vs f32 reference too large: {rel_l2}"

    print("KERNEL_OK")
</pallas_src>

<mosaic_0001>
module attributes {stable_mosaic.version = 11 : i64} {
  func.func @_spectral_kernel(%arg0: i32, %arg1: memref<16x4x256xf32, #tpu.memory_space<vmem>>, %arg2: memref<16x256x256xbf16, #tpu.memory_space<vmem>>, %arg3: memref<16x4x256xf32, #tpu.memory_space<vmem>>) attributes {dimension_semantics = [#tpu.dimension_semantics<arbitrary>], iteration_bounds = array<i64: 1>, scalar_prefetch = 0 : i64, scratch_operands = 0 : i64, tpu.core_type = #tpu.core_type<tc>, window_params = [{pipeline_mode = #tpu.pipeline_mode<synchronous>, transform_indices = @transform_0, window_bounds = array<i64: 16, 4, 256>}, {pipeline_mode = #tpu.pipeline_mode<synchronous>, transform_indices = @transform_1, window_bounds = array<i64: 16, 256, 256>}, {pipeline_mode = #tpu.pipeline_mode<synchronous>, transform_indices = @transform_2, window_bounds = array<i64: 16, 4, 256>}]} {
    %c0 = arith.constant 0 : index
    %c0_0 = arith.constant 0 : index
    %c0_1 = arith.constant 0 : index
    %0 = vector.load %arg1[%c0, %c0_0, %c0_1] : memref<16x4x256xf32, #tpu.memory_space<vmem>>, vector<16x4x256xf32>
    %1 = arith.truncf %0 : vector<16x4x256xf32> to vector<16x4x256xbf16>
    %c0_2 = arith.constant 0 : index
    %c0_3 = arith.constant 0 : index
    %c0_4 = arith.constant 0 : index
    %2 = vector.load %arg2[%c0_2, %c0_3, %c0_4] : memref<16x256x256xbf16, #tpu.memory_space<vmem>>, vector<16x256x256xbf16>
    %cst = arith.constant dense<0.000000e+00> : vector<16x4x256xf32>
    %3 = tpu.matmul %1, %2, %cst {dimension_numbers = #tpu.dot_dimension_numbers<[2], [1], [1], [2], [0, 0, 0, 1, 1, 2], [0], [0]>} : vector<16x4x256xbf16>, vector<16x256x256xbf16>, vector<16x4x256xf32> -> vector<16x4x256xf32>
    %c0_5 = arith.constant 0 : index
    %c0_6 = arith.constant 0 : index
    %c0_7 = arith.constant 0 : index
    %4 = vector.load %arg3[%c0_5, %c0_6, %c0_7] : memref<16x4x256xf32, #tpu.memory_space<vmem>>, vector<16x4x256xf32>
    tpu.vector_store %arg3[%c0_5, %c0_6, %c0_7], %3 {strides = array<i32>} : memref<16x4x256xf32, #tpu.memory_space<vmem>>, vector<16x4x256xf32>,
    return
  }
  func.func @transform_0(%arg0: i32) -> (i32, i32, i32) {
    %c0_i32 = arith.constant 0 : i32
    %c0_i32_0 = arith.constant 0 : i32
    %c0_i32_1 = arith.constant 0 : i32
    %c0_i32_2 = arith.constant 0 : i32
    return %c0_i32, %c0_i32_0, %c0_i32_1 : i32, i32, i32
  }
  func.func @transform_1(%arg0: i32) -> (i32, i32, i32) {
    %c0_i32 = arith.constant 0 : i32
    %c0_i32_0 = arith.constant 0 : i32
    %c0_i32_1 = arith.constant 0 : i32
    %c0_i32_2 = arith.constant 0 : i32
    return %c0_i32, %c0_i32_0, %c0_i32_1 : i32, i32, i32
  }
  func.func @transform_2(%arg0: i32) -> (i32, i32, i32) {
    %c0_i32 = arith.constant 0 : i32
    %c0_i32_0 = arith.constant 0 : i32
    %c0_i32_1 = arith.constant 0 : i32
    %c0_i32_2 = arith.constant 0 : i32
    return %c0_i32, %c0_i32_0, %c0_i32_1 : i32, i32, i32
  }
}

module attributes {stable_mosaic.version = 11 : i64} {
  func.func @_pointwise_kernel(%arg0: i32, %arg1: memref<16x1024xf32, #tpu.memory_space<vmem>>, %arg2: memref<16x1024xf32, #tpu.memory_space<vmem>>, %arg3: memref<32x16xbf16, #tpu.memory_space<vmem>>, %arg4: memref<32x1xf32, #tpu.memory_space<vmem>>, %arg5: memref<16x48xbf16, #tpu.memory_space<vmem>>, %arg6: memref<16x1xf32, #tpu.memory_space<vmem>>, %arg7: memref<16x1024xf32, #tpu.memory_space<vmem>>) attributes {dimension_semantics = [#tpu.dimension_semantics<arbitrary>], iteration_bounds = array<i64: 1>, scalar_prefetch = 0 : i64, scratch_operands = 0 : i64, tpu.core_type = #tpu.core_type<tc>, window_params = [{pipeline_mode = #tpu.pipeline_mode<synchronous>, transform_indices = @transform_0, window_bounds = array<i64: 16, 1024>}, {pipeline_mode = #tpu.pipeline_mode<synchronous>, transform_indices = @transform_1, window_bounds = array<i64: 16, 1024>}, {pipeline_mode = #tpu.pipeline_mode<synchronous>, transform_indices = @transform_2, window_bounds = array<i64: 32, 16>}, {pipeline_mode = #tpu.pipeline_mode<synchronous>, transform_indices = @transform_3, window_bounds = array<i64: 32, 1>}, {pipeline_mode = #tpu.pipeline_mode<synchronous>, transform_indices = @transform_4, window_bounds = array<i64: 16, 48>}, {pipeline_mode = #tpu.pipeline_mode<synchronous>, transform_indices = @transform_5, window_bounds = array<i64: 16, 1>}, {pipeline_mode = #tpu.pipeline_mode<synchronous>, transform_indices = @transform_6, window_bounds = array<i64: 16, 1024>}]} {
    %c0 = arith.constant 0 : index
    %c0_0 = arith.constant 0 : index
    %0 = vector.load %arg1[%c0, %c0_0] : memref<16x1024xf32, #tpu.memory_space<vmem>>, vector<16x1024xf32>
    %1 = arith.truncf %0 : vector<16x1024xf32> to vector<16x1024xbf16>
    %c0_1 = arith.constant 0 : index
    %c0_2 = arith.constant 0 : index
    %2 = vector.load %arg2[%c0_1, %c0_2] : memref<16x1024xf32, #tpu.memory_space<vmem>>, vector<16x1024xf32>
    %3 = arith.truncf %2 : vector<16x1024xf32> to vector<16x1024xbf16>
    %c0_3 = arith.constant 0 : index
    %c0_4 = arith.constant 0 : index
    %4 = vector.load %arg3[%c0_3, %c0_4] : memref<32x16xbf16, #tpu.memory_space<vmem>>, vector<32x16xbf16>
    %cst = arith.constant dense<0.000000e+00> : vector<32x1024xf32>
    %5 = tpu.matmul %4, %1, %cst {dimension_numbers = #tpu.dot_dimension_numbers<[1], [0], [0], [1], [0, 0, 1, 1], [], []>} : vector<32x16xbf16>, vector<16x1024xbf16>, vector<32x1024xf32> -> vector<32x1024xf32>
    %c0_5 = arith.constant 0 : index
    %c0_6 = arith.constant 0 : index
    %6 = vector.load %arg4[%c0_5, %c0_6] : memref<32x1xf32, #tpu.memory_space<vmem>>, vector<32x1xf32>
    %7 = vector.broadcast %6 : vector<32x1xf32> to vector<32x1024xf32>
    %8 = arith.addf %5, %7 : vector<32x1024xf32>
    %cst_7 = arith.constant 5.000000e-01 : f32
    %9 = vector.broadcast %cst_7 : f32 to vector<32x1024xf32>
    %10 = arith.mulf %9, %8 : vector<32x1024xf32>
    %cst_8 = arith.constant 0.707106769 : f32
    %11 = vector.broadcast %cst_8 : f32 to vector<32x1024xf32>
    %12 = arith.mulf %8, %11 : vector<32x1024xf32>
    %13 = math.erf %12 : vector<32x1024xf32>
    %cst_9 = arith.constant 1.000000e+00 : f32
    %14 = vector.broadcast %cst_9 : f32 to vector<32x1024xf32>
    %15 = arith.addf %14, %13 : vector<32x1024xf32>
    %16 = arith.mulf %10, %15 : vector<32x1024xf32>
    %17 = arith.truncf %16 : vector<32x1024xf32> to vector<32x1024xbf16>
    %18 = tpu.concatenate %17, %3 in 0 : vector<32x1024xbf16>, vector<16x1024xbf16> -> vector<48x1024xbf16>
    %c0_10 = arith.constant 0 : index
    %c0_11 = arith.constant 0 : index
    %19 = vector.load %arg5[%c0_10, %c0_11] : memref<16x48xbf16, #tpu.memory_space<vmem>>, vector<16x48xbf16>
    %cst_12 = arith.constant dense<0.000000e+00> : vector<16x1024xf32>
    %20 = tpu.matmul %19, %18, %cst_12 {dimension_numbers = #tpu.dot_dimension_numbers<[1], [0], [0], [1], [0, 0, 1, 1], [], []>} : vector<16x48xbf16>, vector<48x1024xbf16>, vector<16x1024xf32> -> vector<16x1024xf32>
    %c0_13 = arith.constant 0 : index
    %c0_14 = arith.constant 0 : index
    %21 = vector.load %arg6[%c0_13, %c0_14] : memref<16x1xf32, #tpu.memory_space<vmem>>, vector<16x1xf32>
    %22 = vector.broadcast %21 : vector<16x1xf32> to vector<16x1024xf32>
    %23 = arith.addf %20, %22 : vector<16x1024xf32>
    %c0_15 = arith.constant 0 : index
    %c0_16 = arith.constant 0 : index
    %24 = vector.load %arg7[%c0_15, %c0_16] : memref<16x1024xf32, #tpu.memory_space<vmem>>, vector<16x1024xf32>
    tpu.vector_store %arg7[%c0_15, %c0_16], %23 {strides = array<i32>} : memref<16x1024xf32, #tpu.memory_space<vmem>>, vector<16x1024xf32>,
    return
  }
  func.func @transform_0(%arg0: i32) -> (i32, i32) {
    %c0_i32 = arith.constant 0 : i32
    %c0_i32_0 = arith.constant 0 : i32
    %c0_i32_1 = arith.constant 0 : i32
    return %c0_i32, %c0_i32_0 : i32, i32
  }
  func.func @transform_1(%arg0: i32) -> (i32, i32) {
    %c0_i32 = arith.constant 0 : i32
    %c0_i32_0 = arith.constant 0 : i32
    %c0_i32_1 = arith.constant 0 : i32
    return %c0_i32, %c0_i32_0 : i32, i32
  }
  func.func @transform_2(%arg0: i32) -> (i32, i32) {
    %c0_i32 = arith.constant 0 : i32
    %c0_i32_0 = arith.constant 0 : i32
    %c0_i32_1 = arith.constant 0 : i32
    return %c0_i32, %c0_i32_0 : i32, i32
  }
  func.func @transform_3(%arg0: i32) -> (i32, i32) {
    %c0_i32 = arith.constant 0 : i32
    %c0_i32_0 = arith.constant 0 : i32
    %c0_i32_1 = arith.constant 0 : i32
    return %c0_i32, %c0_i32_0 : i32, i32
  }
  func.func @transform_4(%arg0: i32) -> (i32, i32) {
    %c0_i32 = arith.constant 0 : i32
    %c0_i32_0 = arith.constant 0 : i32
    %c0_i32_1 = arith.constant 0 : i32
    return %c0_i32, %c0_i32_0 : i32, i32
  }
  func.func @transform_5(%arg0: i32) -> (i32, i32) {
    %c0_i32 = arith.constant 0 : i32
    %c0_i32_0 = arith.constant 0 : i32
    %c0_i32_1 = arith.constant 0 : i32
    return %c0_i32, %c0_i32_0 : i32, i32
  }
  func.func @transform_6(%arg0: i32) -> (i32, i32) {
    %c0_i32 = arith.constant 0 : i32
    %c0_i32_0 = arith.constant 0 : i32
    %c0_i32_1 = arith.constant 0 : i32
    return %c0_i32, %c0_i32_0 : i32, i32
  }
}

</mosaic_0001>

<llo_original>
// kernel: reverse.0
$region0: #{reverse.0}
  %s0 = inlined_call_operand.vmem [shape: f32[16,2,16,15], index: 0, kind: input, shape index: {}]
  %s1 = inlined_call_operand.vmem [shape: f32[16,2,16,15], index: 1, kind: output, shape index: {}]
  %v2 = vlaneseq
  %v3 = vsub.s32 14, %v2
  %4 = vset.pattern.permute.xlu0 %v3
  $region1: #{reverse.0} parent=0
    #allocation0 [shape = 'u8[262144]{0}', space=vmem, size = 0x40000, scoped, tag = 'operand span for operand 0']
    #allocation1 [shape = 'u8[262144]{0}', space=vmem, size = 0x40000, scoped, tag = 'operand span for operand 1']
    // Predicated region
    $region2: #{reverse.0} parent=1 // pred_check
      _
    $region3: #{reverse.0} parent=1 // pred_check_branch
      %6 = sbr.rel (0) target = $region5
    $region4: #{reverse.0} parent=1 // pred_region
      // Predicated region
      $region6: #{reverse.0} parent=4 // pred_check
        _
      $region7: #{reverse.0} parent=4 // pred_check_branch
        %8 = sbr.rel (0) target = $region9
      $region8: #{reverse.0} parent=4 // pred_region
        // Predicated region
        $region21: #{reverse.0} parent=8 // pred_check
          _
        $region22: #{reverse.0} parent=8 // pred_check_branch
          %149 = sbr.rel (0) target = $region24
        $region23: #{reverse.0} parent=8 // pred_region
          loop: start=0, step=1, limit=1
          $region25: #{reverse.0} parent=23 // loop_pre_header
            _
          $region26: #{reverse.0} parent=23 // loop_header
            %s151 = sphi 0, %s155
            %p152 = scmp.ge.s32.totalorder %s151, 1
            %s156 = sphi %s0, %s0
            %s157 = sphi [#allocation0], [#allocation0]
          $region27: #{reverse.0} parent=23 // loop_header_branch
            %154 = sbr.rel (%p152) target = $region31
          $region28: #{reverse.0} parent=23 // loop_body
            %v158 = vld [vmem:[%s156] sm:$0xff]
            %159 = vst [vmem:[%s157] sm:$0xff] %v158
            %v160 = vld [vmem:[%s156 + $0x8] sm:$0xff]
            %161 = vst [vmem:[%s157 + $0x8] sm:$0xff] %v160
            %v162 = vld [vmem:[%s156 + $0x10] sm:$0xff]
            %163 = vst [vmem:[%s157 + $0x10] sm:$0xff] %v162
            %v164 = vld [vmem:[%s156 + $0x18] sm:$0xff]
            %165 = vst [vmem:[%s157 + $0x18] sm:$0xff] %v164
            %v166 = vld [vmem:[%s156 + $0x20] sm:$0xff]
            %167 = vst [vmem:[%s157 + $0x20] sm:$0xff] %v166
            %v168 = vld [vmem:[%s156 + $0x28] sm:$0xff]
            %169 = vst [vmem:[%s157 + $0x28] sm:$0xff] %v168
            %v170 = vld [vmem:[%s156 + $0x30] sm:$0xff]
            %171 = vst [vmem:[%s157 + $0x30] sm:$0xff] %v170
            %v172 = vld [vmem:[%s156 + $0x38] sm:$0xff]
            %173 = vst [vmem:[%s157 + $0x38] sm:$0xff] %v172
            %v174 = vld [vmem:[%s156 + $0x40] sm:$0xff]
            %175 = vst [vmem:[%s157 + $0x40] sm:$0xff] %v174
            %v176 = vld [vmem:[%s156 + $0x48] sm:$0xff]
            %177 = vst [vmem:[%s157 + $0x48] sm:$0xff] %v176
            %v178 = vld [vmem:[%s156 + $0x50] sm:$0xff]
            %179 = vst [vmem:[%s157 + $0x50] sm:$0xff] %v178
            %v180 = vld [vmem:[%s156 + $0x58] sm:$0xff]
            %181 = vst [vmem:[%s157 + $0x58] sm:$0xff] %v180
            %v182 = vld [vmem:[%s156 + $0x60] sm:$0xff]
            %183 = vst [vmem:[%s157 + $0x60] sm:$0xff] %v182
            %v184 = vld [vmem:[%s156 + $0x68] sm:$0xff]
            %185 = vst [vmem:[%s157 + $0x68] sm:$0xff] %v184
            %v186 = vld [vmem:[%s156 + $0x70] sm:$0xff]
            %187 = vst [vmem:[%s157 + $0x70] sm:$0xff] %v186
            %v188 = vld [vmem:[%s156 + $0x78] sm:$0xff]
            %189 = vst [vmem:[%s157 + $0x78] sm:$0xff] %v188
            %v190 = vld [vmem:[%s156 + $0x80] sm:$0xff]
            %191 = vst [vmem:[%s157 + $0x80] sm:$0xff] %v190
            %v192 = vld [vmem:[%s156 + $0x88] sm:$0xff]
            %193 = vst [vmem:[%s157 + $0x88] sm:$0xff] %v192
            %v194 = vld [vmem:[%s156 + $0x90] sm:$0xff]
            %195 = vst [vmem:[%s157 + $0x90] sm:$0xff] %v194
            %v196 = vld [vmem:[%s156 + $0x98] sm:$0xff]
            %197 = vst [vmem:[%s157 + $0x98] sm:$0xff] %v196
            %v198 = vld [vmem:[%s156 + $0xa0] sm:$0xff]
            %199 = vst [vmem:[%s157 + $0xa0] sm:$0xff] %v198
            %v200 = vld [vmem:[%s156 + $0xa8] sm:$0xff]
            %201 = vst [vmem:[%s157 + $0xa8] sm:$0xff] %v200
            %v202 = vld [vmem:[%s156 + $0xb0] sm:$0xff]
            %203 = vst [vmem:[%s157 + $0xb0] sm:$0xff] %v202
            %v204 = vld [vmem:[%s156 + $0xb8] sm:$0xff]
            %205 = vst [vmem:[%s157 + $0xb8] sm:$0xff] %v204
            %v206 = vld [vmem:[%s156 + $0xc0] sm:$0xff]
            %207 = vst [vmem:[%s157 + $0xc0] sm:$0xff] %v206
            %v208 = vld [vmem:[%s156 + $0xc8] sm:$0xff]
            %209 = vst [vmem:[%s157 + $0xc8] sm:$0xff] %v208
            %v210 = vld [vmem:[%s156 + $0xd0] sm:$0xff]
            %211 = vst [vmem:[%s157 + $0xd0] sm:$0xff] %v210
            %v212 = vld [vmem:[%s156 + $0xd8] sm:$0xff]
            %213 = vst [vmem:[%s157 + $0xd8] sm:$0xff] %v212
            %v214 = vld [vmem:[%s156 + $0xe0] sm:$0xff]
            %215 = vst [vmem:[%s157 + $0xe0] sm:$0xff] %v214
            %v216 = vld [vmem:[%s156 + $0xe8] sm:$0xff]
            %217 = vst [vmem:[%s157 + $0xe8] sm:$0xff] %v216
            %v218 = vld [vmem:[%s156 + $0xf0] sm:$0xff]
            %219 = vst [vmem:[%s157 + $0xf0] sm:$0xff] %v218
            %v220 = vld [vmem:[%s156 + $0xf8] sm:$0xff]
            %221 = vst [vmem:[%s157 + $0xf8] sm:$0xff] %v220
            %v222 = vld [vmem:[%s156 + $0x100] sm:$0xff]
            %223 = vst [vmem:[%s157 + $0x100] sm:$0xff] %v222
            %v224 = vld [vmem:[%s156 + $0x108] sm:$0xff]
            %225 = vst [vmem:[%s157 + $0x108] sm:$0xff] %v224
            %v226 = vld [vmem:[%s156 + $0x110] sm:$0xff]
            %227 = vst [vmem:[%s157 + $0x110] sm:$0xff] %v226
            %v228 = vld [vmem:[%s156 + $0x118] sm:$0xff]
            %229 = vst [vmem:[%s157 + $0x118] sm:$0xff] %v228
            %v230 = vld [vmem:[%s156 + $0x120] sm:$0xff]
            %231 = vst [vmem:[%s157 + $0x120] sm:$0xff] %v230
            %v232 = vld [vmem:[%s156 + $0x128] sm:$0xff]
            %233 = vst [vmem:[%s157 + $0x128] sm:$0xff] %v232
            %v234 = vld [vmem:[%s156 + $0x130] sm:$0xff]
            %235 = vst [vmem:[%s157 + $0x130] sm:$0xff] %v234
            %v236 = vld [vmem:[%s156 + $0x138] sm:$0xff]
            %237 = vst [vmem:[%s157 + $0x138] sm:$0xff] %v236
            %v238 = vld [vmem:[%s156 + $0x140] sm:$0xff]
            %239 = vst [vmem:[%s157 + $0x140] sm:$0xff] %v238
            %v240 = vld [vmem:[%s156 + $0x148] sm:$0xff]
            %241 = vst [vmem:[%s157 + $0x148] sm:$0xff] %v240
            %v242 = vld [vmem:[%s156 + $0x150] sm:$0xff]
            %243 = vst [vmem:[%s157 + $0x150] sm:$0xff] %v242
            %v244 = vld [vmem:[%s156 + $0x158] sm:$0xff]
            %245 = vst [vmem:[%s157 + $0x158] sm:$0xff] %v244
            %v246 = vld [vmem:[%s156 + $0x160] sm:$0xff]
            %247 = vst [vmem:[%s157 + $0x160] sm:$0xff] %v246
            %v248 = vld [vmem:[%s156 + $0x168] sm:$0xff]
            %249 = vst [vmem:[%s157 + $0x168] sm:$0xff] %v248
            %v250 = vld [vmem:[%s156 + $0x170] sm:$0xff]
            %251 = vst [vmem:[%s157 + $0x170] sm:$0xff] %v250
            %v252 = vld [vmem:[%s156 + $0x178] sm:$0xff]
            %253 = vst [vmem:[%s157 + $0x178] sm:$0xff] %v252
            %v254 = vld [vmem:[%s156 + $0x180] sm:$0xff]
            %255 = vst [vmem:[%s157 + $0x180] sm:$0xff] %v254
            %v256 = vld [vmem:[%s156 + $0x188] sm:$0xff]
            %257 = vst [vmem:[%s157 + $0x188] sm:$0xff] %v256
            %v258 = vld [vmem:[%s156 + $0x190] sm:$0xff]
            %259 = vst [vmem:[%s157 + $0x190] sm:$0xff] %v258
            %v260 = vld [vmem:[%s156 + $0x198] sm:$0xff]
            %261 = vst [vmem:[%s157 + $0x198] sm:$0xff] %v260
            %v262 = vld [vmem:[%s156 + $0x1a0] sm:$0xff]
            %263 = vst [vmem:[%s157 + $0x1a0] sm:$0xff] %v262
            %v264 = vld [vmem:[%s156 + $0x1a8] sm:$0xff]
            %265 = vst [vmem:[%s157 + $0x1a8] sm:$0xff] %v264
            %v266 = vld [vmem:[%s156 + $0x1b0] sm:$0xff]
            %267 = vst [vmem:[%s157 + $0x1b0] sm:$0xff] %v266
            %v268 = vld [vmem:[%s156 + $0x1b8] sm:$0xff]
            %269 = vst [vmem:[%s157 + $0x1b8] sm:$0xff] %v268
            %v270 = vld [vmem:[%s156 + $0x1c0] sm:$0xff]
            %271 = vst [vmem:[%s157 + $0x1c0] sm:$0xff] %v270
            %v272 = vld [vmem:[%s156 + $0x1c8] sm:$0xff]
            %273 = vst [vmem:[%s157 + $0x1c8] sm:$0xff] %v272
            %v274 = vld [vmem:[%s156 + $0x1d0] sm:$0xff]
            %275 = vst [vmem:[%s157 + $0x1d0] sm:$0xff] %v274
            %v276 = vld [vmem:[%s156 + $0x1d8] sm:$0xff]
            %277 = vst [vmem:[%s157 + $0x1d8] sm:$0xff] %v276
            %v278 = vld [vmem:[%s156 + $0x1e0] sm:$0xff]
            %279 = vst [vmem:[%s157 + $0x1e0] sm:$0xff] %v278
            %v280 = vld [vmem:[%s156 + $0x1e8] sm:$0xff]
            %281 = vst [vmem:[%s157 + $0x1e8] sm:$0xff] %v280
            %v282 = vld [vmem:[%s156 + $0x1f0] sm:$0xff]
            %283 = vst [vmem:[%s157 + $0x1f0] sm:$0xff] %v282
            %v284 = vld [vmem:[%s156 + $0x1f8] sm:$0xff]
            %285 = vst [vmem:[%s157 + $0x1f8] sm:$0xff] %v284
          $region29: #{reverse.0} parent=23 // loop_footer
            %s155 = sadd.s32 1, %s151
          $region30: #{reverse.0} parent=23 // loop_footer_branch
            %150 = sbr.rel target = $region26
          $region31: #{reverse.0} parent=23 // loop_exit
            _
        $region24: #{reverse.0} parent=8 // pred_fallthru
          _
        // Predicated region
        $region32: #{reverse.0} parent=8 // pred_check
          _
        $region33: #{reverse.0} parent=8 // pred_check_branch
          %287 = sbr.rel target = $region35
        $region34: #{reverse.0} parent=8 // pred_region
          _
        $region35: #{reverse.0} parent=8 // pred_fallthru
          _
      $region9: #{reverse.0} parent=4 // pred_fallthru
        _
      // Predicated region
      $region10: #{reverse.0} parent=4 // pred_check
        _
      $region11: #{reverse.0} parent=4 // pred_check_branch
        %10 = sbr.rel target = $region13
      $region12: #{reverse.0} parent=4 // pred_region
        loop: start=0, step=1, limit=1
        $region14: #{reverse.0} parent=12 // loop_pre_header
          _
        $region15: #{reverse.0} parent=12 // loop_header
          %s13 = sphi 0, %s17
          %p14 = scmp.ge.s32.totalorder %s13, 1
          %s18 = sphi %s0, %s0
          %s19 = sphi [#allocation0], [#allocation0]
        $region16: #{reverse.0} parent=12 // loop_header_branch
          %16 = sbr.rel (%p14) target = $region20
        $region17: #{reverse.0} parent=12 // loop_body
          %v20 = vld [vmem:[%s18] sm:$0xff]
          %21 = vst [vmem:[%s19] sm:$0xff] %v20
          %v22 = vld [vmem:[%s18 + $0x8] sm:$0xff]
          %23 = vst [vmem:[%s19 + $0x8] sm:$0xff] %v22
          %v24 = vld [vmem:[%s18 + $0x10] sm:$0xff]
          %25 = vst [vmem:[%s19 + $0x10] sm:$0xff] %v24
          %v26 = vld [vmem:[%s18 + $0x18] sm:$0xff]
          %27 = vst [vmem:[%s19 + $0x18] sm:$0xff] %v26
          %v28 = vld [vmem:[%s18 + $0x20] sm:$0xff]
          %29 = vst [vmem:[%s19 + $0x20] sm:$0xff] %v28
          %v30 = vld [vmem:[%s18 + $0x28] sm:$0xff]
          %31 = vst [vmem:[%s19 + $0x28] sm:$0xff] %v30
          %v32 = vld [vmem:[%s18 + $0x30] sm:$0xff]
          %33 = vst [vmem:[%s19 + $0x30] sm:$0xff] %v32
          %v34 = vld [vmem:[%s18 + $0x38] sm:$0xff]
          %35 = vst [vmem:[%s19 + $0x38] sm:$0xff] %v34
          %v36 = vld [vmem:[%s18 + $0x40] sm:$0xff]
          %37 = vst [vmem:[%s19 + $0x40] sm:$0xff] %v36
          %v38 = vld [vmem:[%s18 + $0x48] sm:$0xff]
          %39 = vst [vmem:[%s19 + $0x48] sm:$0xff] %v38
          %v40 = vld [vmem:[%s18 + $0x50] sm:$0xff]
          %41 = vst [vmem:[%s19 + $0x50] sm:$0xff] %v40
          %v42 = vld [vmem:[%s18 + $0x58] sm:$0xff]
          %43 = vst [vmem:[%s19 + $0x58] sm:$0xff] %v42
          %v44 = vld [vmem:[%s18 + $0x60] sm:$0xff]
          %45 = vst [vmem:[%s19 + $0x60] sm:$0xff] %v44
          %v46 = vld [vmem:[%s18 + $0x68] sm:$0xff]
          %47 = vst [vmem:[%s19 + $0x68] sm:$0xff] %v46
          %v48 = vld [vmem:[%s18 + $0x70] sm:$0xff]
          %49 = vst [vmem:[%s19 + $0x70] sm:$0xff] %v48
          %v50 = vld [vmem:[%s18 + $0x78] sm:$0xff]
          %51 = vst [vmem:[%s19 + $0x78] sm:$0xff] %v50
          %v52 = vld [vmem:[%s18 + $0x80] sm:$0xff]
          %53 = vst [vmem:[%s19 + $0x80] sm:$0xff] %v52
          %v54 = vld [vmem:[%s18 + $0x88] sm:$0xff]
          %55 = vst [vmem:[%s19 + $0x88] sm:$0xff] %v54
          %v56 = vld [vmem:[%s18 + $0x90] sm:$0xff]
          %57 = vst [vmem:[%s19 + $0x90] sm:$0xff] %v56
          %v58 = vld [vmem:[%s18 + $0x98] sm:$0xff]
          %59 = vst [vmem:[%s19 + $0x98] sm:$0xff] %v58
          %v60 = vld [vmem:[%s18 + $0xa0] sm:$0xff]
          %61 = vst [vmem:[%s19 + $0xa0] sm:$0xff] %v60
          %v62 = vld [vmem:[%s18 + $0xa8] sm:$0xff]
          %63 = vst [vmem:[%s19 + $0xa8] sm:$0xff] %v62
          %v64 = vld [vmem:[%s18 + $0xb0] sm:$0xff]
          %65 = vst [vmem:[%s19 + $0xb0] sm:$0xff] %v64
          %v66 = vld [vmem:[%s18 + $0xb8] sm:$0xff]
          %67 = vst [vmem:[%s19 + $0xb8] sm:$0xff] %v66
          %v68 = vld [vmem:[%s18 + $0xc0] sm:$0xff]
          %69 = vst [vmem:[%s19 + $0xc0] sm:$0xff] %v68
          %v70 = vld [vmem:[%s18 + $0xc8] sm:$0xff]
          %71 = vst [vmem:[%s19 + $0xc8] sm:$0xff] %v70
          %v72 = vld [vmem:[%s18 + $0xd0] sm:$0xff]
          %73 = vst [vmem:[%s19 + $0xd0] sm:$0xff] %v72
          %v74 = vld [vmem:[%s18 + $0xd8] sm:$0xff]
          %75 = vst [vmem:[%s19 + $0xd8] sm:$0xff] %v74
          %v76 = vld [vmem:[%s18 + $0xe0] sm:$0xff]
          %77 = vst [vmem:[%s19 + $0xe0] sm:$0xff] %v76
          %v78 = vld [vmem:[%s18 + $0xe8] sm:$0xff]
          %79 = vst [vmem:[%s19 + $0xe8] sm:$0xff] %v78
          %v80 = vld [vmem:[%s18 + $0xf0] sm:$0xff]
          %81 = vst [vmem:[%s19 + $0xf0] sm:$0xff] %v80
          %v82 = vld [vmem:[%s18 + $0xf8] sm:$0xff]
          %83 = vst [vmem:[%s19 + $0xf8] sm:$0xff] %v82
          %v84 = vld [vmem:[%s18 + $0x100] sm:$0xff]
          %85 = vst [vmem:[%s19 + $0x100] sm:$0xff] %v84
          %v86 = vld [vmem:[%s18 + $0x108] sm:$0xff]
          %87 = vst [vmem:[%s19 + $0x108] sm:$0xff] %v86
          %v88 = vld [vmem:[%s18 + $0x110] sm:$0xff]
          %89 = vst [vmem:[%s19 + $0x110] sm:$0xff] %v88
          %v90 = vld [vmem:[%s18 + $0x118] sm:$0xff]
          %91 = vst [vmem:[%s19 + $0x118] sm:$0xff] %v90
          %v92 = vld [vmem:[%s18 + $0x120] sm:$0xff]
          %93 = vst [vmem:[%s19 + $0x120] sm:$0xff] %v92
          %v94 = vld [vmem:[%s18 + $0x128] sm:$0xff]
          %95 = vst [vmem:[%s19 + $0x128] sm:$0xff] %v94
          %v96 = vld [vmem:[%s18 + $0x130] sm:$0xff]
          %97 = vst [vmem:[%s19 + $0x130] sm:$0xff] %v96
          %v98 = vld [vmem:[%s18 + $0x138] sm:$0xff]
          %99 = vst [vmem:[%s19 + $0x138] sm:$0xff] %v98
          %v100 = vld [vmem:[%s18 + $0x140] sm:$0xff]
          %101 = vst [vmem:[%s19 + $0x140] sm:$0xff] %v100
          %v102 = vld [vmem:[%s18 + $0x148] sm:$0xff]
          %103 = vst [vmem:[%s19 + $0x148] sm:$0xff] %v102
          %v104 = vld [vmem:[%s18 + $0x150] sm:$0xff]
          %105 = vst [vmem:[%s19 + $0x150] sm:$0xff] %v104
          %v106 = vld [vmem:[%s18 + $0x158] sm:$0xff]
          %107 = vst [vmem:[%s19 + $0x158] sm:$0xff] %v106
          %v108 = vld [vmem:[%s18 + $0x160] sm:$0xff]
          %109 = vst [vmem:[%s19 + $0x160] sm:$0xff] %v108
          %v110 = vld [vmem:[%s18 + $0x168] sm:$0xff]
          %111 = vst [vmem:[%s19 + $0x168] sm:$0xff] %v110
          %v112 = vld [vmem:[%s18 + $0x170] sm:$0xff]
          %113 = vst [vmem:[%s19 + $0x170] sm:$0xff] %v112
          %v114 = vld [vmem:[%s18 + $0x178] sm:$0xff]
          %115 = vst [vmem:[%s19 + $0x178] sm:$0xff] %v114
          %v116 = vld [vmem:[%s18 + $0x180] sm:$0xff]
          %117 = vst [vmem:[%s19 + $0x180] sm:$0xff] %v116
          %v118 = vld [vmem:[%s18 + $0x188] sm:$0xff]
          %119 = vst [vmem:[%s19 + $0x188] sm:$0xff] %v118
          %v120 = vld [vmem:[%s18 + $0x190] sm:$0xff]
          %121 = vst [vmem:[%s19 + $0x190] sm:$0xff] %v120
          %v122 = vld [vmem:[%s18 + $0x198] sm:$0xff]
          %123 = vst [vmem:[%s19 + $0x198] sm:$0xff] %v122
          %v124 = vld [vmem:[%s18 + $0x1a0] sm:$0xff]
          %125 = vst [vmem:[%s19 + $0x1a0] sm:$0xff] %v124
          %v126 = vld [vmem:[%s18 + $0x1a8] sm:$0xff]
          %127 = vst [vmem:[%s19 + $0x1a8] sm:$0xff] %v126
          %v128 = vld [vmem:[%s18 + $0x1b0] sm:$0xff]
          %129 = vst [vmem:[%s19 + $0x1b0] sm:$0xff] %v128
          %v130 = vld [vmem:[%s18 + $0x1b8] sm:$0xff]
          %131 = vst [vmem:[%s19 + $0x1b8] sm:$0xff] %v130
          %v132 = vld [vmem:[%s18 + $0x1c0] sm:$0xff]
          %133 = vst [vmem:[%s19 + $0x1c0] sm:$0xff] %v132
          %v134 = vld [vmem:[%s18 + $0x1c8] sm:$0xff]
          %135 = vst [vmem:[%s19 + $0x1c8] sm:$0xff] %v134
          %v136 = vld [vmem:[%s18 + $0x1d0] sm:$0xff]
          %137 = vst [vmem:[%s19 + $0x1d0] sm:$0xff] %v136
          %v138 = vld [vmem:[%s18 + $0x1d8] sm:$0xff]
          %139 = vst [vmem:[%s19 + $0x1d8] sm:$0xff] %v138
          %v140 = vld [vmem:[%s18 + $0x1e0] sm:$0xff]
          %141 = vst [vmem:[%s19 + $0x1e0] sm:$0xff] %v140
          %v142 = vld [vmem:[%s18 + $0x1e8] sm:$0xff]
          %143 = vst [vmem:[%s19 + $0x1e8] sm:$0xff] %v142
          %v144 = vld [vmem:[%s18 + $0x1f0] sm:$0xff]
          %145 = vst [vmem:[%s19 + $0x1f0] sm:$0xff] %v144
          %v146 = vld [vmem:[%s18 + $0x1f8] sm:$0xff]
          %147 = vst [vmem:[%s19 + $0x1f8] sm:$0xff] %v146
        $region18: #{reverse.0} parent=12 // loop_footer
          %s17 = sadd.s32 1, %s13
        $region19: #{reverse.0} parent=12 // loop_footer_branch
          %12 = sbr.rel target = $region15
        $region20: #{reverse.0} parent=12 // loop_exit
          _
      $region13: #{reverse.0} parent=4 // pred_fallthru
        _
    $region5: #{reverse.0} parent=1 // pred_fallthru
      _
    %288 = vnop
    %v289 = vld [vmem:[#allocation0] sm:$0xff]
    %290 = vperm.xlu0 %4, %v289
    %v291 = vpop.permute.xlu0 %290
    %292 = vst [vmem:[#allocation1] sm:$0xff] %v291
    %s293 = scalar_lea.vmem [#allocation1], 8
    %s294 = scalar_lea.vmem [#allocation0], 8
    %v295 = vld [vmem:[%s294] sm:$0xff]
    %296 = vperm.xlu0 %4, %v295
    %v297 = vpop.permute.xlu0 %296
    %298 = vst [vmem:[%s293] sm:$0xff] %v297
    %s299 = scalar_lea.vmem [#allocation1], 16
    %s300 = scalar_lea.vmem [#allocation0], 16
    %v301 = vld [vmem:[%s300] sm:$0xff]
    %302 = vperm.xlu0 %4, %v301
    %v303 = vpop.permute.xlu0 %302
    %304 = vst [vmem:[%s299] sm:$0xff] %v303
    %s305 = scalar_lea.vmem %s299, 8 [#allocation1]
    %s306 = scalar_lea.vmem %s300, 8 [#allocation0]
    %v307 = vld [vmem:[%s306] sm:$0xff]
    %308 = vperm.xlu0 %4, %v307
    %v309 = vpop.permute.xlu0 %308
    %310 = vst [vmem:[%s305] sm:$0xff] %v309
    %s311 = scalar_lea.vmem [#allocation1], 32
    %s312 = scalar_lea.vmem [#allocation0], 32
    %v313 = vld [vmem:[%s312] sm:$0xff]
    %314 = vperm.xlu0 %4, %v313
    %v315 = vpop.permute.xlu0 %314
    %316 = vst [vmem:[%s311] sm:$0xff] %v315
    %s317 = scalar_lea.vmem %s311, 8 [#allocation1]
    %s318 = scalar_lea.vmem %s312, 8 [#allocation0]
    %v319 = vld [vmem:[%s318] sm:$0xff]
    %320 = vperm.xlu0 %4, %v319
    %v321 = vpop.permute.xlu0 %320
    %322 = vst [vmem:[%s317] sm:$0xff] %v321
    %s323 = scalar_lea.vmem [#allocation1], 48
    %s324 = scalar_lea.vmem [#allocation0], 48
    %v325 = vld [vmem:[%s324] sm:$0xff]
    %326 = vperm.xlu0 %4, %v325
    %v327 = vpop.permute.xlu0 %326
    %328 = vst [vmem:[%s323] sm:$0xff] %v327
    %s329 = scalar_lea.vmem %s323, 8 [#allocation1]
    %s330 = scalar_lea.vmem %s324, 8 [#allocation0]
    %v331 = vld [vmem:[%s330] sm:$0xff]
    %332 = vperm.xlu0 %4, %v331
    %v333 = vpop.permute.xlu0 %332
    %334 = vst [vmem:[%s329] sm:$0xff] %v333
    %s335 = scalar_lea.vmem [#allocation1], 64
    %s336 = scalar_lea.vmem [#allocation0], 64
    %v337 = vld [vmem:[%s336] sm:$0xff]
    %338 = vperm.xlu0 %4, %v337
    %v339 = vpop.permute.xlu0 %338
    %340 = vst [vmem:[%s335] sm:$0xff] %v339
    %s341 = scalar_lea.vmem %s335, 8 [#allocation1]
    %s342 = scalar_lea.vmem %s336, 8 [#allocation0]
    %v343 = vld [vmem:[%s342] sm:$0xff]
    %344 = vperm.xlu0 %4, %v343
    %v345 = vpop.permute.xlu0 %344
    %346 = vst [vmem:[%s341] sm:$0xff] %v345
    %s347 = scalar_lea.vmem [#allocation1], 80
    %s348 = scalar_lea.vmem [#allocation0], 80
    %v349 = vld [vmem:[%s348] sm:$0xff]
    %350 = vperm.xlu0 %4, %v349
    %v351 = vpop.permute.xlu0 %350
    %352 = vst [vmem:[%s347] sm:$0xff] %v351
    %s353 = scalar_lea.vmem %s347, 8 [#allocation1]
    %s354 = scalar_lea.vmem %s348, 8 [#allocation0]
    %v355 = vld [vmem:[%s354] sm:$0xff]
    %356 = vperm.xlu0 %4, %v355
    %v357 = vpop.permute.xlu0 %356
    %358 = vst [vmem:[%s353] sm:$0xff] %v357
    %s359 = scalar_lea.vmem [#allocation1], 96
    %s360 = scalar_lea.vmem [#allocation0], 96
    %v361 = vld [vmem:[%s360] sm:$0xff]
    %362 = vperm.xlu0 %4, %v361
    %v363 = vpop.permute.xlu0 %362
    %364 = vst [vmem:[%s359] sm:$0xff] %v363
    %s365 = scalar_lea.vmem %s359, 8 [#allocation1]
    %s366 = scalar_lea.vmem %s360, 8 [#allocation0]
    %v367 = vld [vmem:[%s366] sm:$0xff]
    %368 = vperm.xlu0 %4, %v367
    %v369 = vpop.permute.xlu0 %368
    %370 = vst [vmem:[%s365] sm:$0xff] %v369
    %s371 = scalar_lea.vmem [#allocation1], 112
    %s372 = scalar_lea.vmem [#allocation0], 112
    %v373 = vld [vmem:[%s372] sm:$0xff]
    %374 = vperm.xlu0 %4, %v373
    %v375 = vpop.permute.xlu0 %374
    %376 = vst [vmem:[%s371] sm:$0xff] %v375
    %s377 = scalar_lea.vmem %s371, 8 [#allocation1]
    %s378 = scalar_lea.vmem %s372, 8 [#allocation0]
    %v379 = vld [vmem:[%s378] sm:$0xff]
    %380 = vperm.xlu0 %4, %v379
    %v381 = vpop.permute.xlu0 %380
    %382 = vst [vmem:[%s377] sm:$0xff] %v381
    %s383 = scalar_lea.vmem [#allocation1], 128
    %s384 = scalar_lea.vmem [#allocation0], 128
    %v385 = vld [vmem:[%s384] sm:$0xff]
    %386 = vperm.xlu0 %4, %v385
    %v387 = vpop.permute.xlu0 %386
    %388 = vst [vmem:[%s383] sm:$0xff] %v387
    %s389 = scalar_lea.vmem %s383, 8 [#allocation1]
    %s390 = scalar_lea.vmem %s384, 8 [#allocation0]
    %v391 = vld [vmem:[%s390] sm:$0xff]
    %392 = vperm.xlu0 %4, %v391
    %v393 = vpop.permute.xlu0 %392
    %394 = vst [vmem:[%s389] sm:$0xff] %v393
    %s395 = scalar_lea.vmem [#allocation1], 144
    %s396 = scalar_lea.vmem [#allocation0], 144
    %v397 = vld [vmem:[%s396] sm:$0xff]
    %398 = vperm.xlu0 %4, %v397
    %v399 = vpop.permute.xlu0 %398
    %400 = vst [vmem:[%s395] sm:$0xff] %v399
    %s401 = scalar_lea.vmem %s395, 8 [#allocation1]
    %s402 = scalar_lea.vmem %s396, 8 [#allocation0]
    %v403 = vld [vmem:[%s402] sm:$0xff]
    %404 = vperm.xlu0 %4, %v403
    %v405 = vpop.permute.xlu0 %404
    %406 = vst [vmem:[%s401] sm:$0xff] %v405
    %s407 = scalar_lea.vmem [#allocation1], 160
    %s408 = scalar_lea.vmem [#allocation0], 160
    %v409 = vld [vmem:[%s408] sm:$0xff]
    %410 = vperm.xlu0 %4, %v409
    %v411 = vpop.permute.xlu0 %410
    %412 = vst [vmem:[%s407] sm:$0xff] %v411
    %s413 = scalar_lea.vmem %s407, 8 [#allocation1]
    %s414 = scalar_lea.vmem %s408, 8 [#allocation0]
    %v415 = vld [vmem:[%s414] sm:$0xff]
    %416 = vperm.xlu0 %4, %v415
    %v417 = vpop.permute.xlu0 %416
    %418 = vst [vmem:[%s413] sm:$0xff] %v417
    %s419 = scalar_lea.vmem [#allocation1], 176
    %s420 = scalar_lea.vmem [#allocation0], 176
    %v421 = vld [vmem:[%s420] sm:$0xff]
    %422 = vperm.xlu0 %4, %v421
    %v423 = vpop.permute.xlu0 %422
    %424 = vst [vmem:[%s419] sm:$0xff] %v423
    %s425 = scalar_lea.vmem %s419, 8 [#allocation1]
    %s426 = scalar_lea.vmem %s420, 8 [#allocation0]
    %v427 = vld [vmem:[%s426] sm:$0xff]
    %428 = vperm.xlu0 %4, %v427
    %v429 = vpop.permute.xlu0 %428
    %430 = vst [vmem:[%s425] sm:$0xff] %v429
    %s431 = scalar_lea.vmem [#allocation1], 192
    %s432 = scalar_lea.vmem [#allocation0], 192
    %v433 = vld [vmem:[%s432] sm:$0xff]
    %434 = vperm.xlu0 %4, %v433
    %v435 = vpop.permute.xlu0 %434
    %436 = vst [vmem:[%s431] sm:$0xff] %v435
    %s437 = scalar_lea.vmem %s431, 8 [#allocation1]
    %s438 = scalar_lea.vmem %s432, 8 [#allocation0]
    %v439 = vld [vmem:[%s438] sm:$0xff]
    %440 = vperm.xlu0 %4, %v439
    %v441 = vpop.permute.xlu0 %440
    %442 = vst [vmem:[%s437] sm:$0xff] %v441
    %s443 = scalar_lea.vmem [#allocation1], 208
    %s444 = scalar_lea.vmem [#allocation0], 208
    %v445 = vld [vmem:[%s444] sm:$0xff]
    %446 = vperm.xlu0 %4, %v445
    %v447 = vpop.permute.xlu0 %446
    %448 = vst [vmem:[%s443] sm:$0xff] %v447
    %s449 = scalar_lea.vmem %s443, 8 [#allocation1]
    %s450 = scalar_lea.vmem %s444, 8 [#allocation0]
    %v451 = vld [vmem:[%s450] sm:$0xff]
    %452 = vperm.xlu0 %4, %v451
    %v453 = vpop.permute.xlu0 %452
    %454 = vst [vmem:[%s449] sm:$0xff] %v453
    %s455 = scalar_lea.vmem [#allocation1], 224
    %s456 = scalar_lea.vmem [#allocation0], 224
    %v457 = vld [vmem:[%s456] sm:$0xff]
    %458 = vperm.xlu0 %4, %v457
    %v459 = vpop.permute.xlu0 %458
    %460 = vst [vmem:[%s455] sm:$0xff] %v459
    %s461 = scalar_lea.vmem %s455, 8 [#allocation1]
    %s462 = scalar_lea.vmem %s456, 8 [#allocation0]
    %v463 = vld [vmem:[%s462] sm:$0xff]
    %464 = vperm.xlu0 %4, %v463
    %v465 = vpop.permute.xlu0 %464
    %466 = vst [vmem:[%s461] sm:$0xff] %v465
    %s467 = scalar_lea.vmem [#allocation1], 240
    %s468 = scalar_lea.vmem [#allocation0], 240
    %v469 = vld [vmem:[%s468] sm:$0xff]
    %470 = vperm.xlu0 %4, %v469
    %v471 = vpop.permute.xlu0 %470
    %472 = vst [vmem:[%s467] sm:$0xff] %v471
    %s473 = scalar_lea.vmem %s467, 8 [#allocation1]
    %s474 = scalar_lea.vmem %s468, 8 [#allocation0]
    %v475 = vld [vmem:[%s474] sm:$0xff]
    %476 = vperm.xlu0 %4, %v475
    %v477 = vpop.permute.xlu0 %476
    %478 = vst [vmem:[%s473] sm:$0xff] %v477
    %s479 = scalar_lea.vmem [#allocation1], 256
    %s480 = scalar_lea.vmem [#allocation0], 256
    %v481 = vld [vmem:[%s480] sm:$0xff]
    %482 = vperm.xlu0 %4, %v481
    %v483 = vpop.permute.xlu0 %482
    %484 = vst [vmem:[%s479] sm:$0xff] %v483
    %s485 = scalar_lea.vmem %s479, 8 [#allocation1]
    %s486 = scalar_lea.vmem %s480, 8 [#allocation0]
    %v487 = vld [vmem:[%s486] sm:$0xff]
    %488 = vperm.xlu0 %4, %v487
    %v489 = vpop.permute.xlu0 %488
    %490 = vst [vmem:[%s485] sm:$0xff] %v489
    %s491 = scalar_lea.vmem [#allocation1], 272
    %s492 = scalar_lea.vmem [#allocation0], 272
    %v493 = vld [vmem:[%s492] sm:$0xff]
    %494 = vperm.xlu0 %4, %v493
    %v495 = vpop.permute.xlu0 %494
    %496 = vst [vmem:[%s491] sm:$0xff] %v495
    %s497 = scalar_lea.vmem %s491, 8 [#allocation1]
    %s498 = scalar_lea.vmem %s492, 8 [#allocation0]
    %v499 = vld [vmem:[%s498] sm:$0xff]
    %500 = vperm.xlu0 %4, %v499
    %v501 = vpop.permute.xlu0 %500
    %502 = vst [vmem:[%s497] sm:$0xff] %v501
    %s503 = scalar_lea.vmem [#allocation1], 288
    %s504 = scalar_lea.vmem [#allocation0], 288
    %v505 = vld [vmem:[%s504] sm:$0xff]
    %506 = vperm.xlu0 %4, %v505
    %v507 = vpop.permute.xlu0 %506
    %508 = vst [vmem:[%s503] sm:$0xff] %v507
    %s509 = scalar_lea.vmem %s503, 8 [#allocation1]
    %s510 = scalar_lea.vmem %s504, 8 [#allocation0]
    %v511 = vld [vmem:[%s510] sm:$0xff]
    %512 = vperm.xlu0 %4, %v511
    %v513 = vpop.permute.xlu0 %512
    %514 = vst [vmem:[%s509] sm:$0xff] %v513
    %s515 = scalar_lea.vmem [#allocation1], 304
    %s516 = scalar_lea.vmem [#allocation0], 304
    %v517 = vld [vmem:[%s516] sm:$0xff]
    %518 = vperm.xlu0 %4, %v517
    %v519 = vpop.permute.xlu0 %518
    %520 = vst [vmem:[%s515] sm:$0xff] %v519
    %s521 = scalar_lea.vmem %s515, 8 [#allocation1]
    %s522 = scalar_lea.vmem %s516, 8 [#allocation0]
    %v523 = vld [vmem:[%s522] sm:$0xff]
    %524 = vperm.xlu0 %4, %v523
    %v525 = vpop.permute.xlu0 %524
    %526 = vst [vmem:[%s521] sm:$0xff] %v525
    %s527 = scalar_lea.vmem [#allocation1], 320
    %s528 = scalar_lea.vmem [#allocation0], 320
    %v529 = vld [vmem:[%s528] sm:$0xff]
    %530 = vperm.xlu0 %4, %v529
    %v531 = vpop.permute.xlu0 %530
    %532 = vst [vmem:[%s527] sm:$0xff] %v531
    %s533 = scalar_lea.vmem %s527, 8 [#allocation1]
    %s534 = scalar_lea.vmem %s528, 8 [#allocation0]
    %v535 = vld [vmem:[%s534] sm:$0xff]
    %536 = vperm.xlu0 %4, %v535
    %v537 = vpop.permute.xlu0 %536
    %538 = vst [vmem:[%s533] sm:$0xff] %v537
    %s539 = scalar_lea.vmem [#allocation1], 336
    %s540 = scalar_lea.vmem [#allocation0], 336
    %v541 = vld [vmem:[%s540] sm:$0xff]
    %542 = vperm.xlu0 %4, %v541
    %v543 = vpop.permute.xlu0 %542
    %544 = vst [vmem:[%s539] sm:$0xff] %v543
    %s545 = scalar_lea.vmem %s539, 8 [#allocation1]
    %s546 = scalar_lea.vmem %s540, 8 [#allocation0]
    %v547 = vld [vmem:[%s546] sm:$0xff]
    %548 = vperm.xlu0 %4, %v547
    %v549 = vpop.permute.xlu0 %548
    %550 = vst [vmem:[%s545] sm:$0xff] %v549
    %s551 = scalar_lea.vmem [#allocation1], 352
    %s552 = scalar_lea.vmem [#allocation0], 352
    %v553 = vld [vmem:[%s552] sm:$0xff]
    %554 = vperm.xlu0 %4, %v553
    %v555 = vpop.permute.xlu0 %554
    %556 = vst [vmem:[%s551] sm:$0xff] %v555
    %s557 = scalar_lea.vmem %s551, 8 [#allocation1]
    %s558 = scalar_lea.vmem %s552, 8 [#allocation0]
    %v559 = vld [vmem:[%s558] sm:$0xff]
    %560 = vperm.xlu0 %4, %v559
    %v561 = vpop.permute.xlu0 %560
    %562 = vst [vmem:[%s557] sm:$0xff] %v561
    %s563 = scalar_lea.vmem [#allocation1], 368
    %s564 = scalar_lea.vmem [#allocation0], 368
    %v565 = vld [vmem:[%s564] sm:$0xff]
    %566 = vperm.xlu0 %4, %v565
    %v567 = vpop.permute.xlu0 %566
    %568 = vst [vmem:[%s563] sm:$0xff] %v567
    %s569 = scalar_lea.vmem %s563, 8 [#allocation1]
    %s570 = scalar_lea.vmem %s564, 8 [#allocation0]
    %v571 = vld [vmem:[%s570] sm:$0xff]
    %572 = vperm.xlu0 %4, %v571
    %v573 = vpop.permute.xlu0 %572
    %574 = vst [vmem:[%s569] sm:$0xff] %v573
    %s575 = scalar_lea.vmem [#allocation1], 384
    %s576 = scalar_lea.vmem [#allocation0], 384
    %v577 = vld [vmem:[%s576] sm:$0xff]
    %578 = vperm.xlu0 %4, %v577
    %v579 = vpop.permute.xlu0 %578
    %580 = vst [vmem:[%s575] sm:$0xff] %v579
    %s581 = scalar_lea.vmem %s575, 8 [#allocation1]
    %s582 = scalar_lea.vmem %s576, 8 [#allocation0]
    %v583 = vld [vmem:[%s582] sm:$0xff]
    %584 = vperm.xlu0 %4, %v583
    %v585 = vpop.permute.xlu0 %584
    %586 = vst [vmem:[%s581] sm:$0xff] %v585
    %s587 = scalar_lea.vmem [#allocation1], 400
    %s588 = scalar_lea.vmem [#allocation0], 400
    %v589 = vld [vmem:[%s588] sm:$0xff]
    %590 = vperm.xlu0 %4, %v589
    %v591 = vpop.permute.xlu0 %590
    %592 = vst [vmem:[%s587] sm:$0xff] %v591
    %s593 = scalar_lea.vmem %s587, 8 [#allocation1]
    %s594 = scalar_lea.vmem %s588, 8 [#allocation0]
    %v595 = vld [vmem:[%s594] sm:$0xff]
    %596 = vperm.xlu0 %4, %v595
    %v597 = vpop.permute.xlu0 %596
    %598 = vst [vmem:[%s593] sm:$0xff] %v597
    %s599 = scalar_lea.vmem [#allocation1], 416
    %s600 = scalar_lea.vmem [#allocation0], 416
    %v601 = vld [vmem:[%s600] sm:$0xff]
    %602 = vperm.xlu0 %4, %v601
    %v603 = vpop.permute.xlu0 %602
    %604 = vst [vmem:[%s599] sm:$0xff] %v603
    %s605 = scalar_lea.vmem %s599, 8 [#allocation1]
    %s606 = scalar_lea.vmem %s600, 8 [#allocation0]
    %v607 = vld [vmem:[%s606] sm:$0xff]
    %608 = vperm.xlu0 %4, %v607
    %v609 = vpop.permute.xlu0 %608
    %610 = vst [vmem:[%s605] sm:$0xff] %v609
    %s611 = scalar_lea.vmem [#allocation1], 432
    %s612 = scalar_lea.vmem [#allocation0], 432
    %v613 = vld [vmem:[%s612] sm:$0xff]
    %614 = vperm.xlu0 %4, %v613
    %v615 = vpop.permute.xlu0 %614
    %616 = vst [vmem:[%s611] sm:$0xff] %v615
    %s617 = scalar_lea.vmem %s611, 8 [#allocation1]
    %s618 = scalar_lea.vmem %s612, 8 [#allocation0]
    %v619 = vld [vmem:[%s618] sm:$0xff]
    %620 = vperm.xlu0 %4, %v619
    %v621 = vpop.permute.xlu0 %620
    %622 = vst [vmem:[%s617] sm:$0xff] %v621
    %s623 = scalar_lea.vmem [#allocation1], 448
    %s624 = scalar_lea.vmem [#allocation0], 448
    %v625 = vld [vmem:[%s624] sm:$0xff]
    %626 = vperm.xlu0 %4, %v625
    %v627 = vpop.permute.xlu0 %626
    %628 = vst [vmem:[%s623] sm:$0xff] %v627
    %s629 = scalar_lea.vmem %s623, 8 [#allocation1]
    %s630 = scalar_lea.vmem %s624, 8 [#allocation0]
    %v631 = vld [vmem:[%s630] sm:$0xff]
    %632 = vperm.xlu0 %4, %v631
    %v633 = vpop.permute.xlu0 %632
    %634 = vst [vmem:[%s629] sm:$0xff] %v633
    %s635 = scalar_lea.vmem [#allocation1], 464
    %s636 = scalar_lea.vmem [#allocation0], 464
    %v637 = vld [vmem:[%s636] sm:$0xff]
    %638 = vperm.xlu0 %4, %v637
    %v639 = vpop.permute.xlu0 %638
    %640 = vst [vmem:[%s635] sm:$0xff] %v639
    %s641 = scalar_lea.vmem %s635, 8 [#allocation1]
    %s642 = scalar_lea.vmem %s636, 8 [#allocation0]
    %v643 = vld [vmem:[%s642] sm:$0xff]
    %644 = vperm.xlu0 %4, %v643
    %v645 = vpop.permute.xlu0 %644
    %646 = vst [vmem:[%s641] sm:$0xff] %v645
    %s647 = scalar_lea.vmem [#allocation1], 480
    %s648 = scalar_lea.vmem [#allocation0], 480
    %v649 = vld [vmem:[%s648] sm:$0xff]
    %650 = vperm.xlu0 %4, %v649
    %v651 = vpop.permute.xlu0 %650
    %652 = vst [vmem:[%s647] sm:$0xff] %v651
    %s653 = scalar_lea.vmem %s647, 8 [#allocation1]
    %s654 = scalar_lea.vmem %s648, 8 [#allocation0]
    %v655 = vld [vmem:[%s654] sm:$0xff]
    %656 = vperm.xlu0 %4, %v655
    %v657 = vpop.permute.xlu0 %656
    %658 = vst [vmem:[%s653] sm:$0xff] %v657
    %s659 = scalar_lea.vmem [#allocation1], 496
    %s660 = scalar_lea.vmem [#allocation0], 496
    %v661 = vld [vmem:[%s660] sm:$0xff]
    %662 = vperm.xlu0 %4, %v661
    %v663 = vpop.permute.xlu0 %662
    %664 = vst [vmem:[%s659] sm:$0xff] %v663
    %s665 = scalar_lea.vmem %s659, 8 [#allocation1]
    %s666 = scalar_lea.vmem %s660, 8 [#allocation0]
    %v667 = vld [vmem:[%s666] sm:$0xff]
    %668 = vperm.xlu0 %4, %v667
    %v669 = vpop.permute.xlu0 %668
    %670 = vst [vmem:[%s665] sm:$0xff] %v669
    // Predicated region
    $region36: #{reverse.0} parent=1 // pred_check
      _
    $region37: #{reverse.0} parent=1 // pred_check_branch
      %672 = sbr.rel (0) target = $region39
    $region38: #{reverse.0} parent=1 // pred_region
      // Predicated region
      $region40: #{reverse.0} parent=38 // pred_check
        _
      $region41: #{reverse.0} parent=38 // pred_check_branch
        %674 = sbr.rel (0) target = $region43
      $region42: #{reverse.0} parent=38 // pred_region
        // Predicated region
        $region55: #{reverse.0} parent=42 // pred_check
          _
        $region56: #{reverse.0} parent=42 // pred_check_branch
          %815 = sbr.rel (0) target = $region58
        $region57: #{reverse.0} parent=42 // pred_region
          loop: start=0, step=1, limit=1
          $region59: #{reverse.0} parent=57 // loop_pre_header
            _
          $region60: #{reverse.0} parent=57 // loop_header
            %s817 = sphi 0, %s821
            %p818 = scmp.ge.s32.totalorder %s817, 1
            %s822 = sphi [#allocation1], [#allocation1]
            %s823 = sphi %s1, %s1
          $region61: #{reverse.0} parent=57 // loop_header_branch
            %820 = sbr.rel (%p818) target = $region65
          $region62: #{reverse.0} parent=57 // loop_body
            %v824 = vld [vmem:[%s822] sm:$0xff]
            %825 = vst [vmem:[%s823] sm:$0xff] %v824
            %v826 = vld [vmem:[%s822 + $0x8] sm:$0xff]
            %827 = vst [vmem:[%s823 + $0x8] sm:$0xff] %v826
            %v828 = vld [vmem:[%s822 + $0x10] sm:$0xff]
            %829 = vst [vmem:[%s823 + $0x10] sm:$0xff] %v828
            %v830 = vld [vmem:[%s822 + $0x18] sm:$0xff]
            %831 = vst [vmem:[%s823 + $0x18] sm:$0xff] %v830
            %v832 = vld [vmem:[%s822 + $0x20] sm:$0xff]
            %833 = vst [vmem:[%s823 + $0x20] sm:$0xff] %v832
            %v834 = vld [vmem:[%s822 + $0x28] sm:$0xff]
            %835 = vst [vmem:[%s823 + $0x28] sm:$0xff] %v834
            %v836 = vld [vmem:[%s822 + $0x30] sm:$0xff]
            %837 = vst [vmem:[%s823 + $0x30] sm:$0xff] %v836
            %v838 = vld [vmem:[%s822 + $0x38] sm:$0xff]
            %839 = vst [vmem:[%s823 + $0x38] sm:$0xff] %v838
            %v840 = vld [vmem:[%s822 + $0x40] sm:$0xff]
            %841 = vst [vmem:[%s823 + $0x40] sm:$0xff] %v840
            %v842 = vld [vmem:[%s822 + $0x48] sm:$0xff]
            %843 = vst [vmem:[%s823 + $0x48] sm:$0xff] %v842
            %v844 = vld [vmem:[%s822 + $0x50] sm:$0xff]
            %845 = vst [vmem:[%s823 + $0x50] sm:$0xff] %v844
            %v846 = vld [vmem:[%s822 + $0x58] sm:$0xff]
            %847 = vst [vmem:[%s823 + $0x58] sm:$0xff] %v846
            %v848 = vld [vmem:[%s822 + $0x60] sm:$0xff]
            %849 = vst [vmem:[%s823 + $0x60] sm:$0xff] %v848
            %v850 = vld [vmem:[%s822 + $0x68] sm:$0xff]
            %851 = vst [vmem:[%s823 + $0x68] sm:$0xff] %v850
            %v852 = vld [vmem:[%s822 + $0x70] sm:$0xff]
            %853 = vst [vmem:[%s823 + $0x70] sm:$0xff] %v852
            %v854 = vld [vmem:[%s822 + $0x78] sm:$0xff]
            %855 = vst [vmem:[%s823 + $0x78] sm:$0xff] %v854
            %v856 = vld [vmem:[%s822 + $0x80] sm:$0xff]
            %857 = vst [vmem:[%s823 + $0x80] sm:$0xff] %v856
            %v858 = vld [vmem:[%s822 + $0x88] sm:$0xff]
            %859 = vst [vmem:[%s823 + $0x88] sm:$0xff] %v858
            %v860 = vld [vmem:[%s822 + $0x90] sm:$0xff]
            %861 = vst [vmem:[%s823 + $0x90] sm:$0xff] %v860
            %v862 = vld [vmem:[%s822 + $0x98] sm:$0xff]
            %863 = vst [vmem:[%s823 + $0x98] sm:$0xff] %v862
            %v864 = vld [vmem:[%s822 + $0xa0] sm:$0xff]
            %865 = vst [vmem:[%s823 + $0xa0] sm:$0xff] %v864
            %v866 = vld [vmem:[%s822 + $0xa8] sm:$0xff]
            %867 = vst [vmem:[%s823 + $0xa8] sm:$0xff] %v866
            %v868 = vld [vmem:[%s822 + $0xb0] sm:$0xff]
            %869 = vst [vmem:[%s823 + $0xb0] sm:$0xff] %v868
            %v870 = vld [vmem:[%s822 + $0xb8] sm:$0xff]
            %871 = vst [vmem:[%s823 + $0xb8] sm:$0xff] %v870
            %v872 = vld [vmem:[%s822 + $0xc0] sm:$0xff]
            %873 = vst [vmem:[%s823 + $0xc0] sm:$0xff] %v872
            %v874 = vld [vmem:[%s822 + $0xc8] sm:$0xff]
            %875 = vst [vmem:[%s823 + $0xc8] sm:$0xff] %v874
            %v876 = vld [vmem:[%s822 + $0xd0] sm:$0xff]
            %877 = vst [vmem:[%s823 + $0xd0] sm:$0xff] %v876
            %v878 = vld [vmem:[%s822 + $0xd8] sm:$0xff]
            %879 = vst [vmem:[%s823 + $0xd8] sm:$0xff] %v878
            %v880 = vld [vmem:[%s822 + $0xe0] sm:$0xff]
            %881 = vst [vmem:[%s823 + $0xe0] sm:$0xff] %v880
            %v882 = vld [vmem:[%s822 + $0xe8] sm:$0xff]
            %883 = vst [vmem:[%s823 + $0xe8] sm:$0xff] %v882
            %v884 = vld [vmem:[%s822 + $0xf0] sm:$0xff]
            %885 = vst [vmem:[%s823 + $0xf0] sm:$0xff] %v884
            %v886 = vld [vmem:[%s822 + $0xf8] sm:$0xff]
            %887 = vst [vmem:[%s823 + $0xf8] sm:$0xff] %v886
            %v888 = vld [vmem:[%s822 + $0x100] sm:$0xff]
            %889 = vst [vmem:[%s823 + $0x100] sm:$0xff] %v888
            %v890 = vld [vmem:[%s822 + $0x108] sm:$0xff]
            %891 = vst [vmem:[%s823 + $0x108] sm:$0xff] %v890
            %v892 = vld [vmem:[%s822 + $0x110] sm:$0xff]
            %893 = vst [vmem:[%s823 + $0x110] sm:$0xff] %v892
            %v894 = vld [vmem:[%s822 + $0x118] sm:$0xff]
            %895 = vst [vmem:[%s823 + $0x118] sm:$0xff] %v894
            %v896 = vld [vmem:[%s822 + $0x120] sm:$0xff]
            %897 = vst [vmem:[%s823 + $0x120] sm:$0xff] %v896
            %v898 = vld [vmem:[%s822 + $0x128] sm:$0xff]
            %899 = vst [vmem:[%s823 + $0x128] sm:$0xff] %v898
            %v900 = vld [vmem:[%s822 + $0x130] sm:$0xff]
            %901 = vst [vmem:[%s823 + $0x130] sm:$0xff] %v900
            %v902 = vld [vmem:[%s822 + $0x138] sm:$0xff]
            %903 = vst [vmem:[%s823 + $0x138] sm:$0xff] %v902
            %v904 = vld [vmem:[%s822 + $0x140] sm:$0xff]
            %905 = vst [vmem:[%s823 + $0x140] sm:$0xff] %v904
            %v906 = vld [vmem:[%s822 + $0x148] sm:$0xff]
            %907 = vst [vmem:[%s823 + $0x148] sm:$0xff] %v906
            %v908 = vld [vmem:[%s822 + $0x150] sm:$0xff]
            %909 = vst [vmem:[%s823 + $0x150] sm:$0xff] %v908
            %v910 = vld [vmem:[%s822 + $0x158] sm:$0xff]
            %911 = vst [vmem:[%s823 + $0x158] sm:$0xff] %v910
            %v912 = vld [vmem:[%s822 + $0x160] sm:$0xff]
            %913 = vst [vmem:[%s823 + $0x160] sm:$0xff] %v912
            %v914 = vld [vmem:[%s822 + $0x168] sm:$0xff]
            %915 = vst [vmem:[%s823 + $0x168] sm:$0xff] %v914
            %v916 = vld [vmem:[%s822 + $0x170] sm:$0xff]
            %917 = vst [vmem:[%s823 + $0x170] sm:$0xff] %v916
            %v918 = vld [vmem:[%s822 + $0x178] sm:$0xff]
            %919 = vst [vmem:[%s823 + $0x178] sm:$0xff] %v918
            %v920 = vld [vmem:[%s822 + $0x180] sm:$0xff]
            %921 = vst [vmem:[%s823 + $0x180] sm:$0xff] %v920
            %v922 = vld [vmem:[%s822 + $0x188] sm:$0xff]
            %923 = vst [vmem:[%s823 + $0x188] sm:$0xff] %v922
            %v924 = vld [vmem:[%s822 + $0x190] sm:$0xff]
            %925 = vst [vmem:[%s823 + $0x190] sm:$0xff] %v924
            %v926 = vld [vmem:[%s822 + $0x198] sm:$0xff]
            %927 = vst [vmem:[%s823 + $0x198] sm:$0xff] %v926
            %v928 = vld [vmem:[%s822 + $0x1a0] sm:$0xff]
            %929 = vst [vmem:[%s823 + $0x1a0] sm:$0xff] %v928
            %v930 = vld [vmem:[%s822 + $0x1a8] sm:$0xff]
            %931 = vst [vmem:[%s823 + $0x1a8] sm:$0xff] %v930
            %v932 = vld [vmem:[%s822 + $0x1b0] sm:$0xff]
            %933 = vst [vmem:[%s823 + $0x1b0] sm:$0xff] %v932
            %v934 = vld [vmem:[%s822 + $0x1b8] sm:$0xff]
            %935 = vst [vmem:[%s823 + $0x1b8] sm:$0xff] %v934
            %v936 = vld [vmem:[%s822 + $0x1c0] sm:$0xff]
            %937 = vst [vmem:[%s823 + $0x1c0] sm:$0xff] %v936
            %v938 = vld [vmem:[%s822 + $0x1c8] sm:$0xff]
            %939 = vst [vmem:[%s823 + $0x1c8] sm:$0xff] %v938
            %v940 = vld [vmem:[%s822 + $0x1d0] sm:$0xff]
            %941 = vst [vmem:[%s823 + $0x1d0] sm:$0xff] %v940
            %v942 = vld [vmem:[%s822 + $0x1d8] sm:$0xff]
            %943 = vst [vmem:[%s823 + $0x1d8] sm:$0xff] %v942
            %v944 = vld [vmem:[%s822 + $0x1e0] sm:$0xff]
            %945 = vst [vmem:[%s823 + $0x1e0] sm:$0xff] %v944
            %v946 = vld [vmem:[%s822 + $0x1e8] sm:$0xff]
            %947 = vst [vmem:[%s823 + $0x1e8] sm:$0xff] %v946
            %v948 = vld [vmem:[%s822 + $0x1f0] sm:$0xff]
            %949 = vst [vmem:[%s823 + $0x1f0] sm:$0xff] %v948
            %v950 = vld [vmem:[%s822 + $0x1f8] sm:$0xff]
            %951 = vst [vmem:[%s823 + $0x1f8] sm:$0xff] %v950
          $region63: #{reverse.0} parent=57 // loop_footer
            %s821 = sadd.s32 1, %s817
          $region64: #{reverse.0} parent=57 // loop_footer_branch
            %816 = sbr.rel target = $region60
          $region65: #{reverse.0} parent=57 // loop_exit
            _
        $region58: #{reverse.0} parent=42 // pred_fallthru
          _
        // Predicated region
        $region66: #{reverse.0} parent=42 // pred_check
          _
        $region67: #{reverse.0} parent=42 // pred_check_branch
          %953 = sbr.rel target = $region69
        $region68: #{reverse.0} parent=42 // pred_region
          _
        $region69: #{reverse.0} parent=42 // pred_fallthru
          _
      $region43: #{reverse.0} parent=38 // pred_fallthru
        _
      // Predicated region
      $region44: #{reverse.0} parent=38 // pred_check
        _
      $region45: #{reverse.0} parent=38 // pred_check_branch
        %676 = sbr.rel target = $region47
      $region46: #{reverse.0} parent=38 // pred_region
        loop: start=0, step=1, limit=1
        $region48: #{reverse.0} parent=46 // loop_pre_header
          _
        $region49: #{reverse.0} parent=46 // loop_header
          %s679 = sphi 0, %s683
          %p680 = scmp.ge.s32.totalorder %s679, 1
          %s684 = sphi [#allocation1], [#allocation1]
          %s685 = sphi %s1, %s1
        $region50: #{reverse.0} parent=46 // loop_header_branch
          %682 = sbr.rel (%p680) target = $region54
        $region51: #{reverse.0} parent=46 // loop_body
          %v686 = vld [vmem:[%s684] sm:$0xff]
          %687 = vst [vmem:[%s685] sm:$0xff] %v686
          %v688 = vld [vmem:[%s684 + $0x8] sm:$0xff]
          %689 = vst [vmem:[%s685 + $0x8] sm:$0xff] %v688
          %v690 = vld [vmem:[%s684 + $0x10] sm:$0xff]
          %691 = vst [vmem:[%s685 + $0x10] sm:$0xff] %v690
          %v692 = vld [vmem:[%s684 + $0x18] sm:$0xff]
          %693 = vst [vmem:[%s685 + $0x18] sm:$0xff] %v692
          %v694 = vld [vmem:[%s684 + $0x20] sm:$0xff]
          %695 = vst [vmem:[%s685 + $0x20] sm:$0xff] %v694
          %v696 = vld [vmem:[%s684 + $0x28] sm:$0xff]
          %697 = vst [vmem:[%s685 + $0x28] sm:$0xff] %v696
          %v698 = vld [vmem:[%s684 + $0x30] sm:$0xff]
          %699 = vst [vmem:[%s685 + $0x30] sm:$0xff] %v698
          %v700 = vld [vmem:[%s684 + $0x38] sm:$0xff]
          %701 = vst [vmem:[%s685 + $0x38] sm:$0xff] %v700
          %v702 = vld [vmem:[%s684 + $0x40] sm:$0xff]
          %703 = vst [vmem:[%s685 + $0x40] sm:$0xff] %v702
          %v704 = vld [vmem:[%s684 + $0x48] sm:$0xff]
          %705 = vst [vmem:[%s685 + $0x48] sm:$0xff] %v704
          %v706 = vld [vmem:[%s684 + $0x50] sm:$0xff]
          %707 = vst [vmem:[%s685 + $0x50] sm:$0xff] %v706
          %v708 = vld [vmem:[%s684 + $0x58] sm:$0xff]
          %709 = vst [vmem:[%s685 + $0x58] sm:$0xff] %v708
          %v710 = vld [vmem:[%s684 + $0x60] sm:$0xff]
          %711 = vst [vmem:[%s685 + $0x60] sm:$0xff] %v710
          %v712 = vld [vmem:[%s684 + $0x68] sm:$0xff]
          %713 = vst [vmem:[%s685 + $0x68] sm:$0xff] %v712
          %v714 = vld [vmem:[%s684 + $0x70] sm:$0xff]
          %715 = vst [vmem:[%s685 + $0x70] sm:$0xff] %v714
          %v716 = vld [vmem:[%s684 + $0x78] sm:$0xff]
          %717 = vst [vmem:[%s685 + $0x78] sm:$0xff] %v716
          %v718 = vld [vmem:[%s684 + $0x80] sm:$0xff]
          %719 = vst [vmem:[%s685 + $0x80] sm:$0xff] %v718
          %v720 = vld [vmem:[%s684 + $0x88] sm:$0xff]
          %721 = vst [vmem:[%s685 + $0x88] sm:$0xff] %v720
          %v722 = vld [vmem:[%s684 + $0x90] sm:$0xff]
          %723 = vst [vmem:[%s685 + $0x90] sm:$0xff] %v722
          %v724 = vld [vmem:[%s684 + $0x98] sm:$0xff]
          %725 = vst [vmem:[%s685 + $0x98] sm:$0xff] %v724
          %v726 = vld [vmem:[%s684 + $0xa0] sm:$0xff]
          %727 = vst [vmem:[%s685 + $0xa0] sm:$0xff] %v726
          %v728 = vld [vmem:[%s684 + $0xa8] sm:$0xff]
          %729 = vst [vmem:[%s685 + $0xa8] sm:$0xff] %v728
          %v730 = vld [vmem:[%s684 + $0xb0] sm:$0xff]
          %731 = vst [vmem:[%s685 + $0xb0] sm:$0xff] %v730
          %v732 = vld [vmem:[%s684 + $0xb8] sm:$0xff]
          %733 = vst [vmem:[%s685 + $0xb8] sm:$0xff] %v732
          %v734 = vld [vmem:[%s684 + $0xc0] sm:$0xff]
          %735 = vst [vmem:[%s685 + $0xc0] sm:$0xff] %v734
          %v736 = vld [vmem:[%s684 + $0xc8] sm:$0xff]
          %737 = vst [vmem:[%s685 + $0xc8] sm:$0xff] %v736
          %v738 = vld [vmem:[%s684 + $0xd0] sm:$0xff]
          %739 = vst [vmem:[%s685 + $0xd0] sm:$0xff] %v738
          %v740 = vld [vmem:[%s684 + $0xd8] sm:$0xff]
          %741 = vst [vmem:[%s685 + $0xd8] sm:$0xff] %v740
          %v742 = vld [vmem:[%s684 + $0xe0] sm:$0xff]
          %743 = vst [vmem:[%s685 + $0xe0] sm:$0xff] %v742
          %v744 = vld [vmem:[%s684 + $0xe8] sm:$0xff]
          %745 = vst [vmem:[%s685 + $0xe8] sm:$0xff] %v744
          %v746 = vld [vmem:[%s684 + $0xf0] sm:$0xff]
          %747 = vst [vmem:[%s685 + $0xf0] sm:$0xff] %v746
          %v748 = vld [vmem:[%s684 + $0xf8] sm:$0xff]
          %749 = vst [vmem:[%s685 + $0xf8] sm:$0xff] %v748
          %v750 = vld [vmem:[%s684 + $0x100] sm:$0xff]
          %751 = vst [vmem:[%s685 + $0x100] sm:$0xff] %v750
          %v752 = vld [vmem:[%s684 + $0x108] sm:$0xff]
          %753 = vst [vmem:[%s685 + $0x108] sm:$0xff] %v752
          %v754 = vld [vmem:[%s684 + $0x110] sm:$0xff]
          %755 = vst [vmem:[%s685 + $0x110] sm:$0xff] %v754
          %v756 = vld [vmem:[%s684 + $0x118] sm:$0xff]
          %757 = vst [vmem:[%s685 + $0x118] sm:$0xff] %v756
          %v758 = vld [vmem:[%s684 + $0x120] sm:$0xff]
          %759 = vst [vmem:[%s685 + $0x120] sm:$0xff] %v758
          %v760 = vld [vmem:[%s684 + $0x128] sm:$0xff]
          %761 = vst [vmem:[%s685 + $0x128] sm:$0xff] %v760
          %v762 = vld [vmem:[%s684 + $0x130] sm:$0xff]
          %763 = vst [vmem:[%s685 + $0x130] sm:$0xff] %v762
          %v764 = vld [vmem:[%s684 + $0x138] sm:$0xff]
          %765 = vst [vmem:[%s685 + $0x138] sm:$0xff] %v764
          %v766 = vld [vmem:[%s684 + $0x140] sm:$0xff]
          %767 = vst [vmem:[%s685 + $0x140] sm:$0xff] %v766
          %v768 = vld [vmem:[%s684 + $0x148] sm:$0xff]
          %769 = vst [vmem:[%s685 + $0x148] sm:$0xff] %v768
          %v770 = vld [vmem:[%s684 + $0x150] sm:$0xff]
          %771 = vst [vmem:[%s685 + $0x150] sm:$0xff] %v770
          %v772 = vld [vmem:[%s684 + $0x158] sm:$0xff]
          %773 = vst [vmem:[%s685 + $0x158] sm:$0xff] %v772
          %v774 = vld [vmem:[%s684 + $0x160] sm:$0xff]
          %775 = vst [vmem:[%s685 + $0x160] sm:$0xff] %v774
          %v776 = vld [vmem:[%s684 + $0x168] sm:$0xff]
          %777 = vst [vmem:[%s685 + $0x168] sm:$0xff] %v776
          %v778 = vld [vmem:[%s684 + $0x170] sm:$0xff]
          %779 = vst [vmem:[%s685 + $0x170] sm:$0xff] %v778
          %v780 = vld [vmem:[%s684 + $0x178] sm:$0xff]
          %781 = vst [vmem:[%s685 + $0x178] sm:$0xff] %v780
          %v782 = vld [vmem:[%s684 + $0x180] sm:$0xff]
          %783 = vst [vmem:[%s685 + $0x180] sm:$0xff] %v782
          %v784 = vld [vmem:[%s684 + $0x188] sm:$0xff]
          %785 = vst [vmem:[%s685 + $0x188] sm:$0xff] %v784
          %v786 = vld [vmem:[%s684 + $0x190] sm:$0xff]
          %787 = vst [vmem:[%s685 + $0x190] sm:$0xff] %v786
          %v788 = vld [vmem:[%s684 + $0x198] sm:$0xff]
          %789 = vst [vmem:[%s685 + $0x198] sm:$0xff] %v788
          %v790 = vld [vmem:[%s684 + $0x1a0] sm:$0xff]
          %791 = vst [vmem:[%s685 + $0x1a0] sm:$0xff] %v790
          %v792 = vld [vmem:[%s684 + $0x1a8] sm:$0xff]
          %793 = vst [vmem:[%s685 + $0x1a8] sm:$0xff] %v792
          %v794 = vld [vmem:[%s684 + $0x1b0] sm:$0xff]
          %795 = vst [vmem:[%s685 + $0x1b0] sm:$0xff] %v794
          %v796 = vld [vmem:[%s684 + $0x1b8] sm:$0xff]
          %797 = vst [vmem:[%s685 + $0x1b8] sm:$0xff] %v796
          %v798 = vld [vmem:[%s684 + $0x1c0] sm:$0xff]
          %799 = vst [vmem:[%s685 + $0x1c0] sm:$0xff] %v798
          %v800 = vld [vmem:[%s684 + $0x1c8] sm:$0xff]
          %801 = vst [vmem:[%s685 + $0x1c8] sm:$0xff] %v800
          %v802 = vld [vmem:[%s684 + $0x1d0] sm:$0xff]
          %803 = vst [vmem:[%s685 + $0x1d0] sm:$0xff] %v802
          %v804 = vld [vmem:[%s684 + $0x1d8] sm:$0xff]
          %805 = vst [vmem:[%s685 + $0x1d8] sm:$0xff] %v804
          %v806 = vld [vmem:[%s684 + $0x1e0] sm:$0xff]
          %807 = vst [vmem:[%s685 + $0x1e0] sm:$0xff] %v806
          %v808 = vld [vmem:[%s684 + $0x1e8] sm:$0xff]
          %809 = vst [vmem:[%s685 + $0x1e8] sm:$0xff] %v808
          %v810 = vld [vmem:[%s684 + $0x1f0] sm:$0xff]
          %811 = vst [vmem:[%s685 + $0x1f0] sm:$0xff] %v810
          %v812 = vld [vmem:[%s684 + $0x1f8] sm:$0xff]
          %813 = vst [vmem:[%s685 + $0x1f8] sm:$0xff] %v812
        $region52: #{reverse.0} parent=46 // loop_footer
          %s683 = sadd.s32 1, %s679
        $region53: #{reverse.0} parent=46 // loop_footer_branch
          %678 = sbr.rel target = $region49
        $region54: #{reverse.0} parent=46 // loop_exit
          _
      $region47: #{reverse.0} parent=38 // pred_fallthru
        _
    $region39: #{reverse.0} parent=1 // pred_fallthru
      _
    %954 = vnop

// kernel: neural_operator_block.2
$region0: #{neural_operator_block.2}
  #allocation0 [shape = 'u32[]', space=smem, size = 0x4, offset = 0x4, fixed_abs, tag = 'smem constant byte address 0x4 - core index']
  #allocation1 [shape = 'u32[144,128]{1,0:T(1,128)}', space=vmem, size = 0x12000, scoped, tag = 'internal scratch']
  %s0 = inlined_call_operand.vmem [shape: f32[16,4,256], index: 0, kind: input, shape index: {}]
  %s1 = inlined_call_operand.vmem [shape: bf16[16,256,256], index: 1, kind: input, shape index: {}]
  %s2 = inlined_call_operand.vmem [shape: f32[16,4,256], index: 2, kind: output, shape index: {}]
  %s3 = sld [smem:[#allocation0]]
  $region18: #{neural_operator_block.2} parent=0
    _
  %s5 = ssub.s32 1, %s3
  %s6 = scalar_select 0, %s5, %s3
  // Predicated region
  $region2: #{neural_operator_block.2} parent=0 // pred_check
    _
  $region3: #{neural_operator_block.2} parent=0 // pred_check_branch
    %8 = sbr.rel (0) target = $region5
  $region4: #{neural_operator_block.2} parent=0 // pred_region
    _
  $region5: #{neural_operator_block.2} parent=0 // pred_fallthru
    _
  // Predicated region
  $region6: #{neural_operator_block.2} parent=0 // pred_check
    _
  $region7: #{neural_operator_block.2} parent=0 // pred_check_branch
    %10 = sbr.rel (0) target = $region9
  $region8: #{neural_operator_block.2} parent=0 // pred_region
    _
  $region9: #{neural_operator_block.2} parent=0 // pred_fallthru
    _
  %v11 = vld [vmem:[%s0] sm:$0xff]
  %v12 = vld [vmem:[%s0 + $0x8] sm:$0xff]
  %v13 = vld [vmem:[%s0 + $0x10] sm:$0xff]
  %v14 = vld [vmem:[%s0 + $0x18] sm:$0xff]
  %v15 = vld [vmem:[%s0 + $0x20] sm:$0xff]
  %v16 = vld [vmem:[%s0 + $0x28] sm:$0xff]
  %v17 = vld [vmem:[%s0 + $0x30] sm:$0xff]
  %v18 = vld [vmem:[%s0 + $0x38] sm:$0xff]
  %v19 = vld [vmem:[%s0 + $0x40] sm:$0xff]
  %v20 = vld [vmem:[%s0 + $0x48] sm:$0xff]
  %v21 = vld [vmem:[%s0 + $0x50] sm:$0xff]
  %v22 = vld [vmem:[%s0 + $0x58] sm:$0xff]
  %v23 = vld [vmem:[%s0 + $0x60] sm:$0xff]
  %v24 = vld [vmem:[%s0 + $0x68] sm:$0xff]
  %v25 = vld [vmem:[%s0 + $0x70] sm:$0xff]
  %v26 = vld [vmem:[%s0 + $0x78] sm:$0xff]
  %v43 = vcombine.high %v11, %v11
  %v44 = vcombine.high %v12, %v12
  %v45 = vcombine.high %v13, %v13
  %v46 = vcombine.high %v14, %v14
  %v47 = vcombine.high %v15, %v15
  %v48 = vcombine.high %v16, %v16
  %v49 = vcombine.high %v17, %v17
  %v50 = vcombine.high %v18, %v18
  %v51 = vcombine.high %v19, %v19
  %v52 = vcombine.high %v20, %v20
  %v53 = vcombine.high %v21, %v21
  %v54 = vcombine.high %v22, %v22
  %v55 = vcombine.high %v23, %v23
  %v56 = vcombine.high %v24, %v24
  %v57 = vcombine.high %v25, %v25
  %v58 = vcombine.high %v26, %v26
  %v75 = vpack.c.bf16 %v11, %v11
  %v76 = vpack.c.bf16 %v43, %v43
  %v77 = vpack.c.bf16 %v12, %v12
  %v78 = vpack.c.bf16 %v44, %v44
  %v79 = vpack.c.bf16 %v13, %v13
  %v80 = vpack.c.bf16 %v45, %v45
  %v81 = vpack.c.bf16 %v14, %v14
  %v82 = vpack.c.bf16 %v46, %v46
  %v83 = vpack.c.bf16 %v15, %v15
  %v84 = vpack.c.bf16 %v47, %v47
  %v85 = vpack.c.bf16 %v16, %v16
  %v86 = vpack.c.bf16 %v48, %v48
  %v87 = vpack.c.bf16 %v17, %v17
  %v88 = vpack.c.bf16 %v49, %v49
  %v89 = vpack.c.bf16 %v18, %v18
  %v90 = vpack.c.bf16 %v50, %v50
  %v91 = vpack.c.bf16 %v19, %v19
  %v92 = vpack.c.bf16 %v51, %v51
  %v93 = vpack.c.bf16 %v20, %v20
  %v94 = vpack.c.bf16 %v52, %v52
  %v95 = vpack.c.bf16 %v21, %v21
  %v96 = vpack.c.bf16 %v53, %v53
  %v97 = vpack.c.bf16 %v22, %v22
  %v98 = vpack.c.bf16 %v54, %v54
  %v99 = vpack.c.bf16 %v23, %v23
  %v100 = vpack.c.bf16 %v55, %v55
  %v101 = vpack.c.bf16 %v24, %v24
  %v102 = vpack.c.bf16 %v56, %v56
  %v103 = vpack.c.bf16 %v25, %v25
  %v104 = vpack.c.bf16 %v57, %v57
  %v105 = vpack.c.bf16 %v26, %v26
  %v106 = vpack.c.bf16 %v58, %v58
  %v107 = vld [vmem:[%s1] sm:$0xff]
  %v108 = vld [vmem:[%s1 + $0x8] sm:$0xff]
  %v109 = vld [vmem:[%s1 + $0x10] sm:$0xff]
  %v110 = vld [vmem:[%s1 + $0x18] sm:$0xff]
  %v111 = vld [vmem:[%s1 + $0x20] sm:$0xff]
  %v112 = vld [vmem:[%s1 + $0x28] sm:$0xff]
  %v113 = vld [vmem:[%s1 + $0x30] sm:$0xff]
  %v114 = vld [vmem:[%s1 + $0x38] sm:$0xff]
  %v115 = vld [vmem:[%s1 + $0x40] sm:$0xff]
  %v116 = vld [vmem:[%s1 + $0x48] sm:$0xff]
  %v117 = vld [vmem:[%s1 + $0x50] sm:$0xff]
  %v118 = vld [vmem:[%s1 + $0x58] sm:$0xff]
  %v119 = vld [vmem:[%s1 + $0x60] sm:$0xff]
  %v120 = vld [vmem:[%s1 + $0x68] sm:$0xff]
  %v121 = vld [vmem:[%s1 + $0x70] sm:$0xff]
  %v122 = vld [vmem:[%s1 + $0x78] sm:$0xff]
  %v123 = vld [vmem:[%s1 + $0x80] sm:$0xff]
  %v124 = vld [vmem:[%s1 + $0x88] sm:$0xff]
  %v125 = vld [vmem:[%s1 + $0x90] sm:$0xff]
  %v126 = vld [vmem:[%s1 + $0x98] sm:$0xff]
  %v127 = vld [vmem:[%s1 + $0xa0] sm:$0xff]
  %v128 = vld [vmem:[%s1 + $0xa8] sm:$0xff]
  %v129 = vld [vmem:[%s1 + $0xb0] sm:$0xff]
  %v130 = vld [vmem:[%s1 + $0xb8] sm:$0xff]
  %v131 = vld [vmem:[%s1 + $0xc0] sm:$0xff]
  %v132 = vld [vmem:[%s1 + $0xc8] sm:$0xff]
  %v133 = vld [vmem:[%s1 + $0xd0] sm:$0xff]
  %v134 = vld [vmem:[%s1 + $0xd8] sm:$0xff]
  %v135 = vld [vmem:[%s1 + $0xe0] sm:$0xff]
  %v136 = vld [vmem:[%s1 + $0xe8] sm:$0xff]
  %v137 = vld [vmem:[%s1 + $0xf0] sm:$0xff]
  %v138 = vld [vmem:[%s1 + $0xf8] sm:$0xff]
  %v139 = vld [vmem:[%s1 + $0x100] sm:$0xff]
  %v140 = vld [vmem:[%s1 + $0x108] sm:$0xff]
  %v141 = vld [vmem:[%s1 + $0x110] sm:$0xff]
  %v142 = vld [vmem:[%s1 + $0x118] sm:$0xff]
  %v143 = vld [vmem:[%s1 + $0x120] sm:$0xff]
  %v144 = vld [vmem:[%s1 + $0x128] sm:$0xff]
  %v145 = vld [vmem:[%s1 + $0x130] sm:$0xff]
  %v146 = vld [vmem:[%s1 + $0x138] sm:$0xff]
  %v147 = vld [vmem:[%s1 + $0x140] sm:$0xff]
  %v148 = vld [vmem:[%s1 + $0x148] sm:$0xff]
  %v149 = vld [vmem:[%s1 + $0x150] sm:$0xff]
  %v150 = vld [vmem:[%s1 + $0x158] sm:$0xff]
  %v151 = vld [vmem:[%s1 + $0x160] sm:$0xff]
  %v152 = vld [vmem:[%s1 + $0x168] sm:$0xff]
  %v153 = vld [vmem:[%s1 + $0x170] sm:$0xff]
  %v154 = vld [vmem:[%s1 + $0x178] sm:$0xff]
  %v155 = vld [vmem:[%s1 + $0x180] sm:$0xff]
  %v156 = vld [vmem:[%s1 + $0x188] sm:$0xff]
  %v157 = vld [vmem:[%s1 + $0x190] sm:$0xff]
  %v158 = vld [vmem:[%s1 + $0x198] sm:$0xff]
  %v159 = vld [vmem:[%s1 + $0x1a0] sm:$0xff]
  %v160 = vld [vmem:[%s1 + $0x1a8] sm:$0xff]
  %v161 = vld [vmem:[%s1 + $0x1b0] sm:$0xff]
  %v162 = vld [vmem:[%s1 + $0x1b8] sm:$0xff]
  %v163 = vld [vmem:[%s1 + $0x1c0] sm:$0xff]
  %v164 = vld [vmem:[%s1 + $0x1c8] sm:$0xff]
  %v165 = vld [vmem:[%s1 + $0x1d0] sm:$0xff]
  %v166 = vld [vmem:[%s1 + $0x1d8] sm:$0xff]
  %v167 = vld [vmem:[%s1 + $0x1e0] sm:$0xff]
  %v168 = vld [vmem:[%s1 + $0x1e8] sm:$0xff]
  %v169 = vld [vmem:[%s1 + $0x1f0] sm:$0xff]
  %v170 = vld [vmem:[%s1 + $0x1f8] sm:$0xff]
  %v171 = vld [vmem:[%s1 + $0x200] sm:$0xff]
  %v172 = vld [vmem:[%s1 + $0x208] sm:$0xff]
  %v173 = vld [vmem:[%s1 + $0x210] sm:$0xff]
  %v174 = vld [vmem:[%s1 + $0x218] sm:$0xff]
  %v175 = vld [vmem:[%s1 + $0x220] sm:$0xff]
  %v176 = vld [vmem:[%s1 + $0x228] sm:$0xff]
  %v177 = vld [vmem:[%s1 + $0x230] sm:$0xff]
  %v178 = vld [vmem:[%s1 + $0x238] sm:$0xff]
  %v179 = vld [vmem:[%s1 + $0x240] sm:$0xff]
  %v180 = vld [vmem:[%s1 + $0x248] sm:$0xff]
  %v181 = vld [vmem:[%s1 + $0x250] sm:$0xff]
  %v182 = vld [vmem:[%s1 + $0x258] sm:$0xff]
  %v183 = vld [vmem:[%s1 + $0x260] sm:$0xff]
  %v184 = vld [vmem:[%s1 + $0x268] sm:$0xff]
  %v185 = vld [vmem:[%s1 + $0x270] sm:$0xff]
  %v186 = vld [vmem:[%s1 + $0x278] sm:$0xff]
  %v187 = vld [vmem:[%s1 + $0x280] sm:$0xff]
  %v188 = vld [vmem:[%s1 + $0x288] sm:$0xff]
  %v189 = vld [vmem:[%s1 + $0x290] sm:$0xff]
  %v190 = vld [vmem:[%s1 + $0x298] sm:$0xff]
  %v191 = vld [vmem:[%s1 + $0x2a0] sm:$0xff]
  %v192 = vld [vmem:[%s1 + $0x2a8] sm:$0xff]
  %v193 = vld [vmem:[%s1 + $0x2b0] sm:$0xff]
  %v194 = vld [vmem:[%s1 + $0x2b8] sm:$0xff]
  %v195 = vld [vmem:[%s1 + $0x2c0] sm:$0xff]
  %v196 = vld [vmem:[%s1 + $0x2c8] sm:$0xff]
  %v197 = vld [vmem:[%s1 + $0x2d0] sm:$0xff]
  %v198 = vld [vmem:[%s1 + $0x2d8] sm:$0xff]
  %v199 = vld [vmem:[%s1 + $0x2e0] sm:$0xff]
  %v200 = vld [vmem:[%s1 + $0x2e8] sm:$0xff]
  %v201 = vld [vmem:[%s1 + $0x2f0] sm:$0xff]
  %v202 = vld [vmem:[%s1 + $0x2f8] sm:$0xff]
  %v203 = vld [vmem:[%s1 + $0x300] sm:$0xff]
  %v204 = vld [vmem:[%s1 + $0x308] sm:$0xff]
  %v205 = vld [vmem:[%s1 + $0x310] sm:$0xff]
  %v206 = vld [vmem:[%s1 + $0x318] sm:$0xff]
  %v207 = vld [vmem:[%s1 + $0x320] sm:$0xff]
  %v208 = vld [vmem:[%s1 + $0x328] sm:$0xff]
  %v209 = vld [vmem:[%s1 + $0x330] sm:$0xff]
  %v210 = vld [vmem:[%s1 + $0x338] sm:$0xff]
  %v211 = vld [vmem:[%s1 + $0x340] sm:$0xff]
  %v212 = vld [vmem:[%s1 + $0x348] sm:$0xff]
  %v213 = vld [vmem:[%s1 + $0x350] sm:$0xff]
  %v214 = vld [vmem:[%s1 + $0x358] sm:$0xff]
  %v215 = vld [vmem:[%s1 + $0x360] sm:$0xff]
  %v216 = vld [vmem:[%s1 + $0x368] sm:$0xff]
  %v217 = vld [vmem:[%s1 + $0x370] sm:$0xff]
  %v218 = vld [vmem:[%s1 + $0x378] sm:$0xff]
  %v219 = vld [vmem:[%s1 + $0x380] sm:$0xff]
  %v220 = vld [vmem:[%s1 + $0x388] sm:$0xff]
  %v221 = vld [vmem:[%s1 + $0x390] sm:$0xff]
  %v222 = vld [vmem:[%s1 + $0x398] sm:$0xff]
  %v223 = vld [vmem:[%s1 + $0x3a0] sm:$0xff]
  %v224 = vld [vmem:[%s1 + $0x3a8] sm:$0xff]
  %v225 = vld [vmem:[%s1 + $0x3b0] sm:$0xff]
  %v226 = vld [vmem:[%s1 + $0x3b8] sm:$0xff]
  %v227 = vld [vmem:[%s1 + $0x3c0] sm:$0xff]
  %v228 = vld [vmem:[%s1 + $0x3c8] sm:$0xff]
  %v229 = vld [vmem:[%s1 + $0x3d0] sm:$0xff]
  %v230 = vld [vmem:[%s1 + $0x3d8] sm:$0xff]
  %v231 = vld [vmem:[%s1 + $0x3e0] sm:$0xff]
  %v232 = vld [vmem:[%s1 + $0x3e8] sm:$0xff]
  %v233 = vld [vmem:[%s1 + $0x3f0] sm:$0xff]
  %v234 = vld [vmem:[%s1 + $0x3f8] sm:$0xff]
  %v235 = vld [vmem:[%s1 + $0x400] sm:$0xff]
  %v236 = vld [vmem:[%s1 + $0x408] sm:$0xff]
  %v237 = vld [vmem:[%s1 + $0x410] sm:$0xff]
  %v238 = vld [vmem:[%s1 + $0x418] sm:$0xff]
  %v239 = vld [vmem:[%s1 + $0x420] sm:$0xff]
  %v240 = vld [vmem:[%s1 + $0x428] sm:$0xff]
  %v241 = vld [vmem:[%s1 + $0x430] sm:$0xff]
  %v242 = vld [vmem:[%s1 + $0x438] sm:$0xff]
  %v243 = vld [vmem:[%s1 + $0x440] sm:$0xff]
  %v244 = vld [vmem:[%s1 + $0x448] sm:$0xff]
  %v245 = vld [vmem:[%s1 + $0x450] sm:$0xff]
  %v246 = vld [vmem:[%s1 + $0x458] sm:$0xff]
  %v247 = vld [vmem:[%s1 + $0x460] sm:$0xff]
  %v248 = vld [vmem:[%s1 + $0x468] sm:$0xff]
  %v249 = vld [vmem:[%s1 + $0x470] sm:$0xff]
  %v250 = vld [vmem:[%s1 + $0x478] sm:$0xff]
  %v251 = vld [vmem:[%s1 + $0x480] sm:$0xff]
  %v252 = vld [vmem:[%s1 + $0x488] sm:$0xff]
  %v253 = vld [vmem:[%s1 + $0x490] sm:$0xff]
  %v254 = vld [vmem:[%s1 + $0x498] sm:$0xff]
  %v255 = vld [vmem:[%s1 + $0x4a0] sm:$0xff]
  %v256 = vld [vmem:[%s1 + $0x4a8] sm:$0xff]
  %v257 = vld [vmem:[%s1 + $0x4b0] sm:$0xff]
  %v258 = vld [vmem:[%s1 + $0x4b8] sm:$0xff]
  %v259 = vld [vmem:[%s1 + $0x4c0] sm:$0xff]
  %v260 = vld [vmem:[%s1 + $0x4c8] sm:$0xff]
  %v261 = vld [vmem:[%s1 + $0x4d0] sm:$0xff]
  %v262 = vld [vmem:[%s1 + $0x4d8] sm:$0xff]
  %v263 = vld [vmem:[%s1 + $0x4e0] sm:$0xff]
  %v264 = vld [vmem:[%s1 + $0x4e8] sm:$0xff]
  %v265 = vld [vmem:[%s1 + $0x4f0] sm:$0xff]
  %v266 = vld [vmem:[%s1 + $0x4f8] sm:$0xff]
  %v267 = vld [vmem:[%s1 + $0x500] sm:$0xff]
  %v268 = vld [vmem:[%s1 + $0x508] sm:$0xff]
  %v269 = vld [vmem:[%s1 + $0x510] sm:$0xff]
  %v270 = vld [vmem:[%s1 + $0x518] sm:$0xff]
  %v271 = vld [vmem:[%s1 + $0x520] sm:$0xff]
  %v272 = vld [vmem:[%s1 + $0x528] sm:$0xff]
  %v273 = vld [vmem:[%s1 + $0x530] sm:$0xff]
  %v274 = vld [vmem:[%s1 + $0x538] sm:$0xff]
  %v275 = vld [vmem:[%s1 + $0x540] sm:$0xff]
  %v276 = vld [vmem:[%s1 + $0x548] sm:$0xff]
  %v277 = vld [vmem:[%s1 + $0x550] sm:$0xff]
  %v278 = vld [vmem:[%s1 + $0x558] sm:$0xff]
  %v279 = vld [vmem:[%s1 + $0x560] sm:$0xff]
  %v280 = vld [vmem:[%s1 + $0x568] sm:$0xff]
  %v281 = vld [vmem:[%s1 + $0x570] sm:$0xff]
  %v282 = vld [vmem:[%s1 + $0x578] sm:$0xff]
  %v283 = vld [vmem:[%s1 + $0x580] sm:$0xff]
  %v284 = vld [vmem:[%s1 + $0x588] sm:$0xff]
  %v285 = vld [vmem:[%s1 + $0x590] sm:$0xff]
  %v286 = vld [vmem:[%s1 + $0x598] sm:$0xff]
  %v287 = vld [vmem:[%s1 + $0x5a0] sm:$0xff]
  %v288 = vld [vmem:[%s1 + $0x5a8] sm:$0xff]
  %v289 = vld [vmem:[%s1 + $0x5b0] sm:$0xff]
  %v290 = vld [vmem:[%s1 + $0x5b8] sm:$0xff]
  %v291 = vld [vmem:[%s1 + $0x5c0] sm:$0xff]
  %v292 = vld [vmem:[%s1 + $0x5c8] sm:$0xff]
  %v293 = vld [vmem:[%s1 + $0x5d0] sm:$0xff]
  %v294 = vld [vmem:[%s1 + $0x5d8] sm:$0xff]
  %v295 = vld [vmem:[%s1 + $0x5e0] sm:$0xff]
  %v296 = vld [vmem:[%s1 + $0x5e8] sm:$0xff]
  %v297 = vld [vmem:[%s1 + $0x5f0] sm:$0xff]
  %v298 = vld [vmem:[%s1 + $0x5f8] sm:$0xff]
  %v299 = vld [vmem:[%s1 + $0x600] sm:$0xff]
  %v300 = vld [vmem:[%s1 + $0x608] sm:$0xff]
  %v301 = vld [vmem:[%s1 + $0x610] sm:$0xff]
  %v302 = vld [vmem:[%s1 + $0x618] sm:$0xff]
  %v303 = vld [vmem:[%s1 + $0x620] sm:$0xff]
  %v304 = vld [vmem:[%s1 + $0x628] sm:$0xff]
  %v305 = vld [vmem:[%s1 + $0x630] sm:$0xff]
  %v306 = vld [vmem:[%s1 + $0x638] sm:$0xff]
  %v307 = vld [vmem:[%s1 + $0x640] sm:$0xff]
  %v308 = vld [vmem:[%s1 + $0x648] sm:$0xff]
  %v309 = vld [vmem:[%s1 + $0x650] sm:$0xff]
  %v310 = vld [vmem:[%s1 + $0x658] sm:$0xff]
  %v311 = vld [vmem:[%s1 + $0x660] sm:$0xff]
  %v312 = vld [vmem:[%s1 + $0x668] sm:$0xff]
  %v313 = vld [vmem:[%s1 + $0x670] sm:$0xff]
  %v314 = vld [vmem:[%s1 + $0x678] sm:$0xff]
  %v315 = vld [vmem:[%s1 + $0x680] sm:$0xff]
  %v316 = vld [vmem:[%s1 + $0x688] sm:$0xff]
  %v317 = vld [vmem:[%s1 + $0x690] sm:$0xff]
  %v318 = vld [vmem:[%s1 + $0x698] sm:$0xff]
  %v319 = vld [vmem:[%s1 + $0x6a0] sm:$0xff]
  %v320 = vld [vmem:[%s1 + $0x6a8] sm:$0xff]
  %v321 = vld [vmem:[%s1 + $0x6b0] sm:$0xff]
  %v322 = vld [vmem:[%s1 + $0x6b8] sm:$0xff]
  %v323 = vld [vmem:[%s1 + $0x6c0] sm:$0xff]
  %v324 = vld [vmem:[%s1 + $0x6c8] sm:$0xff]
  %v325 = vld [vmem:[%s1 + $0x6d0] sm:$0xff]
  %v326 = vld [vmem:[%s1 + $0x6d8] sm:$0xff]
  %v327 = vld [vmem:[%s1 + $0x6e0] sm:$0xff]
  %v328 = vld [vmem:[%s1 + $0x6e8] sm:$0xff]
  %v329 = vld [vmem:[%s1 + $0x6f0] sm:$0xff]
  %v330 = vld [vmem:[%s1 + $0x6f8] sm:$0xff]
  %v331 = vld [vmem:[%s1 + $0x700] sm:$0xff]
  %v332 = vld [vmem:[%s1 + $0x708] sm:$0xff]
  %v333 = vld [vmem:[%s1 + $0x710] sm:$0xff]
  %v334 = vld [vmem:[%s1 + $0x718] sm:$0xff]
  %v335 = vld [vmem:[%s1 + $0x720] sm:$0xff]
  %v336 = vld [vmem:[%s1 + $0x728] sm:$0xff]
  %v337 = vld [vmem:[%s1 + $0x730] sm:$0xff]
  %v338 = vld [vmem:[%s1 + $0x738] sm:$0xff]
  %v339 = vld [vmem:[%s1 + $0x740] sm:$0xff]
  %v340 = vld [vmem:[%s1 + $0x748] sm:$0xff]
  %v341 = vld [vmem:[%s1 + $0x750] sm:$0xff]
  %v342 = vld [vmem:[%s1 + $0x758] sm:$0xff]
  %v343 = vld [vmem:[%s1 + $0x760] sm:$0xff]
  %v344 = vld [vmem:[%s1 + $0x768] sm:$0xff]
  %v345 = vld [vmem:[%s1 + $0x770] sm:$0xff]
  %v346 = vld [vmem:[%s1 + $0x778] sm:$0xff]
  %v347 = vld [vmem:[%s1 + $0x780] sm:$0xff]
  %v348 = vld [vmem:[%s1 + $0x788] sm:$0xff]
  %v349 = vld [vmem:[%s1 + $0x790] sm:$0xff]
  %v350 = vld [vmem:[%s1 + $0x798] sm:$0xff]
  %v351 = vld [vmem:[%s1 + $0x7a0] sm:$0xff]
  %v352 = vld [vmem:[%s1 + $0x7a8] sm:$0xff]
  %v353 = vld [vmem:[%s1 + $0x7b0] sm:$0xff]
  %v354 = vld [vmem:[%s1 + $0x7b8] sm:$0xff]
  %v355 = vld [vmem:[%s1 + $0x7c0] sm:$0xff]
  %v356 = vld [vmem:[%s1 + $0x7c8] sm:$0xff]
  %v357 = vld [vmem:[%s1 + $0x7d0] sm:$0xff]
  %v358 = vld [vmem:[%s1 + $0x7d8] sm:$0xff]
  %v359 = vld [vmem:[%s1 + $0x7e0] sm:$0xff]
  %v360 = vld [vmem:[%s1 + $0x7e8] sm:$0xff]
  %v361 = vld [vmem:[%s1 + $0x7f0] sm:$0xff]
  %v362 = vld [vmem:[%s1 + $0x7f8] sm:$0xff]
  %v363 = vld [vmem:[%s1 + $0x800] sm:$0xff]
  %v364 = vld [vmem:[%s1 + $0x808] sm:$0xff]
  %v365 = vld [vmem:[%s1 + $0x810] sm:$0xff]
  %v366 = vld [vmem:[%s1 + $0x818] sm:$0xff]
  %v367 = vld [vmem:[%s1 + $0x820] sm:$0xff]
  %v368 = vld [vmem:[%s1 + $0x828] sm:$0xff]
  %v369 = vld [vmem:[%s1 + $0x830] sm:$0xff]
  %v370 = vld [vmem:[%s1 + $0x838] sm:$0xff]
  %v371 = vld [vmem:[%s1 + $0x840] sm:$0xff]
  %v372 = vld [vmem:[%s1 + $0x848] sm:$0xff]
  %v373 = vld [vmem:[%s1 + $0x850] sm:$0xff]
  %v374 = vld [vmem:[%s1 + $0x858] sm:$0xff]
  %v375 = vld [vmem:[%s1 + $0x860] sm:$0xff]
  %v376 = vld [vmem:[%s1 + $0x868] sm:$0xff]
  %v377 = vld [vmem:[%s1 + $0x870] sm:$0xff]
  %v378 = vld [vmem:[%s1 + $0x878] sm:$0xff]
  %v379 = vld [vmem:[%s1 + $0x880] sm:$0xff]
  %v380 = vld [vmem:[%s1 + $0x888] sm:$0xff]
  %v381 = vld [vmem:[%s1 + $0x890] sm:$0xff]
  %v382 = vld [vmem:[%s1 + $0x898] sm:$0xff]
  %v383 = vld [vmem:[%s1 + $0x8a0] sm:$0xff]
  %v384 = vld [vmem:[%s1 + $0x8a8] sm:$0xff]
  %v385 = vld [vmem:[%s1 + $0x8b0] sm:$0xff]
  %v386 = vld [vmem:[%s1 + $0x8b8] sm:$0xff]
  %v387 = vld [vmem:[%s1 + $0x8c0] sm:$0xff]
  %v388 = vld [vmem:[%s1 + $0x8c8] sm:$0xff]
  %v389 = vld [vmem:[%s1 + $0x8d0] sm:$0xff]
  %v390 = vld [vmem:[%s1 + $0x8d8] sm:$0xff]
  %v391 = vld [vmem:[%s1 + $0x8e0] sm:$0xff]
  %v392 = vld [vmem:[%s1 + $0x8e8] sm:$0xff]
  %v393 = vld [vmem:[%s1 + $0x8f0] sm:$0xff]
  %v394 = vld [vmem:[%s1 + $0x8f8] sm:$0xff]
  %v395 = vld [vmem:[%s1 + $0x900] sm:$0xff]
  %v396 = vld [vmem:[%s1 + $0x908] sm:$0xff]
  %v397 = vld [vmem:[%s1 + $0x910] sm:$0xff]
  %v398 = vld [vmem:[%s1 + $0x918] sm:$0xff]
  %v399 = vld [vmem:[%s1 + $0x920] sm:$0xff]
  %v400 = vld [vmem:[%s1 + $0x928] sm:$0xff]
  %v401 = vld [vmem:[%s1 + $0x930] sm:$0xff]
  %v402 = vld [vmem:[%s1 + $0x938] sm:$0xff]
  %v403 = vld [vmem:[%s1 + $0x940] sm:$0xff]
  %v404 = vld [vmem:[%s1 + $0x948] sm:$0xff]
  %v405 = vld [vmem:[%s1 + $0x950] sm:$0xff]
  %v406 = vld [vmem:[%s1 + $0x958] sm:$0xff]
  %v407 = vld [vmem:[%s1 + $0x960] sm:$0xff]
  %v408 = vld [vmem:[%s1 + $0x968] sm:$0xff]
  %v409 = vld [vmem:[%s1 + $0x970] sm:$0xff]
  %v410 = vld [vmem:[%s1 + $0x978] sm:$0xff]
  %v411 = vld [vmem:[%s1 + $0x980] sm:$0xff]
  %v412 = vld [vmem:[%s1 + $0x988] sm:$0xff]
  %v413 = vld [vmem:[%s1 + $0x990] sm:$0xff]
  %v414 = vld [vmem:[%s1 + $0x998] sm:$0xff]
  %v415 = vld [vmem:[%s1 + $0x9a0] sm:$0xff]
  %v416 = vld [vmem:[%s1 + $0x9a8] sm:$0xff]
  %v417 = vld [vmem:[%s1 + $0x9b0] sm:$0xff]
  %v418 = vld [vmem:[%s1 + $0x9b8] sm:$0xff]
  %v419 = vld [vmem:[%s1 + $0x9c0] sm:$0xff]
  %v420 = vld [vmem:[%s1 + $0x9c8] sm:$0xff]
  %v421 = vld [vmem:[%s1 + $0x9d0] sm:$0xff]
  %v422 = vld [vmem:[%s1 + $0x9d8] sm:$0xff]
  %v423 = vld [vmem:[%s1 + $0x9e0] sm:$0xff]
  %v424 = vld [vmem:[%s1 + $0x9e8] sm:$0xff]
  %v425 = vld [vmem:[%s1 + $0x9f0] sm:$0xff]
  %v426 = vld [vmem:[%s1 + $0x9f8] sm:$0xff]
  %v427 = vld [vmem:[%s1 + $0xa00] sm:$0xff]
  %v428 = vld [vmem:[%s1 + $0xa08] sm:$0xff]
  %v429 = vld [vmem:[%s1 + $0xa10] sm:$0xff]
  %v430 = vld [vmem:[%s1 + $0xa18] sm:$0xff]
  %v431 = vld [vmem:[%s1 + $0xa20] sm:$0xff]
  %v432 = vld [vmem:[%s1 + $0xa28] sm:$0xff]
  %v433 = vld [vmem:[%s1 + $0xa30] sm:$0xff]
  %v434 = vld [vmem:[%s1 + $0xa38] sm:$0xff]
  %v435 = vld [vmem:[%s1 + $0xa40] sm:$0xff]
  %v436 = vld [vmem:[%s1 + $0xa48] sm:$0xff]
  %v437 = vld [vmem:[%s1 + $0xa50] sm:$0xff]
  %v438 = vld [vmem:[%s1 + $0xa58] sm:$0xff]
  %v439 = vld [vmem:[%s1 + $0xa60] sm:$0xff]
  %v440 = vld [vmem:[%s1 + $0xa68] sm:$0xff]
  %v441 = vld [vmem:[%s1 + $0xa70] sm:$0xff]
  %v442 = vld [vmem:[%s1 + $0xa78] sm:$0xff]
  %v443 = vld [vmem:[%s1 + $0xa80] sm:$0xff]
  %v444 = vld [vmem:[%s1 + $0xa88] sm:$0xff]
  %v445 = vld [vmem:[%s1 + $0xa90] sm:$0xff]
  %v446 = vld [vmem:[%s1 + $0xa98] sm:$0xff]
  %v447 = vld [vmem:[%s1 + $0xaa0] sm:$0xff]
  %v448 = vld [vmem:[%s1 + $0xaa8] sm:$0xff]
  %v449 = vld [vmem:[%s1 + $0xab0] sm:$0xff]
  %v450 = vld [vmem:[%s1 + $0xab8] sm:$0xff]
  %v451 = vld [vmem:[%s1 + $0xac0] sm:$0xff]
  %v452 = vld [vmem:[%s1 + $0xac8] sm:$0xff]
  %v453 = vld [vmem:[%s1 + $0xad0] sm:$0xff]
  %v454 = vld [vmem:[%s1 + $0xad8] sm:$0xff]
  %v455 = vld [vmem:[%s1 + $0xae0] sm:$0xff]
  %v456 = vld [vmem:[%s1 + $0xae8] sm:$0xff]
  %v457 = vld [vmem:[%s1 + $0xaf0] sm:$0xff]
  %v458 = vld [vmem:[%s1 + $0xaf8] sm:$0xff]
  %v459 = vld [vmem:[%s1 + $0xb00] sm:$0xff]
  %v460 = vld [vmem:[%s1 + $0xb08] sm:$0xff]
  %v461 = vld [vmem:[%s1 + $0xb10] sm:$0xff]
  %v462 = vld [vmem:[%s1 + $0xb18] sm:$0xff]
  %v463 = vld [vmem:[%s1 + $0xb20] sm:$0xff]
  %v464 = vld [vmem:[%s1 + $0xb28] sm:$0xff]
  %v465 = vld [vmem:[%s1 + $0xb30] sm:$0xff]
  %v466 = vld [vmem:[%s1 + $0xb38] sm:$0xff]
  %v467 = vld [vmem:[%s1 + $0xb40] sm:$0xff]
  %v468 = vld [vmem:[%s1 + $0xb48] sm:$0xff]
  %v469 = vld [vmem:[%s1 + $0xb50] sm:$0xff]
  %v470 = vld [vmem:[%s1 + $0xb58] sm:$0xff]
  %v471 = vld [vmem:[%s1 + $0xb60] sm:$0xff]
  %v472 = vld [vmem:[%s1 + $0xb68] sm:$0xff]
  %v473 = vld [vmem:[%s1 + $0xb70] sm:$0xff]
  %v474 = vld [vmem:[%s1 + $0xb78] sm:$0xff]
  %v475 = vld [vmem:[%s1 + $0xb80] sm:$0xff]
  %v476 = vld [vmem:[%s1 + $0xb88] sm:$0xff]
  %v477 = vld [vmem:[%s1 + $0xb90] sm:$0xff]
  %v478 = vld [vmem:[%s1 + $0xb98] sm:$0xff]
  %v479 = vld [vmem:[%s1 + $0xba0] sm:$0xff]
  %v480 = vld [vmem:[%s1 + $0xba8] sm:$0xff]
  %v481 = vld [vmem:[%s1 + $0xbb0] sm:$0xff]
  %v482 = vld [vmem:[%s1 + $0xbb8] sm:$0xff]
  %v483 = vld [vmem:[%s1 + $0xbc0] sm:$0xff]
  %v484 = vld [vmem:[%s1 + $0xbc8] sm:$0xff]
  %v485 = vld [vmem:[%s1 + $0xbd0] sm:$0xff]
  %v486 = vld [vmem:[%s1 + $0xbd8] sm:$0xff]
  %v487 = vld [vmem:[%s1 + $0xbe0] sm:$0xff]
  %v488 = vld [vmem:[%s1 + $0xbe8] sm:$0xff]
  %v489 = vld [vmem:[%s1 + $0xbf0] sm:$0xff]
  %v490 = vld [vmem:[%s1 + $0xbf8] sm:$0xff]
  %v491 = vld [vmem:[%s1 + $0xc00] sm:$0xff]
  %v492 = vld [vmem:[%s1 + $0xc08] sm:$0xff]
  %v493 = vld [vmem:[%s1 + $0xc10] sm:$0xff]
  %v494 = vld [vmem:[%s1 + $0xc18] sm:$0xff]
  %v495 = vld [vmem:[%s1 + $0xc20] sm:$0xff]
  %v496 = vld [vmem:[%s1 + $0xc28] sm:$0xff]
  %v497 = vld [vmem:[%s1 + $0xc30] sm:$0xff]
  %v498 = vld [vmem:[%s1 + $0xc38] sm:$0xff]
  %v499 = vld [vmem:[%s1 + $0xc40] sm:$0xff]
  %v500 = vld [vmem:[%s1 + $0xc48] sm:$0xff]
  %v501 = vld [vmem:[%s1 + $0xc50] sm:$0xff]
  %v502 = vld [vmem:[%s1 + $0xc58] sm:$0xff]
  %v503 = vld [vmem:[%s1 + $0xc60] sm:$0xff]
  %v504 = vld [vmem:[%s1 + $0xc68] sm:$0xff]
  %v505 = vld [vmem:[%s1 + $0xc70] sm:$0xff]
  %v506 = vld [vmem:[%s1 + $0xc78] sm:$0xff]
  %v507 = vld [vmem:[%s1 + $0xc80] sm:$0xff]
  %v508 = vld [vmem:[%s1 + $0xc88] sm:$0xff]
  %v509 = vld [vmem:[%s1 + $0xc90] sm:$0xff]
  %v510 = vld [vmem:[%s1 + $0xc98] sm:$0xff]
  %v511 = vld [vmem:[%s1 + $0xca0] sm:$0xff]
  %v512 = vld [vmem:[%s1 + $0xca8] sm:$0xff]
  %v513 = vld [vmem:[%s1 + $0xcb0] sm:$0xff]
  %v514 = vld [vmem:[%s1 + $0xcb8] sm:$0xff]
  %v515 = vld [vmem:[%s1 + $0xcc0] sm:$0xff]
  %v516 = vld [vmem:[%s1 + $0xcc8] sm:$0xff]
  %v517 = vld [vmem:[%s1 + $0xcd0] sm:$0xff]
  %v518 = vld [vmem:[%s1 + $0xcd8] sm:$0xff]
  %v519 = vld [vmem:[%s1 + $0xce0] sm:$0xff]
  %v520 = vld [vmem:[%s1 + $0xce8] sm:$0xff]
  %v521 = vld [vmem:[%s1 + $0xcf0] sm:$0xff]
  %v522 = vld [vmem:[%s1 + $0xcf8] sm:$0xff]
  %v523 = vld [vmem:[%s1 + $0xd00] sm:$0xff]
  %v524 = vld [vmem:[%s1 + $0xd08] sm:$0xff]
  %v525 = vld [vmem:[%s1 + $0xd10] sm:$0xff]
  %v526 = vld [vmem:[%s1 + $0xd18] sm:$0xff]
  %v527 = vld [vmem:[%s1 + $0xd20] sm:$0xff]
  %v528 = vld [vmem:[%s1 + $0xd28] sm:$0xff]
  %v529 = vld [vmem:[%s1 + $0xd30] sm:$0xff]
  %v530 = vld [vmem:[%s1 + $0xd38] sm:$0xff]
  %v531 = vld [vmem:[%s1 + $0xd40] sm:$0xff]
  %v532 = vld [vmem:[%s1 + $0xd48] sm:$0xff]
  %v533 = vld [vmem:[%s1 + $0xd50] sm:$0xff]
  %v534 = vld [vmem:[%s1 + $0xd58] sm:$0xff]
  %v535 = vld [vmem:[%s1 + $0xd60] sm:$0xff]
  %v536 = vld [vmem:[%s1 + $0xd68] sm:$0xff]
  %v537 = vld [vmem:[%s1 + $0xd70] sm:$0xff]
  %v538 = vld [vmem:[%s1 + $0xd78] sm:$0xff]
  %v539 = vld [vmem:[%s1 + $0xd80] sm:$0xff]
  %v540 = vld [vmem:[%s1 + $0xd88] sm:$0xff]
  %v541 = vld [vmem:[%s1 + $0xd90] sm:$0xff]
  %v542 = vld [vmem:[%s1 + $0xd98] sm:$0xff]
  %v543 = vld [vmem:[%s1 + $0xda0] sm:$0xff]
  %v544 = vld [vmem:[%s1 + $0xda8] sm:$0xff]
  %v545 = vld [vmem:[%s1 + $0xdb0] sm:$0xff]
  %v546 = vld [vmem:[%s1 + $0xdb8] sm:$0xff]
  %v547 = vld [vmem:[%s1 + $0xdc0] sm:$0xff]
  %v548 = vld [vmem:[%s1 + $0xdc8] sm:$0xff]
  %v549 = vld [vmem:[%s1 + $0xdd0] sm:$0xff]
  %v550 = vld [vmem:[%s1 + $0xdd8] sm:$0xff]
  %v551 = vld [vmem:[%s1 + $0xde0] sm:$0xff]
  %v552 = vld [vmem:[%s1 + $0xde8] sm:$0xff]
  %v553 = vld [vmem:[%s1 + $0xdf0] sm:$0xff]
  %v554 = vld [vmem:[%s1 + $0xdf8] sm:$0xff]
  %v555 = vld [vmem:[%s1 + $0xe00] sm:$0xff]
  %v556 = vld [vmem:[%s1 + $0xe08] sm:$0xff]
  %v557 = vld [vmem:[%s1 + $0xe10] sm:$0xff]
  %v558 = vld [vmem:[%s1 + $0xe18] sm:$0xff]
  %v559 = vld [vmem:[%s1 + $0xe20] sm:$0xff]
  %v560 = vld [vmem:[%s1 + $0xe28] sm:$0xff]
  %v561 = vld [vmem:[%s1 + $0xe30] sm:$0xff]
  %v562 = vld [vmem:[%s1 + $0xe38] sm:$0xff]
  %v563 = vld [vmem:[%s1 + $0xe40] sm:$0xff]
  %v564 = vld [vmem:[%s1 + $0xe48] sm:$0xff]
  %v565 = vld [vmem:[%s1 + $0xe50] sm:$0xff]
  %v566 = vld [vmem:[%s1 + $0xe58] sm:$0xff]
  %v567 = vld [vmem:[%s1 + $0xe60] sm:$0xff]
  %v568 = vld [vmem:[%s1 + $0xe68] sm:$0xff]
  %v569 = vld [vmem:[%s1 + $0xe70] sm:$0xff]
  %v570 = vld [vmem:[%s1 + $0xe78] sm:$0xff]
  %v571 = vld [vmem:[%s1 + $0xe80] sm:$0xff]
  %v572 = vld [vmem:[%s1 + $0xe88] sm:$0xff]
  %v573 = vld [vmem:[%s1 + $0xe90] sm:$0xff]
  %v574 = vld [vmem:[%s1 + $0xe98] sm:$0xff]
  %v575 = vld [vmem:[%s1 + $0xea0] sm:$0xff]
  %v576 = vld [vmem:[%s1 + $0xea8] sm:$0xff]
  %v577 = vld [vmem:[%s1 + $0xeb0] sm:$0xff]
  %v578 = vld [vmem:[%s1 + $0xeb8] sm:$0xff]
  %v579 = vld [vmem:[%s1 + $0xec0] sm:$0xff]
  %v580 = vld [vmem:[%s1 + $0xec8] sm:$0xff]
  %v581 = vld [vmem:[%s1 + $0xed0] sm:$0xff]
  %v582 = vld [vmem:[%s1 + $0xed8] sm:$0xff]
  %v583 = vld [vmem:[%s1 + $0xee0] sm:$0xff]
  %v584 = vld [vmem:[%s1 + $0xee8] sm:$0xff]
  %v585 = vld [vmem:[%s1 + $0xef0] sm:$0xff]
  %v586 = vld [vmem:[%s1 + $0xef8] sm:$0xff]
  %v587 = vld [vmem:[%s1 + $0xf00] sm:$0xff]
  %v588 = vld [vmem:[%s1 + $0xf08] sm:$0xff]
  %v589 = vld [vmem:[%s1 + $0xf10] sm:$0xff]
  %v590 = vld [vmem:[%s1 + $0xf18] sm:$0xff]
  %v591 = vld [vmem:[%s1 + $0xf20] sm:$0xff]
  %v592 = vld [vmem:[%s1 + $0xf28] sm:$0xff]
  %v593 = vld [vmem:[%s1 + $0xf30] sm:$0xff]
  %v594 = vld [vmem:[%s1 + $0xf38] sm:$0xff]
  %v595 = vld [vmem:[%s1 + $0xf40] sm:$0xff]
  %v596 = vld [vmem:[%s1 + $0xf48] sm:$0xff]
  %v597 = vld [vmem:[%s1 + $0xf50] sm:$0xff]
  %v598 = vld [vmem:[%s1 + $0xf58] sm:$0xff]
  %v599 = vld [vmem:[%s1 + $0xf60] sm:$0xff]
  %v600 = vld [vmem:[%s1 + $0xf68] sm:$0xff]
  %v601 = vld [vmem:[%s1 + $0xf70] sm:$0xff]
  %v602 = vld [vmem:[%s1 + $0xf78] sm:$0xff]
  %v603 = vld [vmem:[%s1 + $0xf80] sm:$0xff]
  %v604 = vld [vmem:[%s1 + $0xf88] sm:$0xff]
  %v605 = vld [vmem:[%s1 + $0xf90] sm:$0xff]
  %v606 = vld [vmem:[%s1 + $0xf98] sm:$0xff]
  %v607 = vld [vmem:[%s1 + $0xfa0] sm:$0xff]
  %v608 = vld [vmem:[%s1 + $0xfa8] sm:$0xff]
  %v609 = vld [vmem:[%s1 + $0xfb0] sm:$0xff]
  %v610 = vld [vmem:[%s1 + $0xfb8] sm:$0xff]
  %v611 = vld [vmem:[%s1 + $0xfc0] sm:$0xff]
  %v612 = vld [vmem:[%s1 + $0xfc8] sm:$0xff]
  %v613 = vld [vmem:[%s1 + $0xfd0] sm:$0xff]
  %v614 = vld [vmem:[%s1 + $0xfd8] sm:$0xff]
  %v615 = vld [vmem:[%s1 + $0xfe0] sm:$0xff]
  %v616 = vld [vmem:[%s1 + $0xfe8] sm:$0xff]
  %v617 = vld [vmem:[%s1 + $0xff0] sm:$0xff]
  %v618 = vld [vmem:[%s1 + $0xff8] sm:$0xff]
  %v651 = vunpack.c.l.b16 %v107
  %v652 = vunpack.c.h.b16 %v107
  %v653 = vunpack.c.l.b16 %v108
  %v654 = vunpack.c.h.b16 %v108
  %v655 = vunpack.c.l.b16 %v109
  %v656 = vunpack.c.h.b16 %v109
  %v657 = vunpack.c.l.b16 %v110
  %v658 = vunpack.c.h.b16 %v110
  %v659 = vunpack.c.l.b16 %v111
  %v660 = vunpack.c.h.b16 %v111
  %v661 = vunpack.c.l.b16 %v112
  %v662 = vunpack.c.h.b16 %v112
  %v663 = vunpack.c.l.b16 %v113
  %v664 = vunpack.c.h.b16 %v113
  %v665 = vunpack.c.l.b16 %v114
  %v666 = vunpack.c.h.b16 %v114
  %v667 = vunpack.c.l.b16 %v115
  %v668 = vunpack.c.h.b16 %v115
  %v669 = vunpack.c.l.b16 %v116
  %v670 = vunpack.c.h.b16 %v116
  %v671 = vunpack.c.l.b16 %v117
  %v672 = vunpack.c.h.b16 %v117
  %v673 = vunpack.c.l.b16 %v118
  %v674 = vunpack.c.h.b16 %v118
  %v675 = vunpack.c.l.b16 %v119
  %v676 = vunpack.c.h.b16 %v119
  %v677 = vunpack.c.l.b16 %v120
  %v678 = vunpack.c.h.b16 %v120
  %v679 = vunpack.c.l.b16 %v121
  %v680 = vunpack.c.h.b16 %v121
  %v681 = vunpack.c.l.b16 %v122
  %v682 = vunpack.c.h.b16 %v122
  %v683 = vunpack.c.l.b16 %v123
  %v684 = vunpack.c.h.b16 %v123
  %v685 = vunpack.c.l.b16 %v124
  %v686 = vunpack.c.h.b16 %v124
  %v687 = vunpack.c.l.b16 %v125
  %v688 = vunpack.c.h.b16 %v125
  %v689 = vunpack.c.l.b16 %v126
  %v690 = vunpack.c.h.b16 %v126
  %v691 = vunpack.c.l.b16 %v127
  %v692 = vunpack.c.h.b16 %v127
  %v693 = vunpack.c.l.b16 %v128
  %v694 = vunpack.c.h.b16 %v128
  %v695 = vunpack.c.l.b16 %v129
  %v696 = vunpack.c.h.b16 %v129
  %v697 = vunpack.c.l.b16 %v130
  %v698 = vunpack.c.h.b16 %v130
  %v699 = vunpack.c.l.b16 %v131
  %v700 = vunpack.c.h.b16 %v131
  %v701 = vunpack.c.l.b16 %v132
  %v702 = vunpack.c.h.b16 %v132
  %v703 = vunpack.c.l.b16 %v133
  %v704 = vunpack.c.h.b16 %v133
  %v705 = vunpack.c.l.b16 %v134
  %v706 = vunpack.c.h.b16 %v134
  %v707 = vunpack.c.l.b16 %v135
  %v708 = vunpack.c.h.b16 %v135
  %v709 = vunpack.c.l.b16 %v136
  %v710 = vunpack.c.h.b16 %v136
  %v711 = vunpack.c.l.b16 %v137
  %v712 = vunpack.c.h.b16 %v137
  %v713 = vunpack.c.l.b16 %v138
  %v714 = vunpack.c.h.b16 %v138
  %v715 = vpack.c.b16 %v653, %v651
  %v716 = vpack.c.b16 %v654, %v652
  %v717 = vpack.c.b16 %v657, %v655
  %v718 = vpack.c.b16 %v658, %v656
  %v719 = vpack.c.b16 %v661, %v659
  %v720 = vpack.c.b16 %v662, %v660
  %v721 = vpack.c.b16 %v665, %v663
  %v722 = vpack.c.b16 %v666, %v664
  %v723 = vpack.c.b16 %v669, %v667
  %v724 = vpack.c.b16 %v670, %v668
  %v725 = vpack.c.b16 %v673, %v671
  %v726 = vpack.c.b16 %v674, %v672
  %v727 = vpack.c.b16 %v677, %v675
  %v728 = vpack.c.b16 %v678, %v676
  %v729 = vpack.c.b16 %v681, %v679
  %v730 = vpack.c.b16 %v682, %v680
  %v731 = vpack.c.b16 %v685, %v683
  %v732 = vpack.c.b16 %v686, %v684
  %v733 = vpack.c.b16 %v689, %v687
  %v734 = vpack.c.b16 %v690, %v688
  %v735 = vpack.c.b16 %v693, %v691
  %v736 = vpack.c.b16 %v694, %v692
  %v737 = vpack.c.b16 %v697, %v695
  %v738 = vpack.c.b16 %v698, %v696
  %v739 = vpack.c.b16 %v701, %v699
  %v740 = vpack.c.b16 %v702, %v700
  %v741 = vpack.c.b16 %v705, %v703
  %v742 = vpack.c.b16 %v706, %v704
  %v743 = vpack.c.b16 %v709, %v707
  %v744 = vpack.c.b16 %v710, %v708
  %v745 = vpack.c.b16 %v713, %v711
  %v746 = vpack.c.b16 %v714, %v712
  %779 = vmatprep.subr.bf16.mxu0 %v716
  %780 = vmatpush1.bf16.msra.mxu0 %v715
  %781 = vmatprep.subr.bf16.mxu0 %v718
  %782 = vmatpush1.bf16.msra.mxu0 %v717
  %783 = vmatprep.subr.bf16.mxu0 %v720
  %784 = vmatpush1.bf16.msra.mxu0 %v719
  %785 = vmatprep.subr.bf16.mxu0 %v722
  %786 = vmatpush1.bf16.msra.mxu0 %v721
  %787 = vmatprep.subr.bf16.mxu0 %v724
  %788 = vmatpush1.bf16.msra.mxu0 %v723
  %789 = vmatprep.subr.bf16.mxu0 %v726
  %790 = vmatpush1.bf16.msra.mxu0 %v725
  %791 = vmatprep.subr.bf16.mxu0 %v728
  %792 = vmatpush1.bf16.msra.mxu0 %v727
  %793 = vmatprep.subr.bf16.mxu0 %v730
  %794 = vmatpush1.bf16.msra.mxu0 %v729
  %795 = vmatprep.subr.bf16.mxu0 %v732
  %796 = vmatpush1.bf16.msra.mxu0 %v731
  %797 = vmatprep.subr.bf16.mxu0 %v734
  %798 = vmatpush1.bf16.msra.mxu0 %v733
  %799 = vmatprep.subr.bf16.mxu0 %v736
  %800 = vmatpush1.bf16.msra.mxu0 %v735
  %801 = vmatprep.subr.bf16.mxu0 %v738
  %802 = vmatpush1.bf16.msra.mxu0 %v737
  %803 = vmatprep.subr.bf16.mxu0 %v740
  %804 = vmatpush1.bf16.msra.mxu0 %v739
  %805 = vmatprep.subr.bf16.mxu0 %v742
  %806 = vmatpush1.bf16.msra.mxu0 %v741
  %807 = vmatprep.subr.bf16.mxu0 %v744
  %808 = vmatpush1.bf16.msra.mxu0 %v743
  %809 = vmatprep.subr.bf16.mxu0 %v746
  %810 = vmatpush1.bf16.msra.mxu0 %v745
  %811 = vmatprep.mubr.bf16.mxu0 %v76
  %812 = vmatmul.mubr.bf16.gmra.mrb[0].mxu0 %v75
  %v813 = vpop.f32.mrb[0].mxu0
  %v814 = vadd.f32 0.0, %v813
  %v815 = vpop.f32.mrb[0].mxu0
  %v816 = vadd.f32 0.0, %v815
  %v817 = vpop.f32.mrb[0].mxu0
  %v818 = vpop.f32.mrb[0].mxu0
  %819 = vdwg.mxu0
  %v852 = vunpack.c.l.b16 %v139
  %v853 = vunpack.c.h.b16 %v139
  %v854 = vunpack.c.l.b16 %v140
  %v855 = vunpack.c.h.b16 %v140
  %v856 = vunpack.c.l.b16 %v141
  %v857 = vunpack.c.h.b16 %v141
  %v858 = vunpack.c.l.b16 %v142
  %v859 = vunpack.c.h.b16 %v142
  %v860 = vunpack.c.l.b16 %v143
  %v861 = vunpack.c.h.b16 %v143
  %v862 = vunpack.c.l.b16 %v144
  %v863 = vunpack.c.h.b16 %v144
  %v864 = vunpack.c.l.b16 %v145
  %v865 = vunpack.c.h.b16 %v145
  %v866 = vunpack.c.l.b16 %v146
  %v867 = vunpack.c.h.b16 %v146
  %v868 = vunpack.c.l.b16 %v147
  %v869 = vunpack.c.h.b16 %v147
  %v870 = vunpack.c.l.b16 %v148
  %v871 = vunpack.c.h.b16 %v148
  %v872 = vunpack.c.l.b16 %v149
  %v873 = vunpack.c.h.b16 %v149
  %v874 = vunpack.c.l.b16 %v150
  %v875 = vunpack.c.h.b16 %v150
  %v876 = vunpack.c.l.b16 %v151
  %v877 = vunpack.c.h.b16 %v151
  %v878 = vunpack.c.l.b16 %v152
  %v879 = vunpack.c.h.b16 %v152
  %v880 = vunpack.c.l.b16 %v153
  %v881 = vunpack.c.h.b16 %v153
  %v882 = vunpack.c.l.b16 %v154
  %v883 = vunpack.c.h.b16 %v154
  %v884 = vunpack.c.l.b16 %v155
  %v885 = vunpack.c.h.b16 %v155
  %v886 = vunpack.c.l.b16 %v156
  %v887 = vunpack.c.h.b16 %v156
  %v888 = vunpack.c.l.b16 %v157
  %v889 = vunpack.c.h.b16 %v157
  %v890 = vunpack.c.l.b16 %v158
  %v891 = vunpack.c.h.b16 %v158
  %v892 = vunpack.c.l.b16 %v159
  %v893 = vunpack.c.h.b16 %v159
  %v894 = vunpack.c.l.b16 %v160
  %v895 = vunpack.c.h.b16 %v160
  %v896 = vunpack.c.l.b16 %v161
  %v897 = vunpack.c.h.b16 %v161
  %v898 = vunpack.c.l.b16 %v162
  %v899 = vunpack.c.h.b16 %v162
  %v900 = vunpack.c.l.b16 %v163
  %v901 = vunpack.c.h.b16 %v163
  %v902 = vunpack.c.l.b16 %v164
  %v903 = vunpack.c.h.b16 %v164
  %v904 = vunpack.c.l.b16 %v165
  %v905 = vunpack.c.h.b16 %v165
  %v906 = vunpack.c.l.b16 %v166
  %v907 = vunpack.c.h.b16 %v166
  %v908 = vunpack.c.l.b16 %v167
  %v909 = vunpack.c.h.b16 %v167
  %v910 = vunpack.c.l.b16 %v168
  %v911 = vunpack.c.h.b16 %v168
  %v912 = vunpack.c.l.b16 %v169
  %v913 = vunpack.c.h.b16 %v169
  %v914 = vunpack.c.l.b16 %v170
  %v915 = vunpack.c.h.b16 %v170
  %v916 = vpack.c.b16 %v854, %v852
  %v917 = vpack.c.b16 %v855, %v853
  %v918 = vpack.c.b16 %v858, %v856
  %v919 = vpack.c.b16 %v859, %v857
  %v920 = vpack.c.b16 %v862, %v860
  %v921 = vpack.c.b16 %v863, %v861
  %v922 = vpack.c.b16 %v866, %v864
  %v923 = vpack.c.b16 %v867, %v865
  %v924 = vpack.c.b16 %v870, %v868
  %v925 = vpack.c.b16 %v871, %v869
  %v926 = vpack.c.b16 %v874, %v872
  %v927 = vpack.c.b16 %v875, %v873
  %v928 = vpack.c.b16 %v878, %v876
  %v929 = vpack.c.b16 %v879, %v877
  %v930 = vpack.c.b16 %v882, %v880
  %v931 = vpack.c.b16 %v883, %v881
  %v932 = vpack.c.b16 %v886, %v884
  %v933 = vpack.c.b16 %v887, %v885
  %v934 = vpack.c.b16 %v890, %v888
  %v935 = vpack.c.b16 %v891, %v889
  %v936 = vpack.c.b16 %v894, %v892
  %v937 = vpack.c.b16 %v895, %v893
  %v938 = vpack.c.b16 %v898, %v896
  %v939 = vpack.c.b16 %v899, %v897
  %v940 = vpack.c.b16 %v902, %v900
  %v941 = vpack.c.b16 %v903, %v901
  %v942 = vpack.c.b16 %v906, %v904
  %v943 = vpack.c.b16 %v907, %v905
  %v944 = vpack.c.b16 %v910, %v908
  %v945 = vpack.c.b16 %v911, %v909
  %v946 = vpack.c.b16 %v914, %v912
  %v947 = vpack.c.b16 %v915, %v913
  %980 = vmatprep.subr.bf16.mxu0 %v917
  %981 = vmatpush1.bf16.msra.mxu0 %v916
  %982 = vmatprep.subr.bf16.mxu0 %v919
  %983 = vmatpush1.bf16.msra.mxu0 %v918
  %984 = vmatprep.subr.bf16.mxu0 %v921
  %985 = vmatpush1.bf16.msra.mxu0 %v920
  %986 = vmatprep.subr.bf16.mxu0 %v923
  %987 = vmatpush1.bf16.msra.mxu0 %v922
  %988 = vmatprep.subr.bf16.mxu0 %v925
  %989 = vmatpush1.bf16.msra.mxu0 %v924
  %990 = vmatprep.subr.bf16.mxu0 %v927
  %991 = vmatpush1.bf16.msra.mxu0 %v926
  %992 = vmatprep.subr.bf16.mxu0 %v929
  %993 = vmatpush1.bf16.msra.mxu0 %v928
  %994 = vmatprep.subr.bf16.mxu0 %v931
  %995 = vmatpush1.bf16.msra.mxu0 %v930
  %996 = vmatprep.subr.bf16.mxu0 %v933
  %997 = vmatpush1.bf16.msra.mxu0 %v932
  %998 = vmatprep.subr.bf16.mxu0 %v935
  %999 = vmatpush1.bf16.msra.mxu0 %v934
  %1000 = vmatprep.subr.bf16.mxu0 %v937
  %1001 = vmatpush1.bf16.msra.mxu0 %v936
  %1002 = vmatprep.subr.bf16.mxu0 %v939
  %1003 = vmatpush1.bf16.msra.mxu0 %v938
  %1004 = vmatprep.subr.bf16.mxu0 %v941
  %1005 = vmatpush1.bf16.msra.mxu0 %v940
  %1006 = vmatprep.subr.bf16.mxu0 %v943
  %1007 = vmatpush1.bf16.msra.mxu0 %v942
  %1008 = vmatprep.subr.bf16.mxu0 %v945
  %1009 = vmatpush1.bf16.msra.mxu0 %v944
  %1010 = vmatprep.subr.bf16.mxu0 %v947
  %1011 = vmatpush1.bf16.msra.mxu0 %v946
  %1012 = vmatprep.mubr.bf16.mxu0 %v78
  %1013 = vmatmul.mubr.bf16.gmra.mrb[0].mxu0 %v77
  %v1014 = vpop.f32.mrb[0].mxu0
  %v1015 = vadd.f32 0.0, %v1014
  %v1016 = vpop.f32.mrb[0].mxu0
  %v1017 = vadd.f32 0.0, %v1016
  %v1018 = vpop.f32.mrb[0].mxu0
  %v1019 = vpop.f32.mrb[0].mxu0
  %1020 = vdwg.mxu0
  %v1053 = vunpack.c.l.b16 %v171
  %v1054 = vunpack.c.h.b16 %v171
  %v1055 = vunpack.c.l.b16 %v172
  %v1056 = vunpack.c.h.b16 %v172
  %v1057 = vunpack.c.l.b16 %v173
  %v1058 = vunpack.c.h.b16 %v173
  %v1059 = vunpack.c.l.b16 %v174
  %v1060 = vunpack.c.h.b16 %v174
  %v1061 = vunpack.c.l.b16 %v175
  %v1062 = vunpack.c.h.b16 %v175
  %v1063 = vunpack.c.l.b16 %v176
  %v1064 = vunpack.c.h.b16 %v176
  %v1065 = vunpack.c.l.b16 %v177
  %v1066 = vunpack.c.h.b16 %v177
  %v1067 = vunpack.c.l.b16 %v178
  %v1068 = vunpack.c.h.b16 %v178
  %v1069 = vunpack.c.l.b16 %v179
  %v1070 = vunpack.c.h.b16 %v179
  %v1071 = vunpack.c.l.b16 %v180
  %v1072 = vunpack.c.h.b16 %v180
  %v1073 = vunpack.c.l.b16 %v181
  %v1074 = vunpack.c.h.b16 %v181
  %v1075 = vunpack.c.l.b16 %v182
  %v1076 = vunpack.c.h.b16 %v182
  %v1077 = vunpack.c.l.b16 %v183
  %v1078 = vunpack.c.h.b16 %v183
  %v1079 = vunpack.c.l.b16 %v184
  %v1080 = vunpack.c.h.b16 %v184
  %v1081 = vunpack.c.l.b16 %v185
  %v1082 = vunpack.c.h.b16 %v185
  %v1083 = vunpack.c.l.b16 %v186
  %v1084 = vunpack.c.h.b16 %v186
  %v1085 = vunpack.c.l.b16 %v187
  %v1086 = vunpack.c.h.b16 %v187
  %v1087 = vunpack.c.l.b16 %v188
  %v1088 = vunpack.c.h.b16 %v188
  %v1089 = vunpack.c.l.b16 %v189
  %v1090 = vunpack.c.h.b16 %v189
  %v1091 = vunpack.c.l.b16 %v190
  %v1092 = vunpack.c.h.b16 %v190
  %v1093 = vunpack.c.l.b16 %v191
  %v1094 = vunpack.c.h.b16 %v191
  %v1095 = vunpack.c.l.b16 %v192
  %v1096 = vunpack.c.h.b16 %v192
  %v1097 = vunpack.c.l.b16 %v193
  %v1098 = vunpack.c.h.b16 %v193
  %v1099 = vunpack.c.l.b16 %v194
  %v1100 = vunpack.c.h.b16 %v194
  %v1101 = vunpack.c.l.b16 %v195
  %v1102 = vunpack.c.h.b16 %v195
  %v1103 = vunpack.c.l.b16 %v196
  %v1104 = vunpack.c.h.b16 %v196
  %v1105 = vunpack.c.l.b16 %v197
  %v1106 = vunpack.c.h.b16 %v197
  %v1107 = vunpack.c.l.b16 %v198
  %v1108 = vunpack.c.h.b16 %v198
  %v1109 = vunpack.c.l.b16 %v199
  %v1110 = vunpack.c.h.b16 %v199
  %v1111 = vunpack.c.l.b16 %v200
  %v1112 = vunpack.c.h.b16 %v200
  %v1113 = vunpack.c.l.b16 %v201
  %v1114 = vunpack.c.h.b16 %v201
  %v1115 = vunpack.c.l.b16 %v202
  %v1116 = vunpack.c.h.b16 %v202
  %v1117 = vpack.c.b16 %v1055, %v1053
  %v1118 = vpack.c.b16 %v1056, %v1054
  %v1119 = vpack.c.b16 %v1059, %v1057
  %v1120 = vpack.c.b16 %v1060, %v1058
  %v1121 = vpack.c.b16 %v1063, %v1061
  %v1122 = vpack.c.b16 %v1064, %v1062
  %v1123 = vpack.c.b16 %v1067, %v1065
  %v1124 = vpack.c.b16 %v1068, %v1066
  %v1125 = vpack.c.b16 %v1071, %v1069
  %v1126 = vpack.c.b16 %v1072, %v1070
  %v1127 = vpack.c.b16 %v1075, %v1073
  %v1128 = vpack.c.b16 %v1076, %v1074
  %v1129 = vpack.c.b16 %v1079, %v1077
  %v1130 = vpack.c.b16 %v1080, %v1078
  %v1131 = vpack.c.b16 %v1083, %v1081
  %v1132 = vpack.c.b16 %v1084, %v1082
  %v1133 = vpack.c.b16 %v1087, %v1085
  %v1134 = vpack.c.b16 %v1088, %v1086
  %v1135 = vpack.c.b16 %v1091, %v1089
  %v1136 = vpack.c.b16 %v1092, %v1090
  %v1137 = vpack.c.b16 %v1095, %v1093
  %v1138 = vpack.c.b16 %v1096, %v1094
  %v1139 = vpack.c.b16 %v1099, %v1097
  %v1140 = vpack.c.b16 %v1100, %v1098
  %v1141 = vpack.c.b16 %v1103, %v1101
  %v1142 = vpack.c.b16 %v1104, %v1102
  %v1143 = vpack.c.b16 %v1107, %v1105
  %v1144 = vpack.c.b16 %v1108, %v1106
  %v1145 = vpack.c.b16 %v1111, %v1109
  %v1146 = vpack.c.b16 %v1112, %v1110
  %v1147 = vpack.c.b16 %v1115, %v1113
  %v1148 = vpack.c.b16 %v1116, %v1114
  %1181 = vmatprep.subr.bf16.mxu0 %v1118
  %1182 = vmatpush1.bf16.msra.mxu0 %v1117
  %1183 = vmatprep.subr.bf16.mxu0 %v1120
  %1184 = vmatpush1.bf16.msra.mxu0 %v1119
  %1185 = vmatprep.subr.bf16.mxu0 %v1122
  %1186 = vmatpush1.bf16.msra.mxu0 %v1121
  %1187 = vmatprep.subr.bf16.mxu0 %v1124
  %1188 = vmatpush1.bf16.msra.mxu0 %v1123
  %1189 = vmatprep.subr.bf16.mxu0 %v1126
  %1190 = vmatpush1.bf16.msra.mxu0 %v1125
  %1191 = vmatprep.subr.bf16.mxu0 %v1128
  %1192 = vmatpush1.bf16.msra.mxu0 %v1127
  %1193 = vmatprep.subr.bf16.mxu0 %v1130
  %1194 = vmatpush1.bf16.msra.mxu0 %v1129
  %1195 = vmatprep.subr.bf16.mxu0 %v1132
  %1196 = vmatpush1.bf16.msra.mxu0 %v1131
  %1197 = vmatprep.subr.bf16.mxu0 %v1134
  %1198 = vmatpush1.bf16.msra.mxu0 %v1133
  %1199 = vmatprep.subr.bf16.mxu0 %v1136
  %1200 = vmatpush1.bf16.msra.mxu0 %v1135
  %1201 = vmatprep.subr.bf16.mxu0 %v1138
  %1202 = vmatpush1.bf16.msra.mxu0 %v1137
  %1203 = vmatprep.subr.bf16.mxu0 %v1140
  %1204 = vmatpush1.bf16.msra.mxu0 %v1139
  %1205 = vmatprep.subr.bf16.mxu0 %v1142
  %1206 = vmatpush1.bf16.msra.mxu0 %v1141
  %1207 = vmatprep.subr.bf16.mxu0 %v1144
  %1208 = vmatpush1.bf16.msra.mxu0 %v1143
  %1209 = vmatprep.subr.bf16.mxu0 %v1146
  %1210 = vmatpush1.bf16.msra.mxu0 %v1145
  %1211 = vmatprep.subr.bf16.mxu0 %v1148
  %1212 = vmatpush1.bf16.msra.mxu0 %v1147
  %1213 = vmatprep.mubr.bf16.mxu0 %v80
  %1214 = vmatmul.mubr.bf16.gmra.mrb[0].mxu0 %v79
  %v1215 = vpop.f32.mrb[0].mxu0
  %v1216 = vadd.f32 0.0, %v1215
  %v1217 = vpop.f32.mrb[0].mxu0
  %v1218 = vadd.f32 0.0, %v1217
  %v1219 = vpop.f32.mrb[0].mxu0
  %v1220 = vpop.f32.mrb[0].mxu0
  %1221 = vdwg.mxu0
  %v1254 = vunpack.c.l.b16 %v203
  %v1255 = vunpack.c.h.b16 %v203
  %v1256 = vunpack.c.l.b16 %v204
  %v1257 = vunpack.c.h.b16 %v204
  %v1258 = vunpack.c.l.b16 %v205
  %v1259 = vunpack.c.h.b16 %v205
  %v1260 = vunpack.c.l.b16 %v206
  %v1261 = vunpack.c.h.b16 %v206
  %v1262 = vunpack.c.l.b16 %v207
  %v1263 = vunpack.c.h.b16 %v207
  %v1264 = vunpack.c.l.b16 %v208
  %v1265 = vunpack.c.h.b16 %v208
  %v1266 = vunpack.c.l.b16 %v209
  %v1267 = vunpack.c.h.b16 %v209
  %v1268 = vunpack.c.l.b16 %v210
  %v1269 = vunpack.c.h.b16 %v210
  %v1270 = vunpack.c.l.b16 %v211
  %v1271 = vunpack.c.h.b16 %v211
  %v1272 = vunpack.c.l.b16 %v212
  %v1273 = vunpack.c.h.b16 %v212
  %v1274 = vunpack.c.l.b16 %v213
  %v1275 = vunpack.c.h.b16 %v213
  %v1276 = vunpack.c.l.b16 %v214
  %v1277 = vunpack.c.h.b16 %v214
  %v1278 = vunpack.c.l.b16 %v215
  %v1279 = vunpack.c.h.b16 %v215
  %v1280 = vunpack.c.l.b16 %v216
  %v1281 = vunpack.c.h.b16 %v216
  %v1282 = vunpack.c.l.b16 %v217
  %v1283 = vunpack.c.h.b16 %v217
  %v1284 = vunpack.c.l.b16 %v218
  %v1285 = vunpack.c.h.b16 %v218
  %v1286 = vunpack.c.l.b16 %v219
  %v1287 = vunpack.c.h.b16 %v219
  %v1288 = vunpack.c.l.b16 %v220
  %v1289 = vunpack.c.h.b16 %v220
  %v1290 = vunpack.c.l.b16 %v221
  %v1291 = vunpack.c.h.b16 %v221
  %v1292 = vunpack.c.l.b16 %v222
  %v1293 = vunpack.c.h.b16 %v222
  %v1294 = vunpack.c.l.b16 %v223
  %v1295 = vunpack.c.h.b16 %v223
  %v1296 = vunpack.c.l.b16 %v224
  %v1297 = vunpack.c.h.b16 %v224
  %v1298 = vunpack.c.l.b16 %v225
  %v1299 = vunpack.c.h.b16 %v225
  %v1300 = vunpack.c.l.b16 %v226
  %v1301 = vunpack.c.h.b16 %v226
  %v1302 = vunpack.c.l.b16 %v227
  %v1303 = vunpack.c.h.b16 %v227
  %v1304 = vunpack.c.l.b16 %v228
  %v1305 = vunpack.c.h.b16 %v228
  %v1306 = vunpack.c.l.b16 %v229
  %v1307 = vunpack.c.h.b16 %v229
  %v1308 = vunpack.c.l.b16 %v230
  %v1309 = vunpack.c.h.b16 %v230
  %v1310 = vunpack.c.l.b16 %v231
  %v1311 = vunpack.c.h.b16 %v231
  %v1312 = vunpack.c.l.b16 %v232
  %v1313 = vunpack.c.h.b16 %v232
  %v1314 = vunpack.c.l.b16 %v233
  %v1315 = vunpack.c.h.b16 %v233
  %v1316 = vunpack.c.l.b16 %v234
  %v1317 = vunpack.c.h.b16 %v234
  %v1318 = vpack.c.b16 %v1256, %v1254
  %v1319 = vpack.c.b16 %v1257, %v1255
  %v1320 = vpack.c.b16 %v1260, %v1258
  %v1321 = vpack.c.b16 %v1261, %v1259
  %v1322 = vpack.c.b16 %v1264, %v1262
  %v1323 = vpack.c.b16 %v1265, %v1263
  %v1324 = vpack.c.b16 %v1268, %v1266
  %v1325 = vpack.c.b16 %v1269, %v1267
  %v1326 = vpack.c.b16 %v1272, %v1270
  %v1327 = vpack.c.b16 %v1273, %v1271
  %v1328 = vpack.c.b16 %v1276, %v1274
  %v1329 = vpack.c.b16 %v1277, %v1275
  %v1330 = vpack.c.b16 %v1280, %v1278
  %v1331 = vpack.c.b16 %v1281, %v1279
  %v1332 = vpack.c.b16 %v1284, %v1282
  %v1333 = vpack.c.b16 %v1285, %v1283
  %v1334 = vpack.c.b16 %v1288, %v1286
  %v1335 = vpack.c.b16 %v1289, %v1287
  %v1336 = vpack.c.b16 %v1292, %v1290
  %v1337 = vpack.c.b16 %v1293, %v1291
  %v1338 = vpack.c.b16 %v1296, %v1294
  %v1339 = vpack.c.b16 %v1297, %v1295
  %v1340 = vpack.c.b16 %v1300, %v1298
  %v1341 = vpack.c.b16 %v1301, %v1299
  %v1342 = vpack.c.b16 %v1304, %v1302
  %v1343 = vpack.c.b16 %v1305, %v1303
  %v1344 = vpack.c.b16 %v1308, %v1306
  %v1345 = vpack.c.b16 %v1309, %v1307
  %v1346 = vpack.c.b16 %v1312, %v1310
  %v1347 = vpack.c.b16 %v1313, %v1311
  %v1348 = vpack.c.b16 %v1316, %v1314
  %v1349 = vpack.c.b16 %v1317, %v1315
  %1382 = vmatprep.subr.bf16.mxu0 %v1319
  %1383 = vmatpush1.bf16.msra.mxu0 %v1318
  %1384 = vmatprep.subr.bf16.mxu0 %v1321
  %1385 = vmatpush1.bf16.msra.mxu0 %v1320
  %1386 = vmatprep.subr.bf16.mxu0 %v1323
  %1387 = vmatpush1.bf16.msra.mxu0 %v1322
  %1388 = vmatprep.subr.bf16.mxu0 %v1325
  %1389 = vmatpush1.bf16.msra.mxu0 %v1324
  %1390 = vmatprep.subr.bf16.mxu0 %v1327
  %1391 = vmatpush1.bf16.msra.mxu0 %v1326
  %1392 = vmatprep.subr.bf16.mxu0 %v1329
  %1393 = vmatpush1.bf16.msra.mxu0 %v1328
  %1394 = vmatprep.subr.bf16.mxu0 %v1331
  %1395 = vmatpush1.bf16.msra.mxu0 %v1330
  %1396 = vmatprep.subr.bf16.mxu0 %v1333
  %1397 = vmatpush1.bf16.msra.mxu0 %v1332
  %1398 = vmatprep.subr.bf16.mxu0 %v1335
  %1399 = vmatpush1.bf16.msra.mxu0 %v1334
  %1400 = vmatprep.subr.bf16.mxu0 %v1337
  %1401 = vmatpush1.bf16.msra.mxu0 %v1336
  %1402 = vmatprep.subr.bf16.mxu0 %v1339
  %1403 = vmatpush1.bf16.msra.mxu0 %v1338
  %1404 = vmatprep.subr.bf16.mxu0 %v1341
  %1405 = vmatpush1.bf16.msra.mxu0 %v1340
  %1406 = vmatprep.subr.bf16.mxu0 %v1343
  %1407 = vmatpush1.bf16.msra.mxu0 %v1342
  %1408 = vmatprep.subr.bf16.mxu0 %v1345
  %1409 = vmatpush1.bf16.msra.mxu0 %v1344
  %1410 = vmatprep.subr.bf16.mxu0 %v1347
  %1411 = vmatpush1.bf16.msra.mxu0 %v1346
  %1412 = vmatprep.subr.bf16.mxu0 %v1349
  %1413 = vmatpush1.bf16.msra.mxu0 %v1348
  %1414 = vmatprep.mubr.bf16.mxu0 %v82
  %1415 = vmatmul.mubr.bf16.gmra.mrb[0].mxu0 %v81
  %v1416 = vpop.f32.mrb[0].mxu0
  %v1417 = vadd.f32 0.0, %v1416
  %v1418 = vpop.f32.mrb[0].mxu0
  %v1419 = vadd.f32 0.0, %v1418
  %v1420 = vpop.f32.mrb[0].mxu0
  %v1421 = vpop.f32.mrb[0].mxu0
  %1422 = vdwg.mxu0
  %v1455 = vunpack.c.l.b16 %v235
  %v1456 = vunpack.c.h.b16 %v235
  %v1457 = vunpack.c.l.b16 %v236
  %v1458 = vunpack.c.h.b16 %v236
  %v1459 = vunpack.c.l.b16 %v237
  %v1460 = vunpack.c.h.b16 %v237
  %v1461 = vunpack.c.l.b16 %v238
  %v1462 = vunpack.c.h.b16 %v238
  %v1463 = vunpack.c.l.b16 %v239
  %v1464 = vunpack.c.h.b16 %v239
  %v1465 = vunpack.c.l.b16 %v240
  %v1466 = vunpack.c.h.b16 %v240
  %v1467 = vunpack.c.l.b16 %v241
  %v1468 = vunpack.c.h.b16 %v241
  %v1469 = vunpack.c.l.b16 %v242
  %v1470 = vunpack.c.h.b16 %v242
  %v1471 = vunpack.c.l.b16 %v243
  %v1472 = vunpack.c.h.b16 %v243
  %v1473 = vunpack.c.l.b16 %v244
  %v1474 = vunpack.c.h.b16 %v244
  %v1475 = vunpack.c.l.b16 %v245
  %v1476 = vunpack.c.h.b16 %v245
  %v1477 = vunpack.c.l.b16 %v246
  %v1478 = vunpack.c.h.b16 %v246
  %v1479 = vunpack.c.l.b16 %v247
  %v1480 = vunpack.c.h.b16 %v247
  %v1481 = vunpack.c.l.b16 %v248
  %v1482 = vunpack.c.h.b16 %v248
  %v1483 = vunpack.c.l.b16 %v249
  %v1484 = vunpack.c.h.b16 %v249
  %v1485 = vunpack.c.l.b16 %v250
  %v1486 = vunpack.c.h.b16 %v250
  %v1487 = vunpack.c.l.b16 %v251
  %v1488 = vunpack.c.h.b16 %v251
  %v1489 = vunpack.c.l.b16 %v252
  %v1490 = vunpack.c.h.b16 %v252
  %v1491 = vunpack.c.l.b16 %v253
  %v1492 = vunpack.c.h.b16 %v253
  %v1493 = vunpack.c.l.b16 %v254
  %v1494 = vunpack.c.h.b16 %v254
  %v1495 = vunpack.c.l.b16 %v255
  %v1496 = vunpack.c.h.b16 %v255
  %v1497 = vunpack.c.l.b16 %v256
  %v1498 = vunpack.c.h.b16 %v256
  %v1499 = vunpack.c.l.b16 %v257
  %v1500 = vunpack.c.h.b16 %v257
  %v1501 = vunpack.c.l.b16 %v258
  %v1502 = vunpack.c.h.b16 %v258
  %v1503 = vunpack.c.l.b16 %v259
  %v1504 = vunpack.c.h.b16 %v259
  %v1505 = vunpack.c.l.b16 %v260
  %v1506 = vunpack.c.h.b16 %v260
  %v1507 = vunpack.c.l.b16 %v261
  %v1508 = vunpack.c.h.b16 %v261
  %v1509 = vunpack.c.l.b16 %v262
  %v1510 = vunpack.c.h.b16 %v262
  %v1511 = vunpack.c.l.b16 %v263
  %v1512 = vunpack.c.h.b16 %v263
  %v1513 = vunpack.c.l.b16 %v264
  %v1514 = vunpack.c.h.b16 %v264
  %v1515 = vunpack.c.l.b16 %v265
  %v1516 = vunpack.c.h.b16 %v265
  %v1517 = vunpack.c.l.b16 %v266
  %v1518 = vunpack.c.h.b16 %v266
  %v1519 = vpack.c.b16 %v1457, %v1455
  %v1520 = vpack.c.b16 %v1458, %v1456
  %v1521 = vpack.c.b16 %v1461, %v1459
  %v1522 = vpack.c.b16 %v1462, %v1460
  %v1523 = vpack.c.b16 %v1465, %v1463
  %v1524 = vpack.c.b16 %v1466, %v1464
  %v1525 = vpack.c.b16 %v1469, %v1467
  %v1526 = vpack.c.b16 %v1470, %v1468
  %v1527 = vpack.c.b16 %v1473, %v1471
  %v1528 = vpack.c.b16 %v1474, %v1472
  %v1529 = vpack.c.b16 %v1477, %v1475
  %v1530 = vpack.c.b16 %v1478, %v1476
  %v1531 = vpack.c.b16 %v1481, %v1479
  %v1532 = vpack.c.b16 %v1482, %v1480
  %v1533 = vpack.c.b16 %v1485, %v1483
  %v1534 = vpack.c.b16 %v1486, %v1484
  %v1535 = vpack.c.b16 %v1489, %v1487
  %v1536 = vpack.c.b16 %v1490, %v1488
  %v1537 = vpack.c.b16 %v1493, %v1491
  %v1538 = vpack.c.b16 %v1494, %v1492
  %v1539 = vpack.c.b16 %v1497, %v1495
  %v1540 = vpack.c.b16 %v1498, %v1496
  %v1541 = vpack.c.b16 %v1501, %v1499
  %v1542 = vpack.c.b16 %v1502, %v1500
  %v1543 = vpack.c.b16 %v1505, %v1503
  %v1544 = vpack.c.b16 %v1506, %v1504
  %v1545 = vpack.c.b16 %v1509, %v1507
  %v1546 = vpack.c.b16 %v1510, %v1508
  %v1547 = vpack.c.b16 %v1513, %v1511
  %v1548 = vpack.c.b16 %v1514, %v1512
  %v1549 = vpack.c.b16 %v1517, %v1515
  %v1550 = vpack.c.b16 %v1518, %v1516
  %1583 = vmatprep.subr.bf16.mxu0 %v1520
  %1584 = vmatpush1.bf16.msra.mxu0 %v1519
  %1585 = vmatprep.subr.bf16.mxu0 %v1522
  %1586 = vmatpush1.bf16.msra.mxu0 %v1521
  %1587 = vmatprep.subr.bf16.mxu0 %v1524
  %1588 = vmatpush1.bf16.msra.mxu0 %v1523
  %1589 = vmatprep.subr.bf16.mxu0 %v1526
  %1590 = vmatpush1.bf16.msra.mxu0 %v1525
  %1591 = vmatprep.subr.bf16.mxu0 %v1528
  %1592 = vmatpush1.bf16.msra.mxu0 %v1527
  %1593 = vmatprep.subr.bf16.mxu0 %v1530
  %1594 = vmatpush1.bf16.msra.mxu0 %v1529
  %1595 = vmatprep.subr.bf16.mxu0 %v1532
  %1596 = vmatpush1.bf16.msra.mxu0 %v1531
  %1597 = vmatprep.subr.bf16.mxu0 %v1534
  %1598 = vmatpush1.bf16.msra.mxu0 %v1533
  %1599 = vmatprep.subr.bf16.mxu0 %v1536
  %1600 = vmatpush1.bf16.msra.mxu0 %v1535
  %1601 = vmatprep.subr.bf16.mxu0 %v1538
  %1602 = vmatpush1.bf16.msra.mxu0 %v1537
  %1603 = vmatprep.subr.bf16.mxu0 %v1540
  %1604 = vmatpush1.bf16.msra.mxu0 %v1539
  %1605 = vmatprep.subr.bf16.mxu0 %v1542
  %1606 = vmatpush1.bf16.msra.mxu0 %v1541
  %1607 = vmatprep.subr.bf16.mxu0 %v1544
  %1608 = vmatpush1.bf16.msra.mxu0 %v1543
  %1609 = vmatprep.subr.bf16.mxu0 %v1546
  %1610 = vmatpush1.bf16.msra.mxu0 %v1545
  %1611 = vmatprep.subr.bf16.mxu0 %v1548
  %1612 = vmatpush1.bf16.msra.mxu0 %v1547
  %1613 = vmatprep.subr.bf16.mxu0 %v1550
  %1614 = vmatpush1.bf16.msra.mxu0 %v1549
  %1615 = vmatprep.mubr.bf16.mxu0 %v84
  %1616 = vmatmul.mubr.bf16.gmra.mrb[0].mxu0 %v83
  %v1617 = vpop.f32.mrb[0].mxu0
  %v1618 = vadd.f32 0.0, %v1617
  %v1619 = vpop.f32.mrb[0].mxu0
  %v1620 = vadd.f32 0.0, %v1619
  %v1621 = vpop.f32.mrb[0].mxu0
  %v1622 = vpop.f32.mrb[0].mxu0
  %1623 = vdwg.mxu0
  %v1656 = vunpack.c.l.b16 %v267
  %v1657 = vunpack.c.h.b16 %v267
  %v1658 = vunpack.c.l.b16 %v268
  %v1659 = vunpack.c.h.b16 %v268
  %v1660 = vunpack.c.l.b16 %v269
  %v1661 = vunpack.c.h.b16 %v269
  %v1662 = vunpack.c.l.b16 %v270
  %v1663 = vunpack.c.h.b16 %v270
  %v1664 = vunpack.c.l.b16 %v271
  %v1665 = vunpack.c.h.b16 %v271
  %v1666 = vunpack.c.l.b16 %v272
  %v1667 = vunpack.c.h.b16 %v272
  %v1668 = vunpack.c.l.b16 %v273
  %v1669 = vunpack.c.h.b16 %v273
  %v1670 = vunpack.c.l.b16 %v274
  %v1671 = vunpack.c.h.b16 %v274
  %v1672 = vunpack.c.l.b16 %v275
  %v1673 = vunpack.c.h.b16 %v275
  %v1674 = vunpack.c.l.b16 %v276
  %v1675 = vunpack.c.h.b16 %v276
  %v1676 = vunpack.c.l.b16 %v277
  %v1677 = vunpack.c.h.b16 %v277
  %v1678 = vunpack.c.l.b16 %v278
  %v1679 = vunpack.c.h.b16 %v278
  %v1680 = vunpack.c.l.b16 %v279
  %v1681 = vunpack.c.h.b16 %v279
  %v1682 = vunpack.c.l.b16 %v280
  %v1683 = vunpack.c.h.b16 %v280
  %v1684 = vunpack.c.l.b16 %v281
  %v1685 = vunpack.c.h.b16 %v281
  %v1686 = vunpack.c.l.b16 %v282
  %v1687 = vunpack.c.h.b16 %v282
  %v1688 = vunpack.c.l.b16 %v283
  %v1689 = vunpack.c.h.b16 %v283
  %v1690 = vunpack.c.l.b16 %v284
  %v1691 = vunpack.c.h.b16 %v284
  %v1692 = vunpack.c.l.b16 %v285
  %v1693 = vunpack.c.h.b16 %v285
  %v1694 = vunpack.c.l.b16 %v286
  %v1695 = vunpack.c.h.b16 %v286
  %v1696 = vunpack.c.l.b16 %v287
  %v1697 = vunpack.c.h.b16 %v287
  %v1698 = vunpack.c.l.b16 %v288
  %v1699 = vunpack.c.h.b16 %v288
  %v1700 = vunpack.c.l.b16 %v289
  %v1701 = vunpack.c.h.b16 %v289
  %v1702 = vunpack.c.l.b16 %v290
  %v1703 = vunpack.c.h.b16 %v290
  %v1704 = vunpack.c.l.b16 %v291
  %v1705 = vunpack.c.h.b16 %v291
  %v1706 = vunpack.c.l.b16 %v292
  %v1707 = vunpack.c.h.b16 %v292
  %v1708 = vunpack.c.l.b16 %v293
  %v1709 = vunpack.c.h.b16 %v293
  %v1710 = vunpack.c.l.b16 %v294
  %v1711 = vunpack.c.h.b16 %v294
  %v1712 = vunpack.c.l.b16 %v295
  %v1713 = vunpack.c.h.b16 %v295
  %v1714 = vunpack.c.l.b16 %v296
  %v1715 = vunpack.c.h.b16 %v296
  %v1716 = vunpack.c.l.b16 %v297
  %v1717 = vunpack.c.h.b16 %v297
  %v1718 = vunpack.c.l.b16 %v298
  %v1719 = vunpack.c.h.b16 %v298
  %v1720 = vpack.c.b16 %v1658, %v1656
  %v1721 = vpack.c.b16 %v1659, %v1657
  %v1722 = vpack.c.b16 %v1662, %v1660
  %v1723 = vpack.c.b16 %v1663, %v1661
  %v1724 = vpack.c.b16 %v1666, %v1664
  %v1725 = vpack.c.b16 %v1667, %v1665
  %v1726 = vpack.c.b16 %v1670, %v1668
  %v1727 = vpack.c.b16 %v1671, %v1669
  %v1728 = vpack.c.b16 %v1674, %v1672
  %v1729 = vpack.c.b16 %v1675, %v1673
  %v1730 = vpack.c.b16 %v1678, %v1676
  %v1731 = vpack.c.b16 %v1679, %v1677
  %v1732 = vpack.c.b16 %v1682, %v1680
  %v1733 = vpack.c.b16 %v1683, %v1681
  %v1734 = vpack.c.b16 %v1686, %v1684
  %v1735 = vpack.c.b16 %v1687, %v1685
  %v1736 = vpack.c.b16 %v1690, %v1688
  %v1737 = vpack.c.b16 %v1691, %v1689
  %v1738 = vpack.c.b16 %v1694, %v1692
  %v1739 = vpack.c.b16 %v1695, %v1693
  %v1740 = vpack.c.b16 %v1698, %v1696
  %v1741 = vpack.c.b16 %v1699, %v1697
  %v1742 = vpack.c.b16 %v1702, %v1700
  %v1743 = vpack.c.b16 %v1703, %v1701
  %v1744 = vpack.c.b16 %v1706, %v1704
  %v1745 = vpack.c.b16 %v1707, %v1705
  %v1746 = vpack.c.b16 %v1710, %v1708
  %v1747 = vpack.c.b16 %v1711, %v1709
  %v1748 = vpack.c.b16 %v1714, %v1712
  %v1749 = vpack.c.b16 %v1715, %v1713
  %v1750 = vpack.c.b16 %v1718, %v1716
  %v1751 = vpack.c.b16 %v1719, %v1717
  %1784 = vmatprep.subr.bf16.mxu0 %v1721
  %1785 = vmatpush1.bf16.msra.mxu0 %v1720
  %1786 = vmatprep.subr.bf16.mxu0 %v1723
  %1787 = vmatpush1.bf16.msra.mxu0 %v1722
  %1788 = vmatprep.subr.bf16.mxu0 %v1725
  %1789 = vmatpush1.bf16.msra.mxu0 %v1724
  %1790 = vmatprep.subr.bf16.mxu0 %v1727
  %1791 = vmatpush1.bf16.msra.mxu0 %v1726
  %1792 = vmatprep.subr.bf16.mxu0 %v1729
  %1793 = vmatpush1.bf16.msra.mxu0 %v1728
  %1794 = vmatprep.subr.bf16.mxu0 %v1731
  %1795 = vmatpush1.bf16.msra.mxu0 %v1730
  %1796 = vmatprep.subr.bf16.mxu0 %v1733
  %1797 = vmatpush1.bf16.msra.mxu0 %v1732
  %1798 = vmatprep.subr.bf16.mxu0 %v1735
  %1799 = vmatpush1.bf16.msra.mxu0 %v1734
  %1800 = vmatprep.subr.bf16.mxu0 %v1737
  %1801 = vmatpush1.bf16.msra.mxu0 %v1736
  %1802 = vmatprep.subr.bf16.mxu0 %v1739
  %1803 = vmatpush1.bf16.msra.mxu0 %v1738
  %1804 = vmatprep.subr.bf16.mxu0 %v1741
  %1805 = vmatpush1.bf16.msra.mxu0 %v1740
  %1806 = vmatprep.subr.bf16.mxu0 %v1743
  %1807 = vmatpush1.bf16.msra.mxu0 %v1742
  %1808 = vmatprep.subr.bf16.mxu0 %v1745
  %1809 = vmatpush1.bf16.msra.mxu0 %v1744
  %1810 = vmatprep.subr.bf16.mxu0 %v1747
  %1811 = vmatpush1.bf16.msra.mxu0 %v1746
  %1812 = vmatprep.subr.bf16.mxu0 %v1749
  %1813 = vmatpush1.bf16.msra.mxu0 %v1748
  %1814 = vmatprep.subr.bf16.mxu0 %v1751
  %1815 = vmatpush1.bf16.msra.mxu0 %v1750
  %1816 = vmatprep.mubr.bf16.mxu0 %v86
  %1817 = vmatmul.mubr.bf16.gmra.mrb[0].mxu0 %v85
  %v1818 = vpop.f32.mrb[0].mxu0
  %v1819 = vadd.f32 0.0, %v1818
  %v1820 = vpop.f32.mrb[0].mxu0
  %v1821 = vadd.f32 0.0, %v1820
  %v1822 = vpop.f32.mrb[0].mxu0
  %v1823 = vpop.f32.mrb[0].mxu0
  %1824 = vdwg.mxu0
  %v1857 = vunpack.c.l.b16 %v299
  %v1858 = vunpack.c.h.b16 %v299
  %v1859 = vunpack.c.l.b16 %v300
  %v1860 = vunpack.c.h.b16 %v300
  %v1861 = vunpack.c.l.b16 %v301
  %v1862 = vunpack.c.h.b16 %v301
  %v1863 = vunpack.c.l.b16 %v302
  %v1864 = vunpack.c.h.b16 %v302
  %v1865 = vunpack.c.l.b16 %v303
  %v1866 = vunpack.c.h.b16 %v303
  %v1867 = vunpack.c.l.b16 %v304
  %v1868 = vunpack.c.h.b16 %v304
  %v1869 = vunpack.c.l.b16 %v305
  %v1870 = vunpack.c.h.b16 %v305
  %v1871 = vunpack.c.l.b16 %v306
  %v1872 = vunpack.c.h.b16 %v306
  %v1873 = vunpack.c.l.b16 %v307
  %v1874 = vunpack.c.h.b16 %v307
  %v1875 = vunpack.c.l.b16 %v308
  %v1876 = vunpack.c.h.b16 %v308
  %v1877 = vunpack.c.l.b16 %v309
  %v1878 = vunpack.c.h.b16 %v309
  %v1879 = vunpack.c.l.b16 %v310
  %v1880 = vunpack.c.h.b16 %v310
  %v1881 = vunpack.c.l.b16 %v311
  %v1882 = vunpack.c.h.b16 %v311
  %v1883 = vunpack.c.l.b16 %v312
  %v1884 = vunpack.c.h.b16 %v312
  %v1885 = vunpack.c.l.b16 %v313
  %v1886 = vunpack.c.h.b16 %v313
  %v1887 = vunpack.c.l.b16 %v314
  %v1888 = vunpack.c.h.b16 %v314
  %v1889 = vunpack.c.l.b16 %v315
  %v1890 = vunpack.c.h.b16 %v315
  %v1891 = vunpack.c.l.b16 %v316
  %v1892 = vunpack.c.h.b16 %v316
  %v1893 = vunpack.c.l.b16 %v317
  %v1894 = vunpack.c.h.b16 %v317
  %v1895 = vunpack.c.l.b16 %v318
  %v1896 = vunpack.c.h.b16 %v318
  %v1897 = vunpack.c.l.b16 %v319
  %v1898 = vunpack.c.h.b16 %v319
  %v1899 = vunpack.c.l.b16 %v320
  %v1900 = vunpack.c.h.b16 %v320
  %v1901 = vunpack.c.l.b16 %v321
  %v1902 = vunpack.c.h.b16 %v321
  %v1903 = vunpack.c.l.b16 %v322
  %v1904 = vunpack.c.h.b16 %v322
  %v1905 = vunpack.c.l.b16 %v323
  %v1906 = vunpack.c.h.b16 %v323
  %v1907 = vunpack.c.l.b16 %v324
  %v1908 = vunpack.c.h.b16 %v324
  %v1909 = vunpack.c.l.b16 %v325
  %v1910 = vunpack.c.h.b16 %v325
  %v1911 = vunpack.c.l.b16 %v326
  %v1912 = vunpack.c.h.b16 %v326
  %v1913 = vunpack.c.l.b16 %v327
  %v1914 = vunpack.c.h.b16 %v327
  %v1915 = vunpack.c.l.b16 %v328
  %v1916 = vunpack.c.h.b16 %v328
  %v1917 = vunpack.c.l.b16 %v329
  %v1918 = vunpack.c.h.b16 %v329
  %v1919 = vunpack.c.l.b16 %v330
  %v1920 = vunpack.c.h.b16 %v330
  %v1921 = vpack.c.b16 %v1859, %v1857
  %v1922 = vpack.c.b16 %v1860, %v1858
  %v1923 = vpack.c.b16 %v1863, %v1861
  %v1924 = vpack.c.b16 %v1864, %v1862
  %v1925 = vpack.c.b16 %v1867, %v1865
  %v1926 = vpack.c.b16 %v1868, %v1866
  %v1927 = vpack.c.b16 %v1871, %v1869
  %v1928 = vpack.c.b16 %v1872, %v1870
  %v1929 = vpack.c.b16 %v1875, %v1873
  %v1930 = vpack.c.b16 %v1876, %v1874
  %v1931 = vpack.c.b16 %v1879, %v1877
  %v1932 = vpack.c.b16 %v1880, %v1878
  %v1933 = vpack.c.b16 %v1883, %v1881
  %v1934 = vpack.c.b16 %v1884, %v1882
  %v1935 = vpack.c.b16 %v1887, %v1885
  %v1936 = vpack.c.b16 %v1888, %v1886
  %v1937 = vpack.c.b16 %v1891, %v1889
  %v1938 = vpack.c.b16 %v1892, %v1890
  %v1939 = vpack.c.b16 %v1895, %v1893
  %v1940 = vpack.c.b16 %v1896, %v1894
  %v1941 = vpack.c.b16 %v1899, %v1897
  %v1942 = vpack.c.b16 %v1900, %v1898
  %v1943 = vpack.c.b16 %v1903, %v1901
  %v1944 = vpack.c.b16 %v1904, %v1902
  %v1945 = vpack.c.b16 %v1907, %v1905
  %v1946 = vpack.c.b16 %v1908, %v1906
  %v1947 = vpack.c.b16 %v1911, %v1909
  %v1948 = vpack.c.b16 %v1912, %v1910
  %v1949 = vpack.c.b16 %v1915, %v1913
  %v1950 = vpack.c.b16 %v1916, %v1914
  %v1951 = vpack.c.b16 %v1919, %v1917
  %v1952 = vpack.c.b16 %v1920, %v1918
  %1985 = vmatprep.subr.bf16.mxu0 %v1922
  %1986 = vmatpush1.bf16.msra.mxu0 %v1921
  %1987 = vmatprep.subr.bf16.mxu0 %v1924
  %1988 = vmatpush1.bf16.msra.mxu0 %v1923
  %1989 = vmatprep.subr.bf16.mxu0 %v1926
  %1990 = vmatpush1.bf16.msra.mxu0 %v1925
  %1991 = vmatprep.subr.bf16.mxu0 %v1928
  %1992 = vmatpush1.bf16.msra.mxu0 %v1927
  %1993 = vmatprep.subr.bf16.mxu0 %v1930
  %1994 = vmatpush1.bf16.msra.mxu0 %v1929
  %1995 = vmatprep.subr.bf16.mxu0 %v1932
  %1996 = vmatpush1.bf16.msra.mxu0 %v1931
  %1997 = vmatprep.subr.bf16.mxu0 %v1934
  %1998 = vmatpush1.bf16.msra.mxu0 %v1933
  %1999 = vmatprep.subr.bf16.mxu0 %v1936
  %2000 = vmatpush1.bf16.msra.mxu0 %v1935
  %2001 = vmatprep.subr.bf16.mxu0 %v1938
  %2002 = vmatpush1.bf16.msra.mxu0 %v1937
  %2003 = vmatprep.subr.bf16.mxu0 %v1940
  %2004 = vmatpush1.bf16.msra.mxu0 %v1939
  %2005 = vmatprep.subr.bf16.mxu0 %v1942
  %2006 = vmatpush1.bf16.msra.mxu0 %v1941
  %2007 = vmatprep.subr.bf16.mxu0 %v1944
  %2008 = vmatpush1.bf16.msra.mxu0 %v1943
  %2009 = vmatprep.subr.bf16.mxu0 %v1946
  %2010 = vmatpush1.bf16.msra.mxu0 %v1945
  %2011 = vmatprep.subr.bf16.mxu0 %v1948
  %2012 = vmatpush1.bf16.msra.mxu0 %v1947
  %2013 = vmatprep.subr.bf16.mxu0 %v1950
  %2014 = vmatpush1.bf16.msra.mxu0 %v1949
  %2015 = vmatprep.subr.bf16.mxu0 %v1952
  %2016 = vmatpush1.bf16.msra.mxu0 %v1951
  %2017 = vmatprep.mubr.bf16.mxu0 %v88
  %2018 = vmatmul.mubr.bf16.gmra.mrb[0].mxu0 %v87
  %v2019 = vpop.f32.mrb[0].mxu0
  %v2020 = vadd.f32 0.0, %v2019
  %v2021 = vpop.f32.mrb[0].mxu0
  %v2022 = vadd.f32 0.0, %v2021
  %v2023 = vpop.f32.mrb[0].mxu0
  %v2024 = vpop.f32.mrb[0].mxu0
  %2025 = vdwg.mxu0
  %v2058 = vunpack.c.l.b16 %v331
  %v2059 = vunpack.c.h.b16 %v331
  %v2060 = vunpack.c.l.b16 %v332
  %v2061 = vunpack.c.h.b16 %v332
  %v2062 = vunpack.c.l.b16 %v333
  %v2063 = vunpack.c.h.b16 %v333
  %v2064 = vunpack.c.l.b16 %v334
  %v2065 = vunpack.c.h.b16 %v334
  %v2066 = vunpack.c.l.b16 %v335
  %v2067 = vunpack.c.h.b16 %v335
  %v2068 = vunpack.c.l.b16 %v336
  %v2069 = vunpack.c.h.b16 %v336
  %v2070 = vunpack.c.l.b16 %v337
  %v2071 = vunpack.c.h.b16 %v337
  %v2072 = vunpack.c.l.b16 %v338
  %v2073 = vunpack.c.h.b16 %v338
  %v2074 = vunpack.c.l.b16 %v339
  %v2075 = vunpack.c.h.b16 %v339
  %v2076 = vunpack.c.l.b16 %v340
  %v2077 = vunpack.c.h.b16 %v340
  %v2078 = vunpack.c.l.b16 %v341
  %v2079 = vunpack.c.h.b16 %v341
  %v2080 = vunpack.c.l.b16 %v342
  %v2081 = vunpack.c.h.b16 %v342
  %v2082 = vunpack.c.l.b16 %v343
  %v2083 = vunpack.c.h.b16 %v343
  %v2084 = vunpack.c.l.b16 %v344
  %v2085 = vunpack.c.h.b16 %v344
  %v2086 = vunpack.c.l.b16 %v345
  %v2087 = vunpack.c.h.b16 %v345
  %v2088 = vunpack.c.l.b16 %v346
  %v2089 = vunpack.c.h.b16 %v346
  %v2090 = vunpack.c.l.b16 %v347
  %v2091 = vunpack.c.h.b16 %v347
  %v2092 = vunpack.c.l.b16 %v348
  %v2093 = vunpack.c.h.b16 %v348
  %v2094 = vunpack.c.l.b16 %v349
  %v2095 = vunpack.c.h.b16 %v349
  %v2096 = vunpack.c.l.b16 %v350
  %v2097 = vunpack.c.h.b16 %v350
  %v2098 = vunpack.c.l.b16 %v351
  %v2099 = vunpack.c.h.b16 %v351
  %v2100 = vunpack.c.l.b16 %v352
  %v2101 = vunpack.c.h.b16 %v352
  %v2102 = vunpack.c.l.b16 %v353
  %v2103 = vunpack.c.h.b16 %v353
  %v2104 = vunpack.c.l.b16 %v354
  %v2105 = vunpack.c.h.b16 %v354
  %v2106 = vunpack.c.l.b16 %v355
  %v2107 = vunpack.c.h.b16 %v355
  %v2108 = vunpack.c.l.b16 %v356
  %v2109 = vunpack.c.h.b16 %v356
  %v2110 = vunpack.c.l.b16 %v357
  %v2111 = vunpack.c.h.b16 %v357
  %v2112 = vunpack.c.l.b16 %v358
  %v2113 = vunpack.c.h.b16 %v358
  %v2114 = vunpack.c.l.b16 %v359
  %v2115 = vunpack.c.h.b16 %v359
  %v2116 = vunpack.c.l.b16 %v360
  %v2117 = vunpack.c.h.b16 %v360
  %v2118 = vunpack.c.l.b16 %v361
  %v2119 = vunpack.c.h.b16 %v361
  %v2120 = vunpack.c.l.b16 %v362
  %v2121 = vunpack.c.h.b16 %v362
  %v2122 = vpack.c.b16 %v2060, %v2058
  %v2123 = vpack.c.b16 %v2061, %v2059
  %v2124 = vpack.c.b16 %v2064, %v2062
  %v2125 = vpack.c.b16 %v2065, %v2063
  %v2126 = vpack.c.b16 %v2068, %v2066
  %v2127 = vpack.c.b16 %v2069, %v2067
  %v2128 = vpack.c.b16 %v2072, %v2070
  %v2129 = vpack.c.b16 %v2073, %v2071
  %v2130 = vpack.c.b16 %v2076, %v2074
  %v2131 = vpack.c.b16 %v2077, %v2075
  %v2132 = vpack.c.b16 %v2080, %v2078
  %v2133 = vpack.c.b16 %v2081, %v2079
  %v2134 = vpack.c.b16 %v2084, %v2082
  %v2135 = vpack.c.b16 %v2085, %v2083
  %v2136 = vpack.c.b16 %v2088, %v2086
  %v2137 = vpack.c.b16 %v2089, %v2087
  %v2138 = vpack.c.b16 %v2092, %v2090
  %v2139 = vpack.c.b16 %v2093, %v2091
  %v2140 = vpack.c.b16 %v2096, %v2094
  %v2141 = vpack.c.b16 %v2097, %v2095
  %v2142 = vpack.c.b16 %v2100, %v2098
  %v2143 = vpack.c.b16 %v2101, %v2099
  %v2144 = vpack.c.b16 %v2104, %v2102
  %v2145 = vpack.c.b16 %v2105, %v2103
  %v2146 = vpack.c.b16 %v2108, %v2106
  %v2147 = vpack.c.b16 %v2109, %v2107
  %v2148 = vpack.c.b16 %v2112, %v2110
  %v2149 = vpack.c.b16 %v2113, %v2111
  %v2150 = vpack.c.b16 %v2116, %v2114
  %v2151 = vpack.c.b16 %v2117, %v2115
  %v2152 = vpack.c.b16 %v2120, %v2118
  %v2153 = vpack.c.b16 %v2121, %v2119
  %2186 = vmatprep.subr.bf16.mxu0 %v2123
  %2187 = vmatpush1.bf16.msra.mxu0 %v2122
  %2188 = vmatprep.subr.bf16.mxu0 %v2125
  %2189 = vmatpush1.bf16.msra.mxu0 %v2124
  %2190 = vmatprep.subr.bf16.mxu0 %v2127
  %2191 = vmatpush1.bf16.msra.mxu0 %v2126
  %2192 = vmatprep.subr.bf16.mxu0 %v2129
  %2193 = vmatpush1.bf16.msra.mxu0 %v2128
  %2194 = vmatprep.subr.bf16.mxu0 %v2131
  %2195 = vmatpush1.bf16.msra.mxu0 %v2130
  %2196 = vmatprep.subr.bf16.mxu0 %v2133
  %2197 = vmatpush1.bf16.msra.mxu0 %v2132
  %2198 = vmatprep.subr.bf16.mxu0 %v2135
  %2199 = vmatpush1.bf16.msra.mxu0 %v2134
  %2200 = vmatprep.subr.bf16.mxu0 %v2137
  %2201 = vmatpush1.bf16.msra.mxu0 %v2136
  %2202 = vmatprep.subr.bf16.mxu0 %v2139
  %2203 = vmatpush1.bf16.msra.mxu0 %v2138
  %2204 = vmatprep.subr.bf16.mxu0 %v2141
  %2205 = vmatpush1.bf16.msra.mxu0 %v2140
  %2206 = vmatprep.subr.bf16.mxu0 %v2143
  %2207 = vmatpush1.bf16.msra.mxu0 %v2142
  %2208 = vmatprep.subr.bf16.mxu0 %v2145
  %2209 = vmatpush1.bf16.msra.mxu0 %v2144
  %2210 = vmatprep.subr.bf16.mxu0 %v2147
  %2211 = vmatpush1.bf16.msra.mxu0 %v2146
  %2212 = vmatprep.subr.bf16.mxu0 %v2149
  %2213 = vmatpush1.bf16.msra.mxu0 %v2148
  %2214 = vmatprep.subr.bf16.mxu0 %v2151
  %2215 = vmatpush1.bf16.msra.mxu0 %v2150
  %2216 = vmatprep.subr.bf16.mxu0 %v2153
  %2217 = vmatpush1.bf16.msra.mxu0 %v2152
  %2218 = vmatprep.mubr.bf16.mxu0 %v90
  %2219 = vmatmul.mubr.bf16.gmra.mrb[0].mxu0 %v89
  %v2220 = vpop.f32.mrb[0].mxu0
  %v2221 = vadd.f32 0.0, %v2220
  %v2222 = vpop.f32.mrb[0].mxu0
  %v2223 = vadd.f32 0.0, %v2222
  %v2224 = vpop.f32.mrb[0].mxu0
  %v2225 = vpop.f32.mrb[0].mxu0
  %2226 = vdwg.mxu0
  %v2259 = vunpack.c.l.b16 %v363
  %v2260 = vunpack.c.h.b16 %v363
  %v2261 = vunpack.c.l.b16 %v364
  %v2262 = vunpack.c.h.b16 %v364
  %v2263 = vunpack.c.l.b16 %v365
  %v2264 = vunpack.c.h.b16 %v365
  %v2265 = vunpack.c.l.b16 %v366
  %v2266 = vunpack.c.h.b16 %v366
  %v2267 = vunpack.c.l.b16 %v367
  %v2268 = vunpack.c.h.b16 %v367
  %v2269 = vunpack.c.l.b16 %v368
  %v2270 = vunpack.c.h.b16 %v368
  %v2271 = vunpack.c.l.b16 %v369
  %v2272 = vunpack.c.h.b16 %v369
  %v2273 = vunpack.c.l.b16 %v370
  %v2274 = vunpack.c.h.b16 %v370
  %v2275 = vunpack.c.l.b16 %v371
  %v2276 = vunpack.c.h.b16 %v371
  %v2277 = vunpack.c.l.b16 %v372
  %v2278 = vunpack.c.h.b16 %v372
  %v2279 = vunpack.c.l.b16 %v373
  %v2280 = vunpack.c.h.b16 %v373
  %v2281 = vunpack.c.l.b16 %v374
  %v2282 = vunpack.c.h.b16 %v374
  %v2283 = vunpack.c.l.b16 %v375
  %v2284 = vunpack.c.h.b16 %v375
  %v2285 = vunpack.c.l.b16 %v376
  %v2286 = vunpack.c.h.b16 %v376
  %v2287 = vunpack.c.l.b16 %v377
  %v2288 = vunpack.c.h.b16 %v377
  %v2289 = vunpack.c.l.b16 %v378
  %v2290 = vunpack.c.h.b16 %v378
  %v2291 = vunpack.c.l.b16 %v379
  %v2292 = vunpack.c.h.b16 %v379
  %v2293 = vunpack.c.l.b16 %v380
  %v2294 = vunpack.c.h.b16 %v380
  %v2295 = vunpack.c.l.b16 %v381
  %v2296 = vunpack.c.h.b16 %v381
  %v2297 = vunpack.c.l.b16 %v382
  %v2298 = vunpack.c.h.b16 %v382
  %v2299 = vunpack.c.l.b16 %v383
  %v2300 = vunpack.c.h.b16 %v383
  %v2301 = vunpack.c.l.b16 %v384
  %v2302 = vunpack.c.h.b16 %v384
  %v2303 = vunpack.c.l.b16 %v385
  %v2304 = vunpack.c.h.b16 %v385
  %v2305 = vunpack.c.l.b16 %v386
  %v2306 = vunpack.c.h.b16 %v386
  %v2307 = vunpack.c.l.b16 %v387
  %v2308 = vunpack.c.h.b16 %v387
  %v2309 = vunpack.c.l.b16 %v388
  %v2310 = vunpack.c.h.b16 %v388
  %v2311 = vunpack.c.l.b16 %v389
  %v2312 = vunpack.c.h.b16 %v389
  %v2313 = vunpack.c.l.b16 %v390
  %v2314 = vunpack.c.h.b16 %v390
  %v2315 = vunpack.c.l.b16 %v391
  %v2316 = vunpack.c.h.b16 %v391
  %v2317 = vunpack.c.l.b16 %v392
  %v2318 = vunpack.c.h.b16 %v392
  %v2319 = vunpack.c.l.b16 %v393
  %v2320 = vunpack.c.h.b16 %v393
  %v2321 = vunpack.c.l.b16 %v394
  %v2322 = vunpack.c.h.b16 %v394
  %v2323 = vpack.c.b16 %v2261, %v2259
  %v2324 = vpack.c.b16 %v2262, %v2260
  %v2325 = vpack.c.b16 %v2265, %v2263
  %v2326 = vpack.c.b16 %v2266, %v2264
  %v2327 = vpack.c.b16 %v2269, %v2267
  %v2328 = vpack.c.b16 %v2270, %v2268
  %v2329 = vpack.c.b16 %v2273, %v2271
  %v2330 = vpack.c.b16 %v2274, %v2272
  %v2331 = vpack.c.b16 %v2277, %v2275
  %v2332 = vpack.c.b16 %v2278, %v2276
  %v2333 = vpack.c.b16 %v2281, %v2279
  %v2334 = vpack.c.b16 %v2282, %v2280
  %v2335 = vpack.c.b16 %v2285, %v2283
  %v2336 = vpack.c.b16 %v2286, %v2284
  %v2337 = vpack.c.b16 %v2289, %v2287
  %v2338 = vpack.c.b16 %v2290, %v2288
  %v2339 = vpack.c.b16 %v2293, %v2291
  %v2340 = vpack.c.b16 %v2294, %v2292
  %v2341 = vpack.c.b16 %v2297, %v2295
  %v2342 = vpack.c.b16 %v2298, %v2296
  %v2343 = vpack.c.b16 %v2301, %v2299
  %v2344 = vpack.c.b16 %v2302, %v2300
  %v2345 = vpack.c.b16 %v2305, %v2303
  %v2346 = vpack.c.b16 %v2306, %v2304
  %v2347 = vpack.c.b16 %v2309, %v2307
  %v2348 = vpack.c.b16 %v2310, %v2308
  %v2349 = vpack.c.b16 %v2313, %v2311
  %v2350 = vpack.c.b16 %v2314, %v2312
  %v2351 = vpack.c.b16 %v2317, %v2315
  %v2352 = vpack.c.b16 %v2318, %v2316
  %v2353 = vpack.c.b16 %v2321, %v2319
  %v2354 = vpack.c.b16 %v2322, %v2320
  %2387 = vmatprep.subr.bf16.mxu0 %v2324
  %2388 = vmatpush1.bf16.msra.mxu0 %v2323
  %2389 = vmatprep.subr.bf16.mxu0 %v2326
  %2390 = vmatpush1.bf16.msra.mxu0 %v2325
  %2391 = vmatprep.subr.bf16.mxu0 %v2328
  %2392 = vmatpush1.bf16.msra.mxu0 %v2327
  %2393 = vmatprep.subr.bf16.mxu0 %v2330
  %2394 = vmatpush1.bf16.msra.mxu0 %v2329
  %2395 = vmatprep.subr.bf16.mxu0 %v2332
  %2396 = vmatpush1.bf16.msra.mxu0 %v2331
  %2397 = vmatprep.subr.bf16.mxu0 %v2334
  %2398 = vmatpush1.bf16.msra.mxu0 %v2333
  %2399 = vmatprep.subr.bf16.mxu0 %v2336
  %2400 = vmatpush1.bf16.msra.mxu0 %v2335
  %2401 = vmatprep.subr.bf16.mxu0 %v2338
  %2402 = vmatpush1.bf16.msra.mxu0 %v2337
  %2403 = vmatprep.subr.bf16.mxu0 %v2340
  %2404 = vmatpush1.bf16.msra.mxu0 %v2339
  %2405 = vmatprep.subr.bf16.mxu0 %v2342
  %2406 = vmatpush1.bf16.msra.mxu0 %v2341
  %2407 = vmatprep.subr.bf16.mxu0 %v2344
  %2408 = vmatpush1.bf16.msra.mxu0 %v2343
  %2409 = vmatprep.subr.bf16.mxu0 %v2346
  %2410 = vmatpush1.bf16.msra.mxu0 %v2345
  %2411 = vmatprep.subr.bf16.mxu0 %v2348
  %2412 = vmatpush1.bf16.msra.mxu0 %v2347
  %2413 = vmatprep.subr.bf16.mxu0 %v2350
  %2414 = vmatpush1.bf16.msra.mxu0 %v2349
  %2415 = vmatprep.subr.bf16.mxu0 %v2352
  %2416 = vmatpush1.bf16.msra.mxu0 %v2351
  %2417 = vmatprep.subr.bf16.mxu0 %v2354
  %2418 = vmatpush1.bf16.msra.mxu0 %v2353
  %2419 = vmatprep.mubr.bf16.mxu0 %v92
  %2420 = vmatmul.mubr.bf16.gmra.mrb[0].mxu0 %v91
  %v2421 = vpop.f32.mrb[0].mxu0
  %v2422 = vadd.f32 0.0, %v2421
  %v2423 = vpop.f32.mrb[0].mxu0
  %v2424 = vadd.f32 0.0, %v2423
  %v2425 = vpop.f32.mrb[0].mxu0
  %v2426 = vpop.f32.mrb[0].mxu0
  %2427 = vdwg.mxu0
  %v2460 = vunpack.c.l.b16 %v395
  %v2461 = vunpack.c.h.b16 %v395
  %v2462 = vunpack.c.l.b16 %v396
  %v2463 = vunpack.c.h.b16 %v396
  %v2464 = vunpack.c.l.b16 %v397
  %v2465 = vunpack.c.h.b16 %v397
  %v2466 = vunpack.c.l.b16 %v398
  %v2467 = vunpack.c.h.b16 %v398
  %v2468 = vunpack.c.l.b16 %v399
  %v2469 = vunpack.c.h.b16 %v399
  %v2470 = vunpack.c.l.b16 %v400
  %v2471 = vunpack.c.h.b16 %v400
  %v2472 = vunpack.c.l.b16 %v401
  %v2473 = vunpack.c.h.b16 %v401
  %v2474 = vunpack.c.l.b16 %v402
  %v2475 = vunpack.c.h.b16 %v402
  %v2476 = vunpack.c.l.b16 %v403
  %v2477 = vunpack.c.h.b16 %v403
  %v2478 = vunpack.c.l.b16 %v404
  %v2479 = vunpack.c.h.b16 %v404
  %v2480 = vunpack.c.l.b16 %v405
  %v2481 = vunpack.c.h.b16 %v405
  %v2482 = vunpack.c.l.b16 %v406
  %v2483 = vunpack.c.h.b16 %v406
  %v2484 = vunpack.c.l.b16 %v407
  %v2485 = vunpack.c.h.b16 %v407
  %v2486 = vunpack.c.l.b16 %v408
  %v2487 = vunpack.c.h.b16 %v408
  %v2488 = vunpack.c.l.b16 %v409
  %v2489 = vunpack.c.h.b16 %v409
  %v2490 = vunpack.c.l.b16 %v410
  %v2491 = vunpack.c.h.b16 %v410
  %v2492 = vunpack.c.l.b16 %v411
  %v2493 = vunpack.c.h.b16 %v411
  %v2494 = vunpack.c.l.b16 %v412
  %v2495 = vunpack.c.h.b16 %v412
  %v2496 = vunpack.c.l.b16 %v413
  %v2497 = vunpack.c.h.b16 %v413
  %v2498 = vunpack.c.l.b16 %v414
  %v2499 = vunpack.c.h.b16 %v414
  %v2500 = vunpack.c.l.b16 %v415
  %v2501 = vunpack.c.h.b16 %v415
  %v2502 = vunpack.c.l.b16 %v416
  %v2503 = vunpack.c.h.b16 %v416
  %v2504 = vunpack.c.l.b16 %v417
  %v2505 = vunpack.c.h.b16 %v417
  %v2506 = vunpack.c.l.b16 %v418
  %v2507 = vunpack.c.h.b16 %v418
  %v2508 = vunpack.c.l.b16 %v419
  %v2509 = vunpack.c.h.b16 %v419
  %v2510 = vunpack.c.l.b16 %v420
  %v2511 = vunpack.c.h.b16 %v420
  %v2512 = vunpack.c.l.b16 %v421
  %v2513 = vunpack.c.h.b16 %v421
  %v2514 = vunpack.c.l.b16 %v422
  %v2515 = vunpack.c.h.b16 %v422
  %v2516 = vunpack.c.l.b16 %v423
  %v2517 = vunpack.c.h.b16 %v423
  %v2518 = vunpack.c.l.b16 %v424
  %v2519 = vunpack.c.h.b16 %v424
  %v2520 = vunpack.c.l.b16 %v425
  %v2521 = vunpack.c.h.b16 %v425
  %v2522 = vunpack.c.l.b16 %v426
  %v2523 = vunpack.c.h.b16 %v426
  %v2524 = vpack.c.b16 %v2462, %v2460
  %v2525 = vpack.c.b16 %v2463, %v2461
  %v2526 = vpack.c.b16 %v2466, %v2464
  %v2527 = vpack.c.b16 %v2467, %v2465
  %v2528 = vpack.c.b16 %v2470, %v2468
  %v2529 = vpack.c.b16 %v2471, %v2469
  %v2530 = vpack.c.b16 %v2474, %v2472
  %v2531 = vpack.c.b16 %v2475, %v2473
  %v2532 = vpack.c.b16 %v2478, %v2476
  %v2533 = vpack.c.b16 %v2479, %v2477
  %v2534 = vpack.c.b16 %v2482, %v2480
  %v2535 = vpack.c.b16 %v2483, %v2481
  %v2536 = vpack.c.b16 %v2486, %v2484
  %v2537 = vpack.c.b16 %v2487, %v2485
  %v2538 = vpack.c.b16 %v2490, %v2488
  %v2539 = vpack.c.b16 %v2491, %v2489
  %v2540 = vpack.c.b16 %v2494, %v2492
  %v2541 = vpack.c.b16 %v2495, %v2493
  %v2542 = vpack.c.b16 %v2498, %v2496
  %v2543 = vpack.c.b16 %v2499, %v2497
  %v2544 = vpack.c.b16 %v2502, %v2500
  %v2545 = vpack.c.b16 %v2503, %v2501
  %v2546 = vpack.c.b16 %v2506, %v2504
  %v2547 = vpack.c.b16 %v2507, %v2505
  %v2548 = vpack.c.b16 %v2510, %v2508
  %v2549 = vpack.c.b16 %v2511, %v2509
  %v2550 = vpack.c.b16 %v2514, %v2512
  %v2551 = vpack.c.b16 %v2515, %v2513
  %v2552 = vpack.c.b16 %v2518, %v2516
  %v2553 = vpack.c.b16 %v2519, %v2517
  %v2554 = vpack.c.b16 %v2522, %v2520
  %v2555 = vpack.c.b16 %v2523, %v2521
  %2588 = vmatprep.subr.bf16.mxu0 %v2525
  %2589 = vmatpush1.bf16.msra.mxu0 %v2524
  %2590 = vmatprep.subr.bf16.mxu0 %v2527
  %2591 = vmatpush1.bf16.msra.mxu0 %v2526
  %2592 = vmatprep.subr.bf16.mxu0 %v2529
  %2593 = vmatpush1.bf16.msra.mxu0 %v2528
  %2594 = vmatprep.subr.bf16.mxu0 %v2531
  %2595 = vmatpush1.bf16.msra.mxu0 %v2530
  %2596 = vmatprep.subr.bf16.mxu0 %v2533
  %2597 = vmatpush1.bf16.msra.mxu0 %v2532
  %2598 = vmatprep.subr.bf16.mxu0 %v2535
  %2599 = vmatpush1.bf16.msra.mxu0 %v2534
  %2600 = vmatprep.subr.bf16.mxu0 %v2537
  %2601 = vmatpush1.bf16.msra.mxu0 %v2536
  %2602 = vmatprep.subr.bf16.mxu0 %v2539
  %2603 = vmatpush1.bf16.msra.mxu0 %v2538
  %2604 = vmatprep.subr.bf16.mxu0 %v2541
  %2605 = vmatpush1.bf16.msra.mxu0 %v2540
  %2606 = vmatprep.subr.bf16.mxu0 %v2543
  %2607 = vmatpush1.bf16.msra.mxu0 %v2542
  %2608 = vmatprep.subr.bf16.mxu0 %v2545
  %2609 = vmatpush1.bf16.msra.mxu0 %v2544
  %2610 = vmatprep.subr.bf16.mxu0 %v2547
  %2611 = vmatpush1.bf16.msra.mxu0 %v2546
  %2612 = vmatprep.subr.bf16.mxu0 %v2549
  %2613 = vmatpush1.bf16.msra.mxu0 %v2548
  %2614 = vmatprep.subr.bf16.mxu0 %v2551
  %2615 = vmatpush1.bf16.msra.mxu0 %v2550
  %2616 = vmatprep.subr.bf16.mxu0 %v2553
  %2617 = vmatpush1.bf16.msra.mxu0 %v2552
  %2618 = vmatprep.subr.bf16.mxu0 %v2555
  %2619 = vmatpush1.bf16.msra.mxu0 %v2554
  %2620 = vmatprep.mubr.bf16.mxu0 %v94
  %2621 = vmatmul.mubr.bf16.gmra.mrb[0].mxu0 %v93
  %v2622 = vpop.f32.mrb[0].mxu0
  %v2623 = vadd.f32 0.0, %v2622
  %v2624 = vpop.f32.mrb[0].mxu0
  %v2625 = vadd.f32 0.0, %v2624
  %v2626 = vpop.f32.mrb[0].mxu0
  %v2627 = vpop.f32.mrb[0].mxu0
  %2628 = vdwg.mxu0
  %v2661 = vunpack.c.l.b16 %v427
  %v2662 = vunpack.c.h.b16 %v427
  %v2663 = vunpack.c.l.b16 %v428
  %v2664 = vunpack.c.h.b16 %v428
  %v2665 = vunpack.c.l.b16 %v429
  %v2666 = vunpack.c.h.b16 %v429
  %v2667 = vunpack.c.l.b16 %v430
  %v2668 = vunpack.c.h.b16 %v430
  %v2669 = vunpack.c.l.b16 %v431
  %v2670 = vunpack.c.h.b16 %v431
  %v2671 = vunpack.c.l.b16 %v432
  %v2672 = vunpack.c.h.b16 %v432
  %v2673 = vunpack.c.l.b16 %v433
  %v2674 = vunpack.c.h.b16 %v433
  %v2675 = vunpack.c.l.b16 %v434
  %v2676 = vunpack.c.h.b16 %v434
  %v2677 = vunpack.c.l.b16 %v435
  %v2678 = vunpack.c.h.b16 %v435
  %v2679 = vunpack.c.l.b16 %v436
  %v2680 = vunpack.c.h.b16 %v436
  %v2681 = vunpack.c.l.b16 %v437
  %v2682 = vunpack.c.h.b16 %v437
  %v2683 = vunpack.c.l.b16 %v438
  %v2684 = vunpack.c.h.b16 %v438
  %v2685 = vunpack.c.l.b16 %v439
  %v2686 = vunpack.c.h.b16 %v439
  %v2687 = vunpack.c.l.b16 %v440
  %v2688 = vunpack.c.h.b16 %v440
  %v2689 = vunpack.c.l.b16 %v441
  %v2690 = vunpack.c.h.b16 %v441
  %v2691 = vunpack.c.l.b16 %v442
  %v2692 = vunpack.c.h.b16 %v442
  %v2693 = vunpack.c.l.b16 %v443
  %v2694 = vunpack.c.h.b16 %v443
  %v2695 = vunpack.c.l.b16 %v444
  %v2696 = vunpack.c.h.b16 %v444
  %v2697 = vunpack.c.l.b16 %v445
  %v2698 = vunpack.c.h.b16 %v445
  %v2699 = vunpack.c.l.b16 %v446
  %v2700 = vunpack.c.h.b16 %v446
  %v2701 = vunpack.c.l.b16 %v447
  %v2702 = vunpack.c.h.b16 %v447
  %v2703 = vunpack.c.l.b16 %v448
  %v2704 = vunpack.c.h.b16 %v448
  %v2705 = vunpack.c.l.b16 %v449
  %v2706 = vunpack.c.h.b16 %v449
  %v2707 = vunpack.c.l.b16 %v450
  %v2708 = vunpack.c.h.b16 %v450
  %v2709 = vunpack.c.l.b16 %v451
  %v2710 = vunpack.c.h.b16 %v451
  %v2711 = vunpack.c.l.b16 %v452
  %v2712 = vunpack.c.h.b16 %v452
  %v2713 = vunpack.c.l.b16 %v453
  %v2714 = vunpack.c.h.b16 %v453
  %v2715 = vunpack.c.l.b16 %v454
  %v2716 = vunpack.c.h.b16 %v454
  %v2717 = vunpack.c.l.b16 %v455
  %v2718 = vunpack.c.h.b16 %v455
  %v2719 = vunpack.c.l.b16 %v456
  %v2720 = vunpack.c.h.b16 %v456
  %v2721 = vunpack.c.l.b16 %v457
  %v2722 = vunpack.c.h.b16 %v457
  %v2723 = vunpack.c.l.b16 %v458
  %v2724 = vunpack.c.h.b16 %v458
  %v2725 = vpack.c.b16 %v2663, %v2661
  %v2726 = vpack.c.b16 %v2664, %v2662
  %v2727 = vpack.c.b16 %v2667, %v2665
  %v2728 = vpack.c.b16 %v2668, %v2666
  %v2729 = vpack.c.b16 %v2671, %v2669
  %v2730 = vpack.c.b16 %v2672, %v2670
  %v2731 = vpack.c.b16 %v2675, %v2673
  %v2732 = vpack.c.b16 %v2676, %v2674
  %v2733 = vpack.c.b16 %v2679, %v2677
  %v2734 = vpack.c.b16 %v2680, %v2678
  %v2735 = vpack.c.b16 %v2683, %v2681
  %v2736 = vpack.c.b16 %v2684, %v2682
  %v2737 = vpack.c.b16 %v2687, %v2685
  %v2738 = vpack.c.b16 %v2688, %v2686
  %v2739 = vpack.c.b16 %v2691, %v2689
  %v2740 = vpack.c.b16 %v2692, %v2690
  %v2741 = vpack.c.b16 %v2695, %v2693
  %v2742 = vpack.c.b16 %v2696, %v2694
  %v2743 = vpack.c.b16 %v2699, %v2697
  %v2744 = vpack.c.b16 %v2700, %v2698
  %v2745 = vpack.c.b16 %v2703, %v2701
  %v2746 = vpack.c.b16 %v2704, %v2702
  %v2747 = vpack.c.b16 %v2707, %v2705
  %v2748 = vpack.c.b16 %v2708, %v2706
  %v2749 = vpack.c.b16 %v2711, %v2709
  %v2750 = vpack.c.b16 %v2712, %v2710
  %v2751 = vpack.c.b16 %v2715, %v2713
  %v2752 = vpack.c.b16 %v2716, %v2714
  %v2753 = vpack.c.b16 %v2719, %v2717
  %v2754 = vpack.c.b16 %v2720, %v2718
  %v2755 = vpack.c.b16 %v2723, %v2721
  %v2756 = vpack.c.b16 %v2724, %v2722
  %2789 = vmatprep.subr.bf16.mxu0 %v2726
  %2790 = vmatpush1.bf16.msra.mxu0 %v2725
  %2791 = vmatprep.subr.bf16.mxu0 %v2728
  %2792 = vmatpush1.bf16.msra.mxu0 %v2727
  %2793 = vmatprep.subr.bf16.mxu0 %v2730
  %2794 = vmatpush1.bf16.msra.mxu0 %v2729
  %2795 = vmatprep.subr.bf16.mxu0 %v2732
  %2796 = vmatpush1.bf16.msra.mxu0 %v2731
  %2797 = vmatprep.subr.bf16.mxu0 %v2734
  %2798 = vmatpush1.bf16.msra.mxu0 %v2733
  %2799 = vmatprep.subr.bf16.mxu0 %v2736
  %2800 = vmatpush1.bf16.msra.mxu0 %v2735
  %2801 = vmatprep.subr.bf16.mxu0 %v2738
  %2802 = vmatpush1.bf16.msra.mxu0 %v2737
  %2803 = vmatprep.subr.bf16.mxu0 %v2740
  %2804 = vmatpush1.bf16.msra.mxu0 %v2739
  %2805 = vmatprep.subr.bf16.mxu0 %v2742
  %2806 = vmatpush1.bf16.msra.mxu0 %v2741
  %2807 = vmatprep.subr.bf16.mxu0 %v2744
  %2808 = vmatpush1.bf16.msra.mxu0 %v2743
  %2809 = vmatprep.subr.bf16.mxu0 %v2746
  %2810 = vmatpush1.bf16.msra.mxu0 %v2745
  %2811 = vmatprep.subr.bf16.mxu0 %v2748
  %2812 = vmatpush1.bf16.msra.mxu0 %v2747
  %2813 = vmatprep.subr.bf16.mxu0 %v2750
  %2814 = vmatpush1.bf16.msra.mxu0 %v2749
  %2815 = vmatprep.subr.bf16.mxu0 %v2752
  %2816 = vmatpush1.bf16.msra.mxu0 %v2751
  %2817 = vmatprep.subr.bf16.mxu0 %v2754
  %2818 = vmatpush1.bf16.msra.mxu0 %v2753
  %2819 = vmatprep.subr.bf16.mxu0 %v2756
  %2820 = vmatpush1.bf16.msra.mxu0 %v2755
  %2821 = vmatprep.mubr.bf16.mxu0 %v96
  %2822 = vmatmul.mubr.bf16.gmra.mrb[0].mxu0 %v95
  %v2823 = vpop.f32.mrb[0].mxu0
  %v2824 = vadd.f32 0.0, %v2823
  %v2825 = vpop.f32.mrb[0].mxu0
  %v2826 = vadd.f32 0.0, %v2825
  %v2827 = vpop.f32.mrb[0].mxu0
  %v2828 = vpop.f32.mrb[0].mxu0
  %2829 = vdwg.mxu0
  %v2862 = vunpack.c.l.b16 %v459
  %v2863 = vunpack.c.h.b16 %v459
  %v2864 = vunpack.c.l.b16 %v460
  %v2865 = vunpack.c.h.b16 %v460
  %v2866 = vunpack.c.l.b16 %v461
  %v2867 = vunpack.c.h.b16 %v461
  %v2868 = vunpack.c.l.b16 %v462
  %v2869 = vunpack.c.h.b16 %v462
  %v2870 = vunpack.c.l.b16 %v463
  %v2871 = vunpack.c.h.b16 %v463
  %v2872 = vunpack.c.l.b16 %v464
  %v2873 = vunpack.c.h.b16 %v464
  %v2874 = vunpack.c.l.b16 %v465
  %v2875 = vunpack.c.h.b16 %v465
  %v2876 = vunpack.c.l.b16 %v466
  %v2877 = vunpack.c.h.b16 %v466
  %v2878 = vunpack.c.l.b16 %v467
  %v2879 = vunpack.c.h.b16 %v467
  %v2880 = vunpack.c.l.b16 %v468
  %v2881 = vunpack.c.h.b16 %v468
  %v2882 = vunpack.c.l.b16 %v469
  %v2883 = vunpack.c.h.b16 %v469
  %v2884 = vunpack.c.l.b16 %v470
  %v2885 = vunpack.c.h.b16 %v470
  %v2886 = vunpack.c.l.b16 %v471
  %v2887 = vunpack.c.h.b16 %v471
  %v2888 = vunpack.c.l.b16 %v472
  %v2889 = vunpack.c.h.b16 %v472
  %v2890 = vunpack.c.l.b16 %v473
  %v2891 = vunpack.c.h.b16 %v473
  %v2892 = vunpack.c.l.b16 %v474
  %v2893 = vunpack.c.h.b16 %v474
  %v2894 = vunpack.c.l.b16 %v475
  %v2895 = vunpack.c.h.b16 %v475
  %v2896 = vunpack.c.l.b16 %v476
  %v2897 = vunpack.c.h.b16 %v476
  %v2898 = vunpack.c.l.b16 %v477
  %v2899 = vunpack.c.h.b16 %v477
  %v2900 = vunpack.c.l.b16 %v478
  %v2901 = vunpack.c.h.b16 %v478
  %v2902 = vunpack.c.l.b16 %v479
  %v2903 = vunpack.c.h.b16 %v479
  %v2904 = vunpack.c.l.b16 %v480
  %v2905 = vunpack.c.h.b16 %v480
  %v2906 = vunpack.c.l.b16 %v481
  %v2907 = vunpack.c.h.b16 %v481
  %v2908 = vunpack.c.l.b16 %v482
  %v2909 = vunpack.c.h.b16 %v482
  %v2910 = vunpack.c.l.b16 %v483
  %v2911 = vunpack.c.h.b16 %v483
  %v2912 = vunpack.c.l.b16 %v484
  %v2913 = vunpack.c.h.b16 %v484
  %v2914 = vunpack.c.l.b16 %v485
  %v2915 = vunpack.c.h.b16 %v485
  %v2916 = vunpack.c.l.b16 %v486
  %v2917 = vunpack.c.h.b16 %v486
  %v2918 = vunpack.c.l.b16 %v487
  %v2919 = vunpack.c.h.b16 %v487
  %v2920 = vunpack.c.l.b16 %v488
  %v2921 = vunpack.c.h.b16 %v488
  %v2922 = vunpack.c.l.b16 %v489
  %v2923 = vunpack.c.h.b16 %v489
  %v2924 = vunpack.c.l.b16 %v490
  %v2925 = vunpack.c.h.b16 %v490
  %v2926 = vpack.c.b16 %v2864, %v2862
  %v2927 = vpack.c.b16 %v2865, %v2863
  %v2928 = vpack.c.b16 %v2868, %v2866
  %v2929 = vpack.c.b16 %v2869, %v2867
  %v2930 = vpack.c.b16 %v2872, %v2870
  %v2931 = vpack.c.b16 %v2873, %v2871
  %v2932 = vpack.c.b16 %v2876, %v2874
  %v2933 = vpack.c.b16 %v2877, %v2875
  %v2934 = vpack.c.b16 %v2880, %v2878
  %v2935 = vpack.c.b16 %v2881, %v2879
  %v2936 = vpack.c.b16 %v2884, %v2882
  %v2937 = vpack.c.b16 %v2885, %v2883
  %v2938 = vpack.c.b16 %v2888, %v2886
  %v2939 = vpack.c.b16 %v2889, %v2887
  %v2940 = vpack.c.b16 %v2892, %v2890
  %v2941 = vpack.c.b16 %v2893, %v2891
  %v2942 = vpack.c.b16 %v2896, %v2894
  %v2943 = vpack.c.b16 %v2897, %v2895
  %v2944 = vpack.c.b16 %v2900, %v2898
  %v2945 = vpack.c.b16 %v2901, %v2899
  %v2946 = vpack.c.b16 %v2904, %v2902
  %v2947 = vpack.c.b16 %v2905, %v2903
  %v2948 = vpack.c.b16 %v2908, %v2906
  %v2949 = vpack.c.b16 %v2909, %v2907
  %v2950 = vpack.c.b16 %v2912, %v2910
  %v2951 = vpack.c.b16 %v2913, %v2911
  %v2952 = vpack.c.b16 %v2916, %v2914
  %v2953 = vpack.c.b16 %v2917, %v2915
  %v2954 = vpack.c.b16 %v2920, %v2918
  %v2955 = vpack.c.b16 %v2921, %v2919
  %v2956 = vpack.c.b16 %v2924, %v2922
  %v2957 = vpack.c.b16 %v2925, %v2923
  %2990 = vmatprep.subr.bf16.mxu0 %v2927
  %2991 = vmatpush1.bf16.msra.mxu0 %v2926
  %2992 = vmatprep.subr.bf16.mxu0 %v2929
  %2993 = vmatpush1.bf16.msra.mxu0 %v2928
  %2994 = vmatprep.subr.bf16.mxu0 %v2931
  %2995 = vmatpush1.bf16.msra.mxu0 %v2930
  %2996 = vmatprep.subr.bf16.mxu0 %v2933
  %2997 = vmatpush1.bf16.msra.mxu0 %v2932
  %2998 = vmatprep.subr.bf16.mxu0 %v2935
  %2999 = vmatpush1.bf16.msra.mxu0 %v2934
  %3000 = vmatprep.subr.bf16.mxu0 %v2937
  %3001 = vmatpush1.bf16.msra.mxu0 %v2936
  %3002 = vmatprep.subr.bf16.mxu0 %v2939
  %3003 = vmatpush1.bf16.msra.mxu0 %v2938
  %3004 = vmatprep.subr.bf16.mxu0 %v2941
  %3005 = vmatpush1.bf16.msra.mxu0 %v2940
  %3006 = vmatprep.subr.bf16.mxu0 %v2943
  %3007 = vmatpush1.bf16.msra.mxu0 %v2942
  %3008 = vmatprep.subr.bf16.mxu0 %v2945
  %3009 = vmatpush1.bf16.msra.mxu0 %v2944
  %3010 = vmatprep.subr.bf16.mxu0 %v2947
  %3011 = vmatpush1.bf16.msra.mxu0 %v2946
  %3012 = vmatprep.subr.bf16.mxu0 %v2949
  %3013 = vmatpush1.bf16.msra.mxu0 %v2948
  %3014 = vmatprep.subr.bf16.mxu0 %v2951
  %3015 = vmatpush1.bf16.msra.mxu0 %v2950
  %3016 = vmatprep.subr.bf16.mxu0 %v2953
  %3017 = vmatpush1.bf16.msra.mxu0 %v2952
  %3018 = vmatprep.subr.bf16.mxu0 %v2955
  %3019 = vmatpush1.bf16.msra.mxu0 %v2954
  %3020 = vmatprep.subr.bf16.mxu0 %v2957
  %3021 = vmatpush1.bf16.msra.mxu0 %v2956
  %3022 = vmatprep.mubr.bf16.mxu0 %v98
  %3023 = vmatmul.mubr.bf16.gmra.mrb[0].mxu0 %v97
  %v3024 = vpop.f32.mrb[0].mxu0
  %v3025 = vadd.f32 0.0, %v3024
  %v3026 = vpop.f32.mrb[0].mxu0
  %v3027 = vadd.f32 0.0, %v3026
  %v3028 = vpop.f32.mrb[0].mxu0
  %v3029 = vpop.f32.mrb[0].mxu0
  %3030 = vdwg.mxu0
  %v3063 = vunpack.c.l.b16 %v491
  %v3064 = vunpack.c.h.b16 %v491
  %v3065 = vunpack.c.l.b16 %v492
  %v3066 = vunpack.c.h.b16 %v492
  %v3067 = vunpack.c.l.b16 %v493
  %v3068 = vunpack.c.h.b16 %v493
  %v3069 = vunpack.c.l.b16 %v494
  %v3070 = vunpack.c.h.b16 %v494
  %v3071 = vunpack.c.l.b16 %v495
  %v3072 = vunpack.c.h.b16 %v495
  %v3073 = vunpack.c.l.b16 %v496
  %v3074 = vunpack.c.h.b16 %v496
  %v3075 = vunpack.c.l.b16 %v497
  %v3076 = vunpack.c.h.b16 %v497
  %v3077 = vunpack.c.l.b16 %v498
  %v3078 = vunpack.c.h.b16 %v498
  %v3079 = vunpack.c.l.b16 %v499
  %v3080 = vunpack.c.h.b16 %v499
  %v3081 = vunpack.c.l.b16 %v500
  %v3082 = vunpack.c.h.b16 %v500
  %v3083 = vunpack.c.l.b16 %v501
  %v3084 = vunpack.c.h.b16 %v501
  %v3085 = vunpack.c.l.b16 %v502
  %v3086 = vunpack.c.h.b16 %v502
  %v3087 = vunpack.c.l.b16 %v503
  %v3088 = vunpack.c.h.b16 %v503
  %v3089 = vunpack.c.l.b16 %v504
  %v3090 = vunpack.c.h.b16 %v504
  %v3091 = vunpack.c.l.b16 %v505
  %v3092 = vunpack.c.h.b16 %v505
  %v3093 = vunpack.c.l.b16 %v506
  %v3094 = vunpack.c.h.b16 %v506
  %v3095 = vunpack.c.l.b16 %v507
  %v3096 = vunpack.c.h.b16 %v507
  %v3097 = vunpack.c.l.b16 %v508
  %v3098 = vunpack.c.h.b16 %v508
  %v3099 = vunpack.c.l.b16 %v509
  %v3100 = vunpack.c.h.b16 %v509
  %v3101 = vunpack.c.l.b16 %v510
  %v3102 = vunpack.c.h.b16 %v510
  %v3103 = vunpack.c.l.b16 %v511
  %v3104 = vunpack.c.h.b16 %v511
  %v3105 = vunpack.c.l.b16 %v512
  %v3106 = vunpack.c.h.b16 %v512
  %v3107 = vunpack.c.l.b16 %v513
  %v3108 = vunpack.c.h.b16 %v513
  %v3109 = vunpack.c.l.b16 %v514
  %v3110 = vunpack.c.h.b16 %v514
  %v3111 = vunpack.c.l.b16 %v515
  %v3112 = vunpack.c.h.b16 %v515
  %v3113 = vunpack.c.l.b16 %v516
  %v3114 = vunpack.c.h.b16 %v516
  %v3115 = vunpack.c.l.b16 %v517
  %v3116 = vunpack.c.h.b16 %v517
  %v3117 = vunpack.c.l.b16 %v518
  %v3118 = vunpack.c.h.b16 %v518
  %v3119 = vunpack.c.l.b16 %v519
  %v3120 = vunpack.c.h.b16 %v519
  %v3121 = vunpack.c.l.b16 %v520
  %v3122 = vunpack.c.h.b16 %v520
  %v3123 = vunpack.c.l.b16 %v521
  %v3124 = vunpack.c.h.b16 %v521
  %v3125 = vunpack.c.l.b16 %v522
  %v3126 = vunpack.c.h.b16 %v522
  %v3127 = vpack.c.b16 %v3065, %v3063
  %v3128 = vpack.c.b16 %v3066, %v3064
  %v3129 = vpack.c.b16 %v3069, %v3067
  %v3130 = vpack.c.b16 %v3070, %v3068
  %v3131 = vpack.c.b16 %v3073, %v3071
  %v3132 = vpack.c.b16 %v3074, %v3072
  %v3133 = vpack.c.b16 %v3077, %v3075
  %v3134 = vpack.c.b16 %v3078, %v3076
  %v3135 = vpack.c.b16 %v3081, %v3079
  %v3136 = vpack.c.b16 %v3082, %v3080
  %v3137 = vpack.c.b16 %v3085, %v3083
  %v3138 = vpack.c.b16 %v3086, %v3084
  %v3139 = vpack.c.b16 %v3089, %v3087
  %v3140 = vpack.c.b16 %v3090, %v3088
  %v3141 = vpack.c.b16 %v3093, %v3091
  %v3142 = vpack.c.b16 %v3094, %v3092
  %v3143 = vpack.c.b16 %v3097, %v3095
  %v3144 = vpack.c.b16 %v3098, %v3096
  %v3145 = vpack.c.b16 %v3101, %v3099
  %v3146 = vpack.c.b16 %v3102, %v3100
  %v3147 = vpack.c.b16 %v3105, %v3103
  %v3148 = vpack.c.b16 %v3106, %v3104
  %v3149 = vpack.c.b16 %v3109, %v3107
  %v3150 = vpack.c.b16 %v3110, %v3108
  %v3151 = vpack.c.b16 %v3113, %v3111
  %v3152 = vpack.c.b16 %v3114, %v3112
  %v3153 = vpack.c.b16 %v3117, %v3115
  %v3154 = vpack.c.b16 %v3118, %v3116
  %v3155 = vpack.c.b16 %v3121, %v3119
  %v3156 = vpack.c.b16 %v3122, %v3120
  %v3157 = vpack.c.b16 %v3125, %v3123
  %v3158 = vpack.c.b16 %v3126, %v3124
  %3191 = vmatprep.subr.bf16.mxu0 %v3128
  %3192 = vmatpush1.bf16.msra.mxu0 %v3127
  %3193 = vmatprep.subr.bf16.mxu0 %v3130
  %3194 = vmatpush1.bf16.msra.mxu0 %v3129
  %3195 = vmatprep.subr.bf16.mxu0 %v3132
  %3196 = vmatpush1.bf16.msra.mxu0 %v3131
  %3197 = vmatprep.subr.bf16.mxu0 %v3134
  %3198 = vmatpush1.bf16.msra.mxu0 %v3133
  %3199 = vmatprep.subr.bf16.mxu0 %v3136
  %3200 = vmatpush1.bf16.msra.mxu0 %v3135
  %3201 = vmatprep.subr.bf16.mxu0 %v3138
  %3202 = vmatpush1.bf16.msra.mxu0 %v3137
  %3203 = vmatprep.subr.bf16.mxu0 %v3140
  %3204 = vmatpush1.bf16.msra.mxu0 %v3139
  %3205 = vmatprep.subr.bf16.mxu0 %v3142
  %3206 = vmatpush1.bf16.msra.mxu0 %v3141
  %3207 = vmatprep.subr.bf16.mxu0 %v3144
  %3208 = vmatpush1.bf16.msra.mxu0 %v3143
  %3209 = vmatprep.subr.bf16.mxu0 %v3146
  %3210 = vmatpush1.bf16.msra.mxu0 %v3145
  %3211 = vmatprep.subr.bf16.mxu0 %v3148
  %3212 = vmatpush1.bf16.msra.mxu0 %v3147
  %3213 = vmatprep.subr.bf16.mxu0 %v3150
  %3214 = vmatpush1.bf16.msra.mxu0 %v3149
  %3215 = vmatprep.subr.bf16.mxu0 %v3152
  %3216 = vmatpush1.bf16.msra.mxu0 %v3151
  %3217 = vmatprep.subr.bf16.mxu0 %v3154
  %3218 = vmatpush1.bf16.msra.mxu0 %v3153
  %3219 = vmatprep.subr.bf16.mxu0 %v3156
  %3220 = vmatpush1.bf16.msra.mxu0 %v3155
  %3221 = vmatprep.subr.bf16.mxu0 %v3158
  %3222 = vmatpush1.bf16.msra.mxu0 %v3157
  %3223 = vmatprep.mubr.bf16.mxu0 %v100
  %3224 = vmatmul.mubr.bf16.gmra.mrb[0].mxu0 %v99
  %v3225 = vpop.f32.mrb[0].mxu0
  %v3226 = vadd.f32 0.0, %v3225
  %v3227 = vpop.f32.mrb[0].mxu0
  %v3228 = vadd.f32 0.0, %v3227
  %v3229 = vpop.f32.mrb[0].mxu0
  %v3230 = vpop.f32.mrb[0].mxu0
  %3231 = vdwg.mxu0
  %v3264 = vunpack.c.l.b16 %v523
  %v3265 = vunpack.c.h.b16 %v523
  %v3266 = vunpack.c.l.b16 %v524
  %v3267 = vunpack.c.h.b16 %v524
  %v3268 = vunpack.c.l.b16 %v525
  %v3269 = vunpack.c.h.b16 %v525
  %v3270 = vunpack.c.l.b16 %v526
  %v3271 = vunpack.c.h.b16 %v526
  %v3272 = vunpack.c.l.b16 %v527
  %v3273 = vunpack.c.h.b16 %v527
  %v3274 = vunpack.c.l.b16 %v528
  %v3275 = vunpack.c.h.b16 %v528
  %v3276 = vunpack.c.l.b16 %v529
  %v3277 = vunpack.c.h.b16 %v529
  %v3278 = vunpack.c.l.b16 %v530
  %v3279 = vunpack.c.h.b16 %v530
  %v3280 = vunpack.c.l.b16 %v531
  %v3281 = vunpack.c.h.b16 %v531
  %v3282 = vunpack.c.l.b16 %v532
  %v3283 = vunpack.c.h.b16 %v532
  %v3284 = vunpack.c.l.b16 %v533
  %v3285 = vunpack.c.h.b16 %v533
  %v3286 = vunpack.c.l.b16 %v534
  %v3287 = vunpack.c.h.b16 %v534
  %v3288 = vunpack.c.l.b16 %v535
  %v3289 = vunpack.c.h.b16 %v535
  %v3290 = vunpack.c.l.b16 %v536
  %v3291 = vunpack.c.h.b16 %v536
  %v3292 = vunpack.c.l.b16 %v537
  %v3293 = vunpack.c.h.b16 %v537
  %v3294 = vunpack.c.l.b16 %v538
  %v3295 = vunpack.c.h.b16 %v538
  %v3296 = vunpack.c.l.b16 %v539
  %v3297 = vunpack.c.h.b16 %v539
  %v3298 = vunpack.c.l.b16 %v540
  %v3299 = vunpack.c.h.b16 %v540
  %v3300 = vunpack.c.l.b16 %v541
  %v3301 = vunpack.c.h.b16 %v541
  %v3302 = vunpack.c.l.b16 %v542
  %v3303 = vunpack.c.h.b16 %v542
  %v3304 = vunpack.c.l.b16 %v543
  %v3305 = vunpack.c.h.b16 %v543
  %v3306 = vunpack.c.l.b16 %v544
  %v3307 = vunpack.c.h.b16 %v544
  %v3308 = vunpack.c.l.b16 %v545
  %v3309 = vunpack.c.h.b16 %v545
  %v3310 = vunpack.c.l.b16 %v546
  %v3311 = vunpack.c.h.b16 %v546
  %v3312 = vunpack.c.l.b16 %v547
  %v3313 = vunpack.c.h.b16 %v547
  %v3314 = vunpack.c.l.b16 %v548
  %v3315 = vunpack.c.h.b16 %v548
  %v3316 = vunpack.c.l.b16 %v549
  %v3317 = vunpack.c.h.b16 %v549
  %v3318 = vunpack.c.l.b16 %v550
  %v3319 = vunpack.c.h.b16 %v550
  %v3320 = vunpack.c.l.b16 %v551
  %v3321 = vunpack.c.h.b16 %v551
  %v3322 = vunpack.c.l.b16 %v552
  %v3323 = vunpack.c.h.b16 %v552
  %v3324 = vunpack.c.l.b16 %v553
  %v3325 = vunpack.c.h.b16 %v553
  %v3326 = vunpack.c.l.b16 %v554
  %v3327 = vunpack.c.h.b16 %v554
  %v3328 = vpack.c.b16 %v3266, %v3264
  %v3329 = vpack.c.b16 %v3267, %v3265
  %v3330 = vpack.c.b16 %v3270, %v3268
  %v3331 = vpack.c.b16 %v3271, %v3269
  %v3332 = vpack.c.b16 %v3274, %v3272
  %v3333 = vpack.c.b16 %v3275, %v3273
  %v3334 = vpack.c.b16 %v3278, %v3276
  %v3335 = vpack.c.b16 %v3279, %v3277
  %v3336 = vpack.c.b16 %v3282, %v3280
  %v3337 = vpack.c.b16 %v3283, %v3281
  %v3338 = vpack.c.b16 %v3286, %v3284
  %v3339 = vpack.c.b16 %v3287, %v3285
  %v3340 = vpack.c.b16 %v3290, %v3288
  %v3341 = vpack.c.b16 %v3291, %v3289
  %v3342 = vpack.c.b16 %v3294, %v3292
  %v3343 = vpack.c.b16 %v3295, %v3293
  %v3344 = vpack.c.b16 %v3298, %v3296
  %v3345 = vpack.c.b16 %v3299, %v3297
  %v3346 = vpack.c.b16 %v3302, %v3300
  %v3347 = vpack.c.b16 %v3303, %v3301
  %v3348 = vpack.c.b16 %v3306, %v3304
  %v3349 = vpack.c.b16 %v3307, %v3305
  %v3350 = vpack.c.b16 %v3310, %v3308
  %v3351 = vpack.c.b16 %v3311, %v3309
  %v3352 = vpack.c.b16 %v3314, %v3312
  %v3353 = vpack.c.b16 %v3315, %v3313
  %v3354 = vpack.c.b16 %v3318, %v3316
  %v3355 = vpack.c.b16 %v3319, %v3317
  %v3356 = vpack.c.b16 %v3322, %v3320
  %v3357 = vpack.c.b16 %v3323, %v3321
  %v3358 = vpack.c.b16 %v3326, %v3324
  %v3359 = vpack.c.b16 %v3327, %v3325
  %3392 = vmatprep.subr.bf16.mxu0 %v3329
  %3393 = vmatpush1.bf16.msra.mxu0 %v3328
  %3394 = vmatprep.subr.bf16.mxu0 %v3331
  %3395 = vmatpush1.bf16.msra.mxu0 %v3330
  %3396 = vmatprep.subr.bf16.mxu0 %v3333
  %3397 = vmatpush1.bf16.msra.mxu0 %v3332
  %3398 = vmatprep.subr.bf16.mxu0 %v3335
  %3399 = vmatpush1.bf16.msra.mxu0 %v3334
  %3400 = vmatprep.subr.bf16.mxu0 %v3337
  %3401 = vmatpush1.bf16.msra.mxu0 %v3336
  %3402 = vmatprep.subr.bf16.mxu0 %v3339
  %3403 = vmatpush1.bf16.msra.mxu0 %v3338
  %3404 = vmatprep.subr.bf16.mxu0 %v3341
  %3405 = vmatpush1.bf16.msra.mxu0 %v3340
  %3406 = vmatprep.subr.bf16.mxu0 %v3343
  %3407 = vmatpush1.bf16.msra.mxu0 %v3342
  %3408 = vmatprep.subr.bf16.mxu0 %v3345
  %3409 = vmatpush1.bf16.msra.mxu0 %v3344
  %3410 = vmatprep.subr.bf16.mxu0 %v3347
  %3411 = vmatpush1.bf16.msra.mxu0 %v3346
  %3412 = vmatprep.subr.bf16.mxu0 %v3349
  %3413 = vmatpush1.bf16.msra.mxu0 %v3348
  %3414 = vmatprep.subr.bf16.mxu0 %v3351
  %3415 = vmatpush1.bf16.msra.mxu0 %v3350
  %3416 = vmatprep.subr.bf16.mxu0 %v3353
  %3417 = vmatpush1.bf16.msra.mxu0 %v3352
  %3418 = vmatprep.subr.bf16.mxu0 %v3355
  %3419 = vmatpush1.bf16.msra.mxu0 %v3354
  %3420 = vmatprep.subr.bf16.mxu0 %v3357
  %3421 = vmatpush1.bf16.msra.mxu0 %v3356
  %3422 = vmatprep.subr.bf16.mxu0 %v3359
  %3423 = vmatpush1.bf16.msra.mxu0 %v3358
  %3424 = vmatprep.mubr.bf16.mxu0 %v102
  %3425 = vmatmul.mubr.bf16.gmra.mrb[0].mxu0 %v101
  %v3426 = vpop.f32.mrb[0].mxu0
  %v3427 = vadd.f32 0.0, %v3426
  %v3428 = vpop.f32.mrb[0].mxu0
  %v3429 = vadd.f32 0.0, %v3428
  %v3430 = vpop.f32.mrb[0].mxu0
  %v3431 = vpop.f32.mrb[0].mxu0
  %3432 = vdwg.mxu0
  %v3465 = vunpack.c.l.b16 %v555
  %v3466 = vunpack.c.h.b16 %v555
  %v3467 = vunpack.c.l.b16 %v556
  %v3468 = vunpack.c.h.b16 %v556
  %v3469 = vunpack.c.l.b16 %v557
  %v3470 = vunpack.c.h.b16 %v557
  %v3471 = vunpack.c.l.b16 %v558
  %v3472 = vunpack.c.h.b16 %v558
  %v3473 = vunpack.c.l.b16 %v559
  %v3474 = vunpack.c.h.b16 %v559
  %v3475 = vunpack.c.l.b16 %v560
  %v3476 = vunpack.c.h.b16 %v560
  %v3477 = vunpack.c.l.b16 %v561
  %v3478 = vunpack.c.h.b16 %v561
  %v3479 = vunpack.c.l.b16 %v562
  %v3480 = vunpack.c.h.b16 %v562
  %v3481 = vunpack.c.l.b16 %v563
  %v3482 = vunpack.c.h.b16 %v563
  %v3483 = vunpack.c.l.b16 %v564
  %v3484 = vunpack.c.h.b16 %v564
  %v3485 = vunpack.c.l.b16 %v565
  %v3486 = vunpack.c.h.b16 %v565
  %v3487 = vunpack.c.l.b16 %v566
  %v3488 = vunpack.c.h.b16 %v566
  %v3489 = vunpack.c.l.b16 %v567
  %v3490 = vunpack.c.h.b16 %v567
  %v3491 = vunpack.c.l.b16 %v568
  %v3492 = vunpack.c.h.b16 %v568
  %v3493 = vunpack.c.l.b16 %v569
  %v3494 = vunpack.c.h.b16 %v569
  %v3495 = vunpack.c.l.b16 %v570
  %v3496 = vunpack.c.h.b16 %v570
  %v3497 = vunpack.c.l.b16 %v571
  %v3498 = vunpack.c.h.b16 %v571
  %v3499 = vunpack.c.l.b16 %v572
  %v3500 = vunpack.c.h.b16 %v572
  %v3501 = vunpack.c.l.b16 %v573
  %v3502 = vunpack.c.h.b16 %v573
  %v3503 = vunpack.c.l.b16 %v574
  %v3504 = vunpack.c.h.b16 %v574
  %v3505 = vunpack.c.l.b16 %v575
  %v3506 = vunpack.c.h.b16 %v575
  %v3507 = vunpack.c.l.b16 %v576
  %v3508 = vunpack.c.h.b16 %v576
  %v3509 = vunpack.c.l.b16 %v577
  %v3510 = vunpack.c.h.b16 %v577
  %v3511 = vunpack.c.l.b16 %v578
  %v3512 = vunpack.c.h.b16 %v578
  %v3513 = vunpack.c.l.b16 %v579
  %v3514 = vunpack.c.h.b16 %v579
  %v3515 = vunpack.c.l.b16 %v580
  %v3516 = vunpack.c.h.b16 %v580
  %v3517 = vunpack.c.l.b16 %v581
  %v3518 = vunpack.c.h.b16 %v581
  %v3519 = vunpack.c.l.b16 %v582
  %v3520 = vunpack.c.h.b16 %v582
  %v3521 = vunpack.c.l.b16 %v583
  %v3522 = vunpack.c.h.b16 %v583
  %v3523 = vunpack.c.l.b16 %v584
  %v3524 = vunpack.c.h.b16 %v584
  %v3525 = vunpack.c.l.b16 %v585
  %v3526 = vunpack.c.h.b16 %v585
  %v3527 = vunpack.c.l.b16 %v586
  %v3528 = vunpack.c.h.b16 %v586
  %v3529 = vpack.c.b16 %v3467, %v3465
  %v3530 = vpack.c.b16 %v3468, %v3466
  %v3531 = vpack.c.b16 %v3471, %v3469
  %v3532 = vpack.c.b16 %v3472, %v3470
  %v3533 = vpack.c.b16 %v3475, %v3473
  %v3534 = vpack.c.b16 %v3476, %v3474
  %v3535 = vpack.c.b16 %v3479, %v3477
  %v3536 = vpack.c.b16 %v3480, %v3478
  %v3537 = vpack.c.b16 %v3483, %v3481
  %v3538 = vpack.c.b16 %v3484, %v3482
  %v3539 = vpack.c.b16 %v3487, %v3485
  %v3540 = vpack.c.b16 %v3488, %v3486
  %v3541 = vpack.c.b16 %v3491, %v3489
  %v3542 = vpack.c.b16 %v3492, %v3490
  %v3543 = vpack.c.b16 %v3495, %v3493
  %v3544 = vpack.c.b16 %v3496, %v3494
  %v3545 = vpack.c.b16 %v3499, %v3497
  %v3546 = vpack.c.b16 %v3500, %v3498
  %v3547 = vpack.c.b16 %v3503, %v3501
  %v3548 = vpack.c.b16 %v3504, %v3502
  %v3549 = vpack.c.b16 %v3507, %v3505
  %v3550 = vpack.c.b16 %v3508, %v3506
  %v3551 = vpack.c.b16 %v3511, %v3509
  %v3552 = vpack.c.b16 %v3512, %v3510
  %v3553 = vpack.c.b16 %v3515, %v3513
  %v3554 = vpack.c.b16 %v3516, %v3514
  %v3555 = vpack.c.b16 %v3519, %v3517
  %v3556 = vpack.c.b16 %v3520, %v3518
  %v3557 = vpack.c.b16 %v3523, %v3521
  %v3558 = vpack.c.b16 %v3524, %v3522
  %v3559 = vpack.c.b16 %v3527, %v3525
  %v3560 = vpack.c.b16 %v3528, %v3526
  %3593 = vmatprep.subr.bf16.mxu0 %v3530
  %3594 = vmatpush1.bf16.msra.mxu0 %v3529
  %3595 = vmatprep.subr.bf16.mxu0 %v3532
  %3596 = vmatpush1.bf16.msra.mxu0 %v3531
  %3597 = vmatprep.subr.bf16.mxu0 %v3534
  %3598 = vmatpush1.bf16.msra.mxu0 %v3533
  %3599 = vmatprep.subr.bf16.mxu0 %v3536
  %3600 = vmatpush1.bf16.msra.mxu0 %v3535
  %3601 = vmatprep.subr.bf16.mxu0 %v3538
  %3602 = vmatpush1.bf16.msra.mxu0 %v3537
  %3603 = vmatprep.subr.bf16.mxu0 %v3540
  %3604 = vmatpush1.bf16.msra.mxu0 %v3539
  %3605 = vmatprep.subr.bf16.mxu0 %v3542
  %3606 = vmatpush1.bf16.msra.mxu0 %v3541
  %3607 = vmatprep.subr.bf16.mxu0 %v3544
  %3608 = vmatpush1.bf16.msra.mxu0 %v3543
  %3609 = vmatprep.subr.bf16.mxu0 %v3546
  %3610 = vmatpush1.bf16.msra.mxu0 %v3545
  %3611 = vmatprep.subr.bf16.mxu0 %v3548
  %3612 = vmatpush1.bf16.msra.mxu0 %v3547
  %3613 = vmatprep.subr.bf16.mxu0 %v3550
  %3614 = vmatpush1.bf16.msra.mxu0 %v3549
  %3615 = vmatprep.subr.bf16.mxu0 %v3552
  %3616 = vmatpush1.bf16.msra.mxu0 %v3551
  %3617 = vmatprep.subr.bf16.mxu0 %v3554
  %3618 = vmatpush1.bf16.msra.mxu0 %v3553
  %3619 = vmatprep.subr.bf16.mxu0 %v3556
  %3620 = vmatpush1.bf16.msra.mxu0 %v3555
  %3621 = vmatprep.subr.bf16.mxu0 %v3558
  %3622 = vmatpush1.bf16.msra.mxu0 %v3557
  %3623 = vmatprep.subr.bf16.mxu0 %v3560
  %3624 = vmatpush1.bf16.msra.mxu0 %v3559
  %3625 = vmatprep.mubr.bf16.mxu0 %v104
  %3626 = vmatmul.mubr.bf16.gmra.mrb[0].mxu0 %v103
  %v3627 = vpop.f32.mrb[0].mxu0
  %v3628 = vadd.f32 0.0, %v3627
  %v3629 = vpop.f32.mrb[0].mxu0
  %v3630 = vadd.f32 0.0, %v3629
  %v3631 = vpop.f32.mrb[0].mxu0
  %v3632 = vpop.f32.mrb[0].mxu0
  %3633 = vdwg.mxu0
  %v3666 = vunpack.c.l.b16 %v587
  %v3667 = vunpack.c.h.b16 %v587
  %v3668 = vunpack.c.l.b16 %v588
  %v3669 = vunpack.c.h.b16 %v588
  %v3670 = vunpack.c.l.b16 %v589
  %v3671 = vunpack.c.h.b16 %v589
  %v3672 = vunpack.c.l.b16 %v590
  %v3673 = vunpack.c.h.b16 %v590
  %v3674 = vunpack.c.l.b16 %v591
  %v3675 = vunpack.c.h.b16 %v591
  %v3676 = vunpack.c.l.b16 %v592
  %v3677 = vunpack.c.h.b16 %v592
  %v3678 = vunpack.c.l.b16 %v593
  %v3679 = vunpack.c.h.b16 %v593
  %v3680 = vunpack.c.l.b16 %v594
  %v3681 = vunpack.c.h.b16 %v594
  %v3682 = vunpack.c.l.b16 %v595
  %v3683 = vunpack.c.h.b16 %v595
  %v3684 = vunpack.c.l.b16 %v596
  %v3685 = vunpack.c.h.b16 %v596
  %v3686 = vunpack.c.l.b16 %v597
  %v3687 = vunpack.c.h.b16 %v597
  %v3688 = vunpack.c.l.b16 %v598
  %v3689 = vunpack.c.h.b16 %v598
  %v3690 = vunpack.c.l.b16 %v599
  %v3691 = vunpack.c.h.b16 %v599
  %v3692 = vunpack.c.l.b16 %v600
  %v3693 = vunpack.c.h.b16 %v600
  %v3694 = vunpack.c.l.b16 %v601
  %v3695 = vunpack.c.h.b16 %v601
  %v3696 = vunpack.c.l.b16 %v602
  %v3697 = vunpack.c.h.b16 %v602
  %v3698 = vunpack.c.l.b16 %v603
  %v3699 = vunpack.c.h.b16 %v603
  %v3700 = vunpack.c.l.b16 %v604
  %v3701 = vunpack.c.h.b16 %v604
  %v3702 = vunpack.c.l.b16 %v605
  %v3703 = vunpack.c.h.b16 %v605
  %v3704 = vunpack.c.l.b16 %v606
  %v3705 = vunpack.c.h.b16 %v606
  %v3706 = vunpack.c.l.b16 %v607
  %v3707 = vunpack.c.h.b16 %v607
  %v3708 = vunpack.c.l.b16 %v608
  %v3709 = vunpack.c.h.b16 %v608
  %v3710 = vunpack.c.l.b16 %v609
  %v3711 = vunpack.c.h.b16 %v609
  %v3712 = vunpack.c.l.b16 %v610
  %v3713 = vunpack.c.h.b16 %v610
  %v3714 = vunpack.c.l.b16 %v611
  %v3715 = vunpack.c.h.b16 %v611
  %v3716 = vunpack.c.l.b16 %v612
  %v3717 = vunpack.c.h.b16 %v612
  %v3718 = vunpack.c.l.b16 %v613
  %v3719 = vunpack.c.h.b16 %v613
  %v3720 = vunpack.c.l.b16 %v614
  %v3721 = vunpack.c.h.b16 %v614
  %v3722 = vunpack.c.l.b16 %v615
  %v3723 = vunpack.c.h.b16 %v615
  %v3724 = vunpack.c.l.b16 %v616
  %v3725 = vunpack.c.h.b16 %v616
  %v3726 = vunpack.c.l.b16 %v617
  %v3727 = vunpack.c.h.b16 %v617
  %v3728 = vunpack.c.l.b16 %v618
  %v3729 = vunpack.c.h.b16 %v618
  %v3730 = vpack.c.b16 %v3668, %v3666
  %v3731 = vpack.c.b16 %v3669, %v3667
  %v3732 = vpack.c.b16 %v3672, %v3670
  %v3733 = vpack.c.b16 %v3673, %v3671
  %v3734 = vpack.c.b16 %v3676, %v3674
  %v3735 = vpack.c.b16 %v3677, %v3675
  %v3736 = vpack.c.b16 %v3680, %v3678
  %v3737 = vpack.c.b16 %v3681, %v3679
  %v3738 = vpack.c.b16 %v3684, %v3682
  %v3739 = vpack.c.b16 %v3685, %v3683
  %v3740 = vpack.c.b16 %v3688, %v3686
  %v3741 = vpack.c.b16 %v3689, %v3687
  %v3742 = vpack.c.b16 %v3692, %v3690
  %v3743 = vpack.c.b16 %v3693, %v3691
  %v3744 = vpack.c.b16 %v3696, %v3694
  %v3745 = vpack.c.b16 %v3697, %v3695
  %v3746 = vpack.c.b16 %v3700, %v3698
  %v3747 = vpack.c.b16 %v3701, %v3699
  %v3748 = vpack.c.b16 %v3704, %v3702
  %v3749 = vpack.c.b16 %v3705, %v3703
  %v3750 = vpack.c.b16 %v3708, %v3706
  %v3751 = vpack.c.b16 %v3709, %v3707
  %v3752 = vpack.c.b16 %v3712, %v3710
  %v3753 = vpack.c.b16 %v3713, %v3711
  %v3754 = vpack.c.b16 %v3716, %v3714
  %v3755 = vpack.c.b16 %v3717, %v3715
  %v3756 = vpack.c.b16 %v3720, %v3718
  %v3757 = vpack.c.b16 %v3721, %v3719
  %v3758 = vpack.c.b16 %v3724, %v3722
  %v3759 = vpack.c.b16 %v3725, %v3723
  %v3760 = vpack.c.b16 %v3728, %v3726
  %v3761 = vpack.c.b16 %v3729, %v3727
  %3794 = vmatprep.subr.bf16.mxu0 %v3731
  %3795 = vmatpush1.bf16.msra.mxu0 %v3730
  %3796 = vmatprep.subr.bf16.mxu0 %v3733
  %3797 = vmatpush1.bf16.msra.mxu0 %v3732
  %3798 = vmatprep.subr.bf16.mxu0 %v3735
  %3799 = vmatpush1.bf16.msra.mxu0 %v3734
  %3800 = vmatprep.subr.bf16.mxu0 %v3737
  %3801 = vmatpush1.bf16.msra.mxu0 %v3736
  %3802 = vmatprep.subr.bf16.mxu0 %v3739
  %3803 = vmatpush1.bf16.msra.mxu0 %v3738
  %3804 = vmatprep.subr.bf16.mxu0 %v3741
  %3805 = vmatpush1.bf16.msra.mxu0 %v3740
  %3806 = vmatprep.subr.bf16.mxu0 %v3743
  %3807 = vmatpush1.bf16.msra.mxu0 %v3742
  %3808 = vmatprep.subr.bf16.mxu0 %v3745
  %3809 = vmatpush1.bf16.msra.mxu0 %v3744
  %3810 = vmatprep.subr.bf16.mxu0 %v3747
  %3811 = vmatpush1.bf16.msra.mxu0 %v3746
  %3812 = vmatprep.subr.bf16.mxu0 %v3749
  %3813 = vmatpush1.bf16.msra.mxu0 %v3748
  %3814 = vmatprep.subr.bf16.mxu0 %v3751
  %3815 = vmatpush1.bf16.msra.mxu0 %v3750
  %3816 = vmatprep.subr.bf16.mxu0 %v3753
  %3817 = vmatpush1.bf16.msra.mxu0 %v3752
  %3818 = vmatprep.subr.bf16.mxu0 %v3755
  %3819 = vmatpush1.bf16.msra.mxu0 %v3754
  %3820 = vmatprep.subr.bf16.mxu0 %v3757
  %3821 = vmatpush1.bf16.msra.mxu0 %v3756
  %3822 = vmatprep.subr.bf16.mxu0 %v3759
  %3823 = vmatpush1.bf16.msra.mxu0 %v3758
  %3824 = vmatprep.subr.bf16.mxu0 %v3761
  %3825 = vmatpush1.bf16.msra.mxu0 %v3760
  %3826 = vmatprep.mubr.bf16.mxu0 %v106
  %3827 = vmatmul.mubr.bf16.gmra.mrb[0].mxu0 %v105
  %v3828 = vpop.f32.mrb[0].mxu0
  %v3829 = vadd.f32 0.0, %v3828
  %v3830 = vpop.f32.mrb[0].mxu0
  %v3831 = vadd.f32 0.0, %v3830
  %v3832 = vpop.f32.mrb[0].mxu0
  %v3833 = vpop.f32.mrb[0].mxu0
  %3834 = vdwg.mxu0
  %v3867 = vcombine.low %v814, %v816
  %v3868 = vcombine.low %v1015, %v1017
  %v3869 = vcombine.low %v1216, %v1218
  %v3870 = vcombine.low %v1417, %v1419
  %v3871 = vcombine.low %v1618, %v1620
  %v3872 = vcombine.low %v1819, %v1821
  %v3873 = vcombine.low %v2020, %v2022
  %v3874 = vcombine.low %v2221, %v2223
  %v3875 = vcombine.low %v2422, %v2424
  %v3876 = vcombine.low %v2623, %v2625
  %v3877 = vcombine.low %v2824, %v2826
  %v3878 = vcombine.low %v3025, %v3027
  %v3879 = vcombine.low %v3226, %v3228
  %v3880 = vcombine.low %v3427, %v3429
  %v3881 = vcombine.low %v3628, %v3630
  %v3882 = vcombine.low %v3829, %v3831
  %3899 = vst [vmem:[%s2] sm:$0xff] %v3867
  %3900 = vst [vmem:[%s2 + $0x8] sm:$0xff] %v3868
  %3901 = vst [vmem:[%s2 + $0x10] sm:$0xff] %v3869
  %3902 = vst [vmem:[%s2 + $0x18] sm:$0xff] %v3870
  %3903 = vst [vmem:[%s2 + $0x20] sm:$0xff] %v3871
  %3904 = vst [vmem:[%s2 + $0x28] sm:$0xff] %v3872
  %3905 = vst [vmem:[%s2 + $0x30] sm:$0xff] %v3873
  %3906 = vst [vmem:[%s2 + $0x38] sm:$0xff] %v3874
  %3907 = vst [vmem:[%s2 + $0x40] sm:$0xff] %v3875
  %3908 = vst [vmem:[%s2 + $0x48] sm:$0xff] %v3876
  %3909 = vst [vmem:[%s2 + $0x50] sm:$0xff] %v3877
  %3910 = vst [vmem:[%s2 + $0x58] sm:$0xff] %v3878
  %3911 = vst [vmem:[%s2 + $0x60] sm:$0xff] %v3879
  %3912 = vst [vmem:[%s2 + $0x68] sm:$0xff] %v3880
  %3913 = vst [vmem:[%s2 + $0x70] sm:$0xff] %v3881
  %3914 = vst [vmem:[%s2 + $0x78] sm:$0xff] %v3882
  // Predicated region
  $region10: #{neural_operator_block.2} parent=0 // pred_check
    _
  $region11: #{neural_operator_block.2} parent=0 // pred_check_branch
    %3916 = sbr.rel (0) target = $region13
  $region12: #{neural_operator_block.2} parent=0 // pred_region
    _
  $region13: #{neural_operator_block.2} parent=0 // pred_fallthru
    _
  // Predicated region
  $region14: #{neural_operator_block.2} parent=0 // pred_check
    _
  $region15: #{neural_operator_block.2} parent=0 // pred_check_branch
    %3918 = sbr.rel (0) target = $region17
  $region16: #{neural_operator_block.2} parent=0 // pred_region
    _
  $region17: #{neural_operator_block.2} parent=0 // pred_fallthru
    _

// kernel: neural_operator_block.3
$region0: #{neural_operator_block.3}
  #allocation0 [shape = 'u32[]', space=smem, size = 0x4, offset = 0x4, fixed_abs, tag = 'smem constant byte address 0x4 - core index']
  #allocation1 [shape = 'u32[144,128]{1,0:T(1,128)}', space=vmem, size = 0x12000, scoped, tag = 'internal scratch']
  %s0 = inlined_call_operand.vmem [shape: f32[16,1024], index: 0, kind: input, shape index: {}]
  %s1 = inlined_call_operand.vmem [shape: f32[16,1024], index: 1, kind: input, shape index: {}]
  %s2 = inlined_call_operand.vmem [shape: bf16[32,16], index: 2, kind: input, shape index: {}]
  %s3 = inlined_call_operand.vmem [shape: f32[32,1], index: 3, kind: input, shape index: {}]
  %s4 = inlined_call_operand.vmem [shape: bf16[16,48], index: 4, kind: input, shape index: {}]
  %s5 = inlined_call_operand.vmem [shape: f32[16,1], index: 5, kind: input, shape index: {}]
  %s6 = inlined_call_operand.vmem [shape: f32[16,1024], index: 6, kind: output, shape index: {}]
  %s7 = sld [smem:[#allocation0]]
  $region34: #{neural_operator_block.3} parent=0
    _
  %s9 = ssub.s32 1, %s7
  %s10 = scalar_select 0, %s9, %s7
  // Predicated region
  $region2: #{neural_operator_block.3} parent=0 // pred_check
    _
  $region3: #{neural_operator_block.3} parent=0 // pred_check_branch
    %12 = sbr.rel (0) target = $region5
  $region4: #{neural_operator_block.3} parent=0 // pred_region
    _
  $region5: #{neural_operator_block.3} parent=0 // pred_fallthru
    _
  // Predicated region
  $region6: #{neural_operator_block.3} parent=0 // pred_check
    _
  $region7: #{neural_operator_block.3} parent=0 // pred_check_branch
    %14 = sbr.rel (0) target = $region9
  $region8: #{neural_operator_block.3} parent=0 // pred_region
    _
  $region9: #{neural_operator_block.3} parent=0 // pred_fallthru
    _
  // Predicated region
  $region10: #{neural_operator_block.3} parent=0 // pred_check
    _
  $region11: #{neural_operator_block.3} parent=0 // pred_check_branch
    %16 = sbr.rel (0) target = $region13
  $region12: #{neural_operator_block.3} parent=0 // pred_region
    _
  $region13: #{neural_operator_block.3} parent=0 // pred_fallthru
    _
  // Predicated region
  $region14: #{neural_operator_block.3} parent=0 // pred_check
    _
  $region15: #{neural_operator_block.3} parent=0 // pred_check_branch
    %18 = sbr.rel (0) target = $region17
  $region16: #{neural_operator_block.3} parent=0 // pred_region
    _
  $region17: #{neural_operator_block.3} parent=0 // pred_fallthru
    _
  // Predicated region
  $region18: #{neural_operator_block.3} parent=0 // pred_check
    _
  $region19: #{neural_operator_block.3} parent=0 // pred_check_branch
    %20 = sbr.rel (0) target = $region21
  $region20: #{neural_operator_block.3} parent=0 // pred_region
    _
  $region21: #{neural_operator_block.3} parent=0 // pred_fallthru
    _
  // Predicated region
  $region22: #{neural_operator_block.3} parent=0 // pred_check
    _
  $region23: #{neural_operator_block.3} parent=0 // pred_check_branch
    %22 = sbr.rel (0) target = $region25
  $region24: #{neural_operator_block.3} parent=0 // pred_region
    _
  $region25: #{neural_operator_block.3} parent=0 // pred_fallthru
    _
  %v24 = vld [vmem:[%s0] sm:$0xff]
  %v25 = vld [vmem:[%s0 + $0x8] sm:$0xff]
  %v26 = vld [vmem:[%s0 + $0x10] sm:$0xff]
  %v27 = vld [vmem:[%s0 + $0x18] sm:$0xff]
  %v28 = vld [vmem:[%s0 + $0x20] sm:$0xff]
  %v29 = vld [vmem:[%s0 + $0x28] sm:$0xff]
  %v30 = vld [vmem:[%s0 + $0x30] sm:$0xff]
  %v31 = vld [vmem:[%s0 + $0x38] sm:$0xff]
  %v32 = vld [vmem:[%s0 + $0x40] sm:$0xff]
  %v33 = vld [vmem:[%s0 + $0x48] sm:$0xff]
  %v34 = vld [vmem:[%s0 + $0x50] sm:$0xff]
  %v35 = vld [vmem:[%s0 + $0x58] sm:$0xff]
  %v36 = vld [vmem:[%s0 + $0x60] sm:$0xff]
  %v37 = vld [vmem:[%s0 + $0x68] sm:$0xff]
  %v38 = vld [vmem:[%s0 + $0x70] sm:$0xff]
  %v39 = vld [vmem:[%s0 + $0x78] sm:$0xff]
  %v40 = vpack.c.bf16 %v32, %v24
  %v41 = vpack.c.bf16 %v33, %v25
  %v42 = vpack.c.bf16 %v34, %v26
  %v43 = vpack.c.bf16 %v35, %v27
  %v44 = vpack.c.bf16 %v36, %v28
  %v45 = vpack.c.bf16 %v37, %v29
  %v46 = vpack.c.bf16 %v38, %v30
  %v47 = vpack.c.bf16 %v39, %v31
  %v48 = vld [vmem:[%s1] sm:$0xff]
  %v49 = vld [vmem:[%s1 + $0x8] sm:$0xff]
  %v50 = vld [vmem:[%s1 + $0x10] sm:$0xff]
  %v51 = vld [vmem:[%s1 + $0x18] sm:$0xff]
  %v52 = vld [vmem:[%s1 + $0x20] sm:$0xff]
  %v53 = vld [vmem:[%s1 + $0x28] sm:$0xff]
  %v54 = vld [vmem:[%s1 + $0x30] sm:$0xff]
  %v55 = vld [vmem:[%s1 + $0x38] sm:$0xff]
  %v56 = vld [vmem:[%s1 + $0x40] sm:$0xff]
  %v57 = vld [vmem:[%s1 + $0x48] sm:$0xff]
  %v58 = vld [vmem:[%s1 + $0x50] sm:$0xff]
  %v59 = vld [vmem:[%s1 + $0x58] sm:$0xff]
  %v60 = vld [vmem:[%s1 + $0x60] sm:$0xff]
  %v61 = vld [vmem:[%s1 + $0x68] sm:$0xff]
  %v62 = vld [vmem:[%s1 + $0x70] sm:$0xff]
  %v63 = vld [vmem:[%s1 + $0x78] sm:$0xff]
  %v64 = vpack.c.bf16 %v56, %v48
  %v65 = vpack.c.bf16 %v57, %v49
  %v66 = vpack.c.bf16 %v58, %v50
  %v67 = vpack.c.bf16 %v59, %v51
  %v68 = vpack.c.bf16 %v60, %v52
  %v69 = vpack.c.bf16 %v61, %v53
  %v70 = vpack.c.bf16 %v62, %v54
  %v71 = vpack.c.bf16 %v63, %v55
  %v72 = vld [vmem:[%s2] sm:$0xf]
  %v73 = vld [vmem:[%s2 + $0x4] sm:$0xf]
  %v74 = vld [vmem:[%s2 + $0x8] sm:$0xf]
  %v75 = vld [vmem:[%s2 + $0xc] sm:$0xf]
  %v76 = vld [vmem:[%s3] sm:$0xff]
  %v77 = vld [vmem:[%s3 + $0x8] sm:$0xff]
  %v78 = vld [vmem:[%s3 + $0x10] sm:$0xff]
  %v79 = vld [vmem:[%s3 + $0x18] sm:$0xff]
  %81 = vset.pattern.permute.xlu0 0
  %82 = vperm.xlu0 %81, %v76
  %v83 = vpop.permute.xlu0 %82
  %86 = vset.pattern.permute.xlu0 0
  %87 = vperm.xlu0 %86, %v77
  %v88 = vpop.permute.xlu0 %87
  %91 = vset.pattern.permute.xlu0 0
  %92 = vperm.xlu0 %91, %v78
  %v93 = vpop.permute.xlu0 %92
  %96 = vset.pattern.permute.xlu0 0
  %97 = vperm.xlu0 %96, %v79
  %v98 = vpop.permute.xlu0 %97
  %v104 = vunpack.c.l.b16 %v72
  %v105 = vunpack.c.l.b16 %v73
  %v106 = vunpack.c.l.b16 %v74
  %v107 = vunpack.c.l.b16 %v75
  %v108 = vpack.c.b16 %v105, %v104
  %v109 = vpack.c.b16 %v107, %v106
  %vm110 = vcmask 130048
  %v112 = vsel %vm110, %v108, 0
  %v115 = vsel %vm110, %v109, 0
  %117 = vmatprep.subr.bf16.mxu0 %v41
  %118 = vmatpush1.bf16.msra.mxu0 %v40
  %119 = vmatprep.subr.bf16.mxu0 0
  %120 = vmatpush1.bf16.msra.mxu0 0
  %121 = vmatprep.subr.bf16.mxu0 0
  %122 = vmatpush1.bf16.msra.mxu0 0
  %123 = vmatprep.subr.bf16.mxu0 0
  %124 = vmatpush1.bf16.msra.mxu0 0
  %125 = vmatprep.subr.bf16.mxu0 0
  %126 = vmatpush1.bf16.msra.mxu0 0
  %127 = vmatprep.subr.bf16.mxu0 0
  %128 = vmatpush1.bf16.msra.mxu0 0
  %129 = vmatprep.subr.bf16.mxu0 0
  %130 = vmatpush1.bf16.msra.mxu0 0
  %131 = vmatprep.subr.bf16.mxu0 0
  %132 = vmatpush1.bf16.msra.mxu0 0
  %133 = vmatprep.subr.bf16.mxu0 0
  %134 = vmatpush1.bf16.msra.mxu0 0
  %135 = vmatprep.subr.bf16.mxu0 0
  %136 = vmatpush1.bf16.msra.mxu0 0
  %137 = vmatprep.subr.bf16.mxu0 0
  %138 = vmatpush1.bf16.msra.mxu0 0
  %139 = vmatprep.subr.bf16.mxu0 0
  %140 = vmatpush1.bf16.msra.mxu0 0
  %141 = vmatprep.subr.bf16.mxu0 0
  %142 = vmatpush1.bf16.msra.mxu0 0
  %143 = vmatprep.subr.bf16.mxu0 0
  %144 = vmatpush1.bf16.msra.mxu0 0
  %145 = vmatprep.subr.bf16.mxu0 0
  %146 = vmatpush1.bf16.msra.mxu0 0
  %147 = vmatprep.subr.bf16.mxu0 0
  %148 = vmatpush1.bf16.msra.mxu0 0
  %149 = vmatprep.mubr.bf16.mxu0 0
  %150 = vmatmul.mubr.bf16.gmra.mrb[0].mxu0 %v112
  %v151 = vpop.f32.mrb[0].mxu0
  %v152 = vadd.f32 %v83, %v151
  %v153 = vpop.f32.mrb[0].mxu0
  %v154 = vadd.f32 %v83, %v153
  %v155 = vpop.f32.mrb[0].mxu0
  %v156 = vadd.f32 %v88, %v155
  %v157 = vpop.f32.mrb[0].mxu0
  %v158 = vadd.f32 %v88, %v157
  %159 = vmatprep.mubr.bf16.mxu0 0
  %160 = vmatmul.mubr.bf16.gmra.mrb[0].mxu0 %v115
  %v161 = vpop.f32.mrb[0].mxu0
  %v162 = vadd.f32 %v93, %v161
  %v163 = vpop.f32.mrb[0].mxu0
  %v164 = vadd.f32 %v93, %v163
  %v165 = vpop.f32.mrb[0].mxu0
  %v166 = vadd.f32 %v98, %v165
  %v167 = vpop.f32.mrb[0].mxu0
  %v168 = vadd.f32 %v98, %v167
  %169 = vdwg.mxu0
  %170 = vmatprep.subr.bf16.mxu0 %v43
  %171 = vmatpush1.bf16.msra.mxu0 %v42
  %172 = vmatprep.subr.bf16.mxu0 0
  %173 = vmatpush1.bf16.msra.mxu0 0
  %174 = vmatprep.subr.bf16.mxu0 0
  %175 = vmatpush1.bf16.msra.mxu0 0
  %176 = vmatprep.subr.bf16.mxu0 0
  %177 = vmatpush1.bf16.msra.mxu0 0
  %178 = vmatprep.subr.bf16.mxu0 0
  %179 = vmatpush1.bf16.msra.mxu0 0
  %180 = vmatprep.subr.bf16.mxu0 0
  %181 = vmatpush1.bf16.msra.mxu0 0
  %182 = vmatprep.subr.bf16.mxu0 0
  %183 = vmatpush1.bf16.msra.mxu0 0
  %184 = vmatprep.subr.bf16.mxu0 0
  %185 = vmatpush1.bf16.msra.mxu0 0
  %186 = vmatprep.subr.bf16.mxu0 0
  %187 = vmatpush1.bf16.msra.mxu0 0
  %188 = vmatprep.subr.bf16.mxu0 0
  %189 = vmatpush1.bf16.msra.mxu0 0
  %190 = vmatprep.subr.bf16.mxu0 0
  %191 = vmatpush1.bf16.msra.mxu0 0
  %192 = vmatprep.subr.bf16.mxu0 0
  %193 = vmatpush1.bf16.msra.mxu0 0
  %194 = vmatprep.subr.bf16.mxu0 0
  %195 = vmatpush1.bf16.msra.mxu0 0
  %196 = vmatprep.subr.bf16.mxu0 0
  %197 = vmatpush1.bf16.msra.mxu0 0
  %198 = vmatprep.subr.bf16.mxu0 0
  %199 = vmatpush1.bf16.msra.mxu0 0
  %200 = vmatprep.subr.bf16.mxu0 0
  %201 = vmatpush1.bf16.msra.mxu0 0
  %202 = vmatprep.mubr.bf16.mxu0 0
  %203 = vmatmul.mubr.bf16.gmra.mrb[0].mxu0 %v112
  %v204 = vpop.f32.mrb[0].mxu0
  %v205 = vadd.f32 %v83, %v204
  %v206 = vpop.f32.mrb[0].mxu0
  %v207 = vadd.f32 %v83, %v206
  %v208 = vpop.f32.mrb[0].mxu0
  %v209 = vadd.f32 %v88, %v208
  %v210 = vpop.f32.mrb[0].mxu0
  %v211 = vadd.f32 %v88, %v210
  %212 = vmatprep.mubr.bf16.mxu0 0
  %213 = vmatmul.mubr.bf16.gmra.mrb[0].mxu0 %v115
  %v214 = vpop.f32.mrb[0].mxu0
  %v215 = vadd.f32 %v93, %v214
  %v216 = vpop.f32.mrb[0].mxu0
  %v217 = vadd.f32 %v93, %v216
  %v218 = vpop.f32.mrb[0].mxu0
  %v219 = vadd.f32 %v98, %v218
  %v220 = vpop.f32.mrb[0].mxu0
  %v221 = vadd.f32 %v98, %v220
  %222 = vdwg.mxu0
  %223 = vmatprep.subr.bf16.mxu0 %v45
  %224 = vmatpush1.bf16.msra.mxu0 %v44
  %225 = vmatprep.subr.bf16.mxu0 0
  %226 = vmatpush1.bf16.msra.mxu0 0
  %227 = vmatprep.subr.bf16.mxu0 0
  %228 = vmatpush1.bf16.msra.mxu0 0
  %229 = vmatprep.subr.bf16.mxu0 0
  %230 = vmatpush1.bf16.msra.mxu0 0
  %231 = vmatprep.subr.bf16.mxu0 0
  %232 = vmatpush1.bf16.msra.mxu0 0
  %233 = vmatprep.subr.bf16.mxu0 0
  %234 = vmatpush1.bf16.msra.mxu0 0
  %235 = vmatprep.subr.bf16.mxu0 0
  %236 = vmatpush1.bf16.msra.mxu0 0
  %237 = vmatprep.subr.bf16.mxu0 0
  %238 = vmatpush1.bf16.msra.mxu0 0
  %239 = vmatprep.subr.bf16.mxu0 0
  %240 = vmatpush1.bf16.msra.mxu0 0
  %241 = vmatprep.subr.bf16.mxu0 0
  %242 = vmatpush1.bf16.msra.mxu0 0
  %243 = vmatprep.subr.bf16.mxu0 0
  %244 = vmatpush1.bf16.msra.mxu0 0
  %245 = vmatprep.subr.bf16.mxu0 0
  %246 = vmatpush1.bf16.msra.mxu0 0
  %247 = vmatprep.subr.bf16.mxu0 0
  %248 = vmatpush1.bf16.msra.mxu0 0
  %249 = vmatprep.subr.bf16.mxu0 0
  %250 = vmatpush1.bf16.msra.mxu0 0
  %251 = vmatprep.subr.bf16.mxu0 0
  %252 = vmatpush1.bf16.msra.mxu0 0
  %253 = vmatprep.subr.bf16.mxu0 0
  %254 = vmatpush1.bf16.msra.mxu0 0
  %255 = vmatprep.mubr.bf16.mxu0 0
  %256 = vmatmul.mubr.bf16.gmra.mrb[0].mxu0 %v112
  %v257 = vpop.f32.mrb[0].mxu0
  %v258 = vadd.f32 %v83, %v257
  %v259 = vpop.f32.mrb[0].mxu0
  %v260 = vadd.f32 %v83, %v259
  %v261 = vpop.f32.mrb[0].mxu0
  %v262 = vadd.f32 %v88, %v261
  %v263 = vpop.f32.mrb[0].mxu0
  %v264 = vadd.f32 %v88, %v263
  %265 = vmatprep.mubr.bf16.mxu0 0
  %266 = vmatmul.mubr.bf16.gmra.mrb[0].mxu0 %v115
  %v267 = vpop.f32.mrb[0].mxu0
  %v268 = vadd.f32 %v93, %v267
  %v269 = vpop.f32.mrb[0].mxu0
  %v270 = vadd.f32 %v93, %v269
  %v271 = vpop.f32.mrb[0].mxu0
  %v272 = vadd.f32 %v98, %v271
  %v273 = vpop.f32.mrb[0].mxu0
  %v274 = vadd.f32 %v98, %v273
  %275 = vdwg.mxu0
  %276 = vmatprep.subr.bf16.mxu0 %v47
  %277 = vmatpush1.bf16.msra.mxu0 %v46
  %278 = vmatprep.subr.bf16.mxu0 0
  %279 = vmatpush1.bf16.msra.mxu0 0
  %280 = vmatprep.subr.bf16.mxu0 0
  %281 = vmatpush1.bf16.msra.mxu0 0
  %282 = vmatprep.subr.bf16.mxu0 0
  %283 = vmatpush1.bf16.msra.mxu0 0
  %284 = vmatprep.subr.bf16.mxu0 0
  %285 = vmatpush1.bf16.msra.mxu0 0
  %286 = vmatprep.subr.bf16.mxu0 0
  %287 = vmatpush1.bf16.msra.mxu0 0
  %288 = vmatprep.subr.bf16.mxu0 0
  %289 = vmatpush1.bf16.msra.mxu0 0
  %290 = vmatprep.subr.bf16.mxu0 0
  %291 = vmatpush1.bf16.msra.mxu0 0
  %292 = vmatprep.subr.bf16.mxu0 0
  %293 = vmatpush1.bf16.msra.mxu0 0
  %294 = vmatprep.subr.bf16.mxu0 0
  %295 = vmatpush1.bf16.msra.mxu0 0
  %296 = vmatprep.subr.bf16.mxu0 0
  %297 = vmatpush1.bf16.msra.mxu0 0
  %298 = vmatprep.subr.bf16.mxu0 0
  %299 = vmatpush1.bf16.msra.mxu0 0
  %300 = vmatprep.subr.bf16.mxu0 0
  %301 = vmatpush1.bf16.msra.mxu0 0
  %302 = vmatprep.subr.bf16.mxu0 0
  %303 = vmatpush1.bf16.msra.mxu0 0
  %304 = vmatprep.subr.bf16.mxu0 0
  %305 = vmatpush1.bf16.msra.mxu0 0
  %306 = vmatprep.subr.bf16.mxu0 0
  %307 = vmatpush1.bf16.msra.mxu0 0
  %308 = vmatprep.mubr.bf16.mxu0 0
  %309 = vmatmul.mubr.bf16.gmra.mrb[0].mxu0 %v112
  %v310 = vpop.f32.mrb[0].mxu0
  %v311 = vadd.f32 %v83, %v310
  %v312 = vpop.f32.mrb[0].mxu0
  %v313 = vadd.f32 %v83, %v312
  %v314 = vpop.f32.mrb[0].mxu0
  %v315 = vadd.f32 %v88, %v314
  %v316 = vpop.f32.mrb[0].mxu0
  %v317 = vadd.f32 %v88, %v316
  %318 = vmatprep.mubr.bf16.mxu0 0
  %319 = vmatmul.mubr.bf16.gmra.mrb[0].mxu0 %v115
  %v320 = vpop.f32.mrb[0].mxu0
  %v321 = vadd.f32 %v93, %v320
  %v322 = vpop.f32.mrb[0].mxu0
  %v323 = vadd.f32 %v93, %v322
  %v324 = vpop.f32.mrb[0].mxu0
  %v325 = vadd.f32 %v98, %v324
  %v326 = vpop.f32.mrb[0].mxu0
  %v327 = vadd.f32 %v98, %v326
  %328 = vdwg.mxu0
  %v329 = vmul.f32 %v152, 0.5
  %v330 = vmul.f32 %v154, 0.5
  %v331 = vmul.f32 %v205, 0.5
  %v332 = vmul.f32 %v207, 0.5
  %v333 = vmul.f32 %v258, 0.5
  %v334 = vmul.f32 %v260, 0.5
  %v335 = vmul.f32 %v311, 0.5
  %v336 = vmul.f32 %v313, 0.5
  %v337 = vmul.f32 %v156, 0.5
  %v338 = vmul.f32 %v158, 0.5
  %v339 = vmul.f32 %v209, 0.5
  %v340 = vmul.f32 %v211, 0.5
  %v341 = vmul.f32 %v262, 0.5
  %v342 = vmul.f32 %v264, 0.5
  %v343 = vmul.f32 %v315, 0.5
  %v344 = vmul.f32 %v317, 0.5
  %v345 = vmul.f32 %v162, 0.5
  %v346 = vmul.f32 %v164, 0.5
  %v347 = vmul.f32 %v215, 0.5
  %v348 = vmul.f32 %v217, 0.5
  %v349 = vmul.f32 %v268, 0.5
  %v350 = vmul.f32 %v270, 0.5
  %v351 = vmul.f32 %v321, 0.5
  %v352 = vmul.f32 %v323, 0.5
  %v353 = vmul.f32 %v166, 0.5
  %v354 = vmul.f32 %v168, 0.5
  %v355 = vmul.f32 %v219, 0.5
  %v356 = vmul.f32 %v221, 0.5
  %v357 = vmul.f32 %v272, 0.5
  %v358 = vmul.f32 %v274, 0.5
  %v359 = vmul.f32 %v325, 0.5
  %v360 = vmul.f32 %v327, 0.5
  %v361 = vmul.f32 %v152, 0.70710677
  %v362 = vmul.f32 %v154, 0.70710677
  %v363 = vmul.f32 %v205, 0.70710677
  %v364 = vmul.f32 %v207, 0.70710677
  %v365 = vmul.f32 %v258, 0.70710677
  %v366 = vmul.f32 %v260, 0.70710677
  %v367 = vmul.f32 %v311, 0.70710677
  %v368 = vmul.f32 %v313, 0.70710677
  %v369 = vmul.f32 %v156, 0.70710677
  %v370 = vmul.f32 %v158, 0.70710677
  %v371 = vmul.f32 %v209, 0.70710677
  %v372 = vmul.f32 %v211, 0.70710677
  %v373 = vmul.f32 %v262, 0.70710677
  %v374 = vmul.f32 %v264, 0.70710677
  %v375 = vmul.f32 %v315, 0.70710677
  %v376 = vmul.f32 %v317, 0.70710677
  %v377 = vmul.f32 %v162, 0.70710677
  %v378 = vmul.f32 %v164, 0.70710677
  %v379 = vmul.f32 %v215, 0.70710677
  %v380 = vmul.f32 %v217, 0.70710677
  %v381 = vmul.f32 %v268, 0.70710677
  %v382 = vmul.f32 %v270, 0.70710677
  %v383 = vmul.f32 %v321, 0.70710677
  %v384 = vmul.f32 %v323, 0.70710677
  %v385 = vmul.f32 %v166, 0.70710677
  %v386 = vmul.f32 %v168, 0.70710677
  %v387 = vmul.f32 %v219, 0.70710677
  %v388 = vmul.f32 %v221, 0.70710677
  %v389 = vmul.f32 %v272, 0.70710677
  %v390 = vmul.f32 %v274, 0.70710677
  %v391 = vmul.f32 %v325, 0.70710677
  %v392 = vmul.f32 %v327, 0.70710677
  %v393 = verf.f32.pop %v361
  %v394 = verf.f32.pop %v362
  %v395 = verf.f32.pop %v363
  %v396 = verf.f32.pop %v364
  %v397 = verf.f32.pop %v365
  %v398 = verf.f32.pop %v366
  %v399 = verf.f32.pop %v367
  %v400 = verf.f32.pop %v368
  %v401 = verf.f32.pop %v369
  %v402 = verf.f32.pop %v370
  %v403 = verf.f32.pop %v371
  %v404 = verf.f32.pop %v372
  %v405 = verf.f32.pop %v373
  %v406 = verf.f32.pop %v374
  %v407 = verf.f32.pop %v375
  %v408 = verf.f32.pop %v376
  %v409 = verf.f32.pop %v377
  %v410 = verf.f32.pop %v378
  %v411 = verf.f32.pop %v379
  %v412 = verf.f32.pop %v380
  %v413 = verf.f32.pop %v381
  %v414 = verf.f32.pop %v382
  %v415 = verf.f32.pop %v383
  %v416 = verf.f32.pop %v384
  %v417 = verf.f32.pop %v385
  %v418 = verf.f32.pop %v386
  %v419 = verf.f32.pop %v387
  %v420 = verf.f32.pop %v388
  %v421 = verf.f32.pop %v389
  %v422 = verf.f32.pop %v390
  %v423 = verf.f32.pop %v391
  %v424 = verf.f32.pop %v392
  %v425 = vadd.f32 %v393, 1.0
  %v426 = vadd.f32 %v394, 1.0
  %v427 = vadd.f32 %v395, 1.0
  %v428 = vadd.f32 %v396, 1.0
  %v429 = vadd.f32 %v397, 1.0
  %v430 = vadd.f32 %v398, 1.0
  %v431 = vadd.f32 %v399, 1.0
  %v432 = vadd.f32 %v400, 1.0
  %v433 = vadd.f32 %v401, 1.0
  %v434 = vadd.f32 %v402, 1.0
  %v435 = vadd.f32 %v403, 1.0
  %v436 = vadd.f32 %v404, 1.0
  %v437 = vadd.f32 %v405, 1.0
  %v438 = vadd.f32 %v406, 1.0
  %v439 = vadd.f32 %v407, 1.0
  %v440 = vadd.f32 %v408, 1.0
  %v441 = vadd.f32 %v409, 1.0
  %v442 = vadd.f32 %v410, 1.0
  %v443 = vadd.f32 %v411, 1.0
  %v444 = vadd.f32 %v412, 1.0
  %v445 = vadd.f32 %v413, 1.0
  %v446 = vadd.f32 %v414, 1.0
  %v447 = vadd.f32 %v415, 1.0
  %v448 = vadd.f32 %v416, 1.0
  %v449 = vadd.f32 %v417, 1.0
  %v450 = vadd.f32 %v418, 1.0
  %v451 = vadd.f32 %v419, 1.0
  %v452 = vadd.f32 %v420, 1.0
  %v453 = vadd.f32 %v421, 1.0
  %v454 = vadd.f32 %v422, 1.0
  %v455 = vadd.f32 %v423, 1.0
  %v456 = vadd.f32 %v424, 1.0
  %v457 = vmul.f32 %v329, %v425
  %v458 = vmul.f32 %v330, %v426
  %v459 = vmul.f32 %v331, %v427
  %v460 = vmul.f32 %v332, %v428
  %v461 = vmul.f32 %v333, %v429
  %v462 = vmul.f32 %v334, %v430
  %v463 = vmul.f32 %v335, %v431
  %v464 = vmul.f32 %v336, %v432
  %v465 = vmul.f32 %v337, %v433
  %v466 = vmul.f32 %v338, %v434
  %v467 = vmul.f32 %v339, %v435
  %v468 = vmul.f32 %v340, %v436
  %v469 = vmul.f32 %v341, %v437
  %v470 = vmul.f32 %v342, %v438
  %v471 = vmul.f32 %v343, %v439
  %v472 = vmul.f32 %v344, %v440
  %v473 = vmul.f32 %v345, %v441
  %v474 = vmul.f32 %v346, %v442
  %v475 = vmul.f32 %v347, %v443
  %v476 = vmul.f32 %v348, %v444
  %v477 = vmul.f32 %v349, %v445
  %v478 = vmul.f32 %v350, %v446
  %v479 = vmul.f32 %v351, %v447
  %v480 = vmul.f32 %v352, %v448
  %v481 = vmul.f32 %v353, %v449
  %v482 = vmul.f32 %v354, %v450
  %v483 = vmul.f32 %v355, %v451
  %v484 = vmul.f32 %v356, %v452
  %v485 = vmul.f32 %v357, %v453
  %v486 = vmul.f32 %v358, %v454
  %v487 = vmul.f32 %v359, %v455
  %v488 = vmul.f32 %v360, %v456
  %v489 = vpack.c.bf16 %v465, %v457
  %v490 = vpack.c.bf16 %v466, %v458
  %v491 = vpack.c.bf16 %v467, %v459
  %v492 = vpack.c.bf16 %v468, %v460
  %v493 = vpack.c.bf16 %v469, %v461
  %v494 = vpack.c.bf16 %v470, %v462
  %v495 = vpack.c.bf16 %v471, %v463
  %v496 = vpack.c.bf16 %v472, %v464
  %v497 = vpack.c.bf16 %v481, %v473
  %v498 = vpack.c.bf16 %v482, %v474
  %v499 = vpack.c.bf16 %v483, %v475
  %v500 = vpack.c.bf16 %v484, %v476
  %v501 = vpack.c.bf16 %v485, %v477
  %v502 = vpack.c.bf16 %v486, %v478
  %v503 = vpack.c.bf16 %v487, %v479
  %v504 = vpack.c.bf16 %v488, %v480
  %v505 = vld [vmem:[%s4] sm:$0xf]
  %v506 = vld [vmem:[%s4 + $0x4] sm:$0xf]
  %v507 = vld [vmem:[%s5] sm:$0xff]
  %v508 = vld [vmem:[%s5 + $0x8] sm:$0xff]
  %510 = vset.pattern.permute.xlu0 0
  %511 = vperm.xlu0 %510, %v507
  %v512 = vpop.permute.xlu0 %511
  %515 = vset.pattern.permute.xlu0 0
  %516 = vperm.xlu0 %515, %v508
  %v517 = vpop.permute.xlu0 %516
  %v521 = vunpack.c.l.b16 %v505
  %v522 = vunpack.c.l.b16 %v506
  %v523 = vpack.c.b16 %v522, %v521
  %vm524 = vcmask 392192
  %v526 = vsel %vm524, %v523, 0
  %528 = vmatprep.subr.bf16.mxu0 %v490
  %529 = vmatpush1.bf16.msra.mxu0 %v489
  %530 = vmatprep.subr.bf16.mxu0 %v498
  %531 = vmatpush1.bf16.msra.mxu0 %v497
  %532 = vmatprep.subr.bf16.mxu0 %v65
  %533 = vmatpush1.bf16.msra.mxu0 %v64
  %534 = vmatprep.subr.bf16.mxu0 0
  %535 = vmatpush1.bf16.msra.mxu0 0
  %536 = vmatprep.subr.bf16.mxu0 0
  %537 = vmatpush1.bf16.msra.mxu0 0
  %538 = vmatprep.subr.bf16.mxu0 0
  %539 = vmatpush1.bf16.msra.mxu0 0
  %540 = vmatprep.subr.bf16.mxu0 0
  %541 = vmatpush1.bf16.msra.mxu0 0
  %542 = vmatprep.subr.bf16.mxu0 0
  %543 = vmatpush1.bf16.msra.mxu0 0
  %544 = vmatprep.subr.bf16.mxu0 0
  %545 = vmatpush1.bf16.msra.mxu0 0
  %546 = vmatprep.subr.bf16.mxu0 0
  %547 = vmatpush1.bf16.msra.mxu0 0
  %548 = vmatprep.subr.bf16.mxu0 0
  %549 = vmatpush1.bf16.msra.mxu0 0
  %550 = vmatprep.subr.bf16.mxu0 0
  %551 = vmatpush1.bf16.msra.mxu0 0
  %552 = vmatprep.subr.bf16.mxu0 0
  %553 = vmatpush1.bf16.msra.mxu0 0
  %554 = vmatprep.subr.bf16.mxu0 0
  %555 = vmatpush1.bf16.msra.mxu0 0
  %556 = vmatprep.subr.bf16.mxu0 0
  %557 = vmatpush1.bf16.msra.mxu0 0
  %558 = vmatprep.subr.bf16.mxu0 0
  %559 = vmatpush1.bf16.msra.mxu0 0
  %560 = vmatprep.mubr.bf16.mxu0 0
  %561 = vmatmul.mubr.bf16.gmra.mrb[0].mxu0 %v526
  %v562 = vpop.f32.mrb[0].mxu0
  %v563 = vadd.f32 %v512, %v562
  %v564 = vpop.f32.mrb[0].mxu0
  %v565 = vadd.f32 %v512, %v564
  %v566 = vpop.f32.mrb[0].mxu0
  %v567 = vadd.f32 %v517, %v566
  %v568 = vpop.f32.mrb[0].mxu0
  %v569 = vadd.f32 %v517, %v568
  %570 = vdwg.mxu0
  %571 = vmatprep.subr.bf16.mxu0 %v492
  %572 = vmatpush1.bf16.msra.mxu0 %v491
  %573 = vmatprep.subr.bf16.mxu0 %v500
  %574 = vmatpush1.bf16.msra.mxu0 %v499
  %575 = vmatprep.subr.bf16.mxu0 %v67
  %576 = vmatpush1.bf16.msra.mxu0 %v66
  %577 = vmatprep.subr.bf16.mxu0 0
  %578 = vmatpush1.bf16.msra.mxu0 0
  %579 = vmatprep.subr.bf16.mxu0 0
  %580 = vmatpush1.bf16.msra.mxu0 0
  %581 = vmatprep.subr.bf16.mxu0 0
  %582 = vmatpush1.bf16.msra.mxu0 0
  %583 = vmatprep.subr.bf16.mxu0 0
  %584 = vmatpush1.bf16.msra.mxu0 0
  %585 = vmatprep.subr.bf16.mxu0 0
  %586 = vmatpush1.bf16.msra.mxu0 0
  %587 = vmatprep.subr.bf16.mxu0 0
  %588 = vmatpush1.bf16.msra.mxu0 0
  %589 = vmatprep.subr.bf16.mxu0 0
  %590 = vmatpush1.bf16.msra.mxu0 0
  %591 = vmatprep.subr.bf16.mxu0 0
  %592 = vmatpush1.bf16.msra.mxu0 0
  %593 = vmatprep.subr.bf16.mxu0 0
  %594 = vmatpush1.bf16.msra.mxu0 0
  %595 = vmatprep.subr.bf16.mxu0 0
  %596 = vmatpush1.bf16.msra.mxu0 0
  %597 = vmatprep.subr.bf16.mxu0 0
  %598 = vmatpush1.bf16.msra.mxu0 0
  %599 = vmatprep.subr.bf16.mxu0 0
  %600 = vmatpush1.bf16.msra.mxu0 0
  %601 = vmatprep.subr.bf16.mxu0 0
  %602 = vmatpush1.bf16.msra.mxu0 0
  %603 = vmatprep.mubr.bf16.mxu0 0
  %604 = vmatmul.mubr.bf16.gmra.mrb[0].mxu0 %v526
  %v605 = vpop.f32.mrb[0].mxu0
  %v606 = vadd.f32 %v512, %v605
  %v607 = vpop.f32.mrb[0].mxu0
  %v608 = vadd.f32 %v512, %v607
  %v609 = vpop.f32.mrb[0].mxu0
  %v610 = vadd.f32 %v517, %v609
  %v611 = vpop.f32.mrb[0].mxu0
  %v612 = vadd.f32 %v517, %v611
  %613 = vdwg.mxu0
  %614 = vmatprep.subr.bf16.mxu0 %v494
  %615 = vmatpush1.bf16.msra.mxu0 %v493
  %616 = vmatprep.subr.bf16.mxu0 %v502
  %617 = vmatpush1.bf16.msra.mxu0 %v501
  %618 = vmatprep.subr.bf16.mxu0 %v69
  %619 = vmatpush1.bf16.msra.mxu0 %v68
  %620 = vmatprep.subr.bf16.mxu0 0
  %621 = vmatpush1.bf16.msra.mxu0 0
  %622 = vmatprep.subr.bf16.mxu0 0
  %623 = vmatpush1.bf16.msra.mxu0 0
  %624 = vmatprep.subr.bf16.mxu0 0
  %625 = vmatpush1.bf16.msra.mxu0 0
  %626 = vmatprep.subr.bf16.mxu0 0
  %627 = vmatpush1.bf16.msra.mxu0 0
  %628 = vmatprep.subr.bf16.mxu0 0
  %629 = vmatpush1.bf16.msra.mxu0 0
  %630 = vmatprep.subr.bf16.mxu0 0
  %631 = vmatpush1.bf16.msra.mxu0 0
  %632 = vmatprep.subr.bf16.mxu0 0
  %633 = vmatpush1.bf16.msra.mxu0 0
  %634 = vmatprep.subr.bf16.mxu0 0
  %635 = vmatpush1.bf16.msra.mxu0 0
  %636 = vmatprep.subr.bf16.mxu0 0
  %637 = vmatpush1.bf16.msra.mxu0 0
  %638 = vmatprep.subr.bf16.mxu0 0
  %639 = vmatpush1.bf16.msra.mxu0 0
  %640 = vmatprep.subr.bf16.mxu0 0
  %641 = vmatpush1.bf16.msra.mxu0 0
  %642 = vmatprep.subr.bf16.mxu0 0
  %643 = vmatpush1.bf16.msra.mxu0 0
  %644 = vmatprep.subr.bf16.mxu0 0
  %645 = vmatpush1.bf16.msra.mxu0 0
  %646 = vmatprep.mubr.bf16.mxu0 0
  %647 = vmatmul.mubr.bf16.gmra.mrb[0].mxu0 %v526
  %v648 = vpop.f32.mrb[0].mxu0
  %v649 = vadd.f32 %v512, %v648
  %v650 = vpop.f32.mrb[0].mxu0
  %v651 = vadd.f32 %v512, %v650
  %v652 = vpop.f32.mrb[0].mxu0
  %v653 = vadd.f32 %v517, %v652
  %v654 = vpop.f32.mrb[0].mxu0
  %v655 = vadd.f32 %v517, %v654
  %656 = vdwg.mxu0
  %657 = vmatprep.subr.bf16.mxu0 %v496
  %658 = vmatpush1.bf16.msra.mxu0 %v495
  %659 = vmatprep.subr.bf16.mxu0 %v504
  %660 = vmatpush1.bf16.msra.mxu0 %v503
  %661 = vmatprep.subr.bf16.mxu0 %v71
  %662 = vmatpush1.bf16.msra.mxu0 %v70
  %663 = vmatprep.subr.bf16.mxu0 0
  %664 = vmatpush1.bf16.msra.mxu0 0
  %665 = vmatprep.subr.bf16.mxu0 0
  %666 = vmatpush1.bf16.msra.mxu0 0
  %667 = vmatprep.subr.bf16.mxu0 0
  %668 = vmatpush1.bf16.msra.mxu0 0
  %669 = vmatprep.subr.bf16.mxu0 0
  %670 = vmatpush1.bf16.msra.mxu0 0
  %671 = vmatprep.subr.bf16.mxu0 0
  %672 = vmatpush1.bf16.msra.mxu0 0
  %673 = vmatprep.subr.bf16.mxu0 0
  %674 = vmatpush1.bf16.msra.mxu0 0
  %675 = vmatprep.subr.bf16.mxu0 0
  %676 = vmatpush1.bf16.msra.mxu0 0
  %677 = vmatprep.subr.bf16.mxu0 0
  %678 = vmatpush1.bf16.msra.mxu0 0
  %679 = vmatprep.subr.bf16.mxu0 0
  %680 = vmatpush1.bf16.msra.mxu0 0
  %681 = vmatprep.subr.bf16.mxu0 0
  %682 = vmatpush1.bf16.msra.mxu0 0
  %683 = vmatprep.subr.bf16.mxu0 0
  %684 = vmatpush1.bf16.msra.mxu0 0
  %685 = vmatprep.subr.bf16.mxu0 0
  %686 = vmatpush1.bf16.msra.mxu0 0
  %687 = vmatprep.subr.bf16.mxu0 0
  %688 = vmatpush1.bf16.msra.mxu0 0
  %689 = vmatprep.mubr.bf16.mxu0 0
  %690 = vmatmul.mubr.bf16.gmra.mrb[0].mxu0 %v526
  %v691 = vpop.f32.mrb[0].mxu0
  %v692 = vadd.f32 %v512, %v691
  %v693 = vpop.f32.mrb[0].mxu0
  %v694 = vadd.f32 %v512, %v693
  %v695 = vpop.f32.mrb[0].mxu0
  %v696 = vadd.f32 %v517, %v695
  %v697 = vpop.f32.mrb[0].mxu0
  %v698 = vadd.f32 %v517, %v697
  %699 = vdwg.mxu0
  %700 = vst [vmem:[%s6] sm:$0xff] %v563
  %701 = vst [vmem:[%s6 + $0x8] sm:$0xff] %v565
  %702 = vst [vmem:[%s6 + $0x10] sm:$0xff] %v606
  %703 = vst [vmem:[%s6 + $0x18] sm:$0xff] %v608
  %704 = vst [vmem:[%s6 + $0x20] sm:$0xff] %v649
  %705 = vst [vmem:[%s6 + $0x28] sm:$0xff] %v651
  %706 = vst [vmem:[%s6 + $0x30] sm:$0xff] %v692
  %707 = vst [vmem:[%s6 + $0x38] sm:$0xff] %v694
  %708 = vst [vmem:[%s6 + $0x40] sm:$0xff] %v567
  %709 = vst [vmem:[%s6 + $0x48] sm:$0xff] %v569
  %710 = vst [vmem:[%s6 + $0x50] sm:$0xff] %v610
  %711 = vst [vmem:[%s6 + $0x58] sm:$0xff] %v612
  %712 = vst [vmem:[%s6 + $0x60] sm:$0xff] %v653
  %713 = vst [vmem:[%s6 + $0x68] sm:$0xff] %v655
  %714 = vst [vmem:[%s6 + $0x70] sm:$0xff] %v696
  %715 = vst [vmem:[%s6 + $0x78] sm:$0xff] %v698
  // Predicated region
  $region26: #{neural_operator_block.3} parent=0 // pred_check
    _
  $region27: #{neural_operator_block.3} parent=0 // pred_check_branch
    %717 = sbr.rel (0) target = $region29
  $region28: #{neural_operator_block.3} parent=0 // pred_region
    _
  $region29: #{neural_operator_block.3} parent=0 // pred_fallthru
    _
  // Predicated region
  $region30: #{neural_operator_block.3} parent=0 // pred_check
    _
  $region31: #{neural_operator_block.3} parent=0 // pred_check_branch
    %719 = sbr.rel (0) target = $region33
  $region32: #{neural_operator_block.3} parent=0 // pred_region
    _
  $region33: #{neural_operator_block.3} parent=0 // pred_fallthru
    _

</llo_original>
